<compile_context>
chip_gen: v5e
topology: v5e:2x2
jax: 0.10.0
libtpu: 0.0.40
codegen_flags: <defaults>
</compile_context>

<pallas_src>
import functools

import jax
import jax.numpy as jnp
from jax.experimental import pallas as pl
from jax.experimental.pallas import tpu as pltpu


CHUNK = 8  # timesteps per grid step (>= 8 so output tiles are sublane-dense)


def _round_up(x: int, m: int) -> int:
    return ((x + m - 1) // m) * m


# --------------------------------------------------------------------------
# One-time parameter packing (hoisted out of the per-call path).
# Packed layout (Hp = round_up(H, 128)):
#   emb_pad : (V, Hp)       embedding rows, zero-padded on lanes
#   w_cat   : (2*Hp, 4*Hp)  rows [x-part ; h-part], columns [ r | z | i_n | h_n ]
#                           (each Hp wide, 128-lane aligned).
#   b_cat   : (1, 4*Hp)     [ b_ir+b_hr | b_iz+b_hz | b_in | b_hn ]
# --------------------------------------------------------------------------
def prepare_encoder_params(embedding, w_ih, w_hh, b_ih, b_hh):
    V, H = embedding.shape
    Hp = _round_up(H, 128)
    f32 = jnp.float32

    emb_pad = jnp.zeros((V, Hp), f32).at[:, :H].set(embedding.astype(f32))

    w_cat = jnp.zeros((2 * Hp, 4 * Hp), f32)
    b_cat = jnp.zeros((1, 4 * Hp), f32)

    def gate(w, g):  # gate slice of a torch-layout (3H, H) weight; g: 0=r,1=z,2=n
        return w[g * H:(g + 1) * H, :].astype(f32)

    # r / z gates: input and hidden contributions share one column block.
    for g in range(2):
        w_cat = w_cat.at[0:H, g * Hp:g * Hp + H].set(gate(w_ih, g).T)
        w_cat = w_cat.at[Hp:Hp + H, g * Hp:g * Hp + H].set(gate(w_hh, g).T)
        b_cat = b_cat.at[0, g * Hp:g * Hp + H].set(
            b_ih[g * H:(g + 1) * H] + b_hh[g * H:(g + 1) * H])

    # n gate: torch computes n = tanh(i_n + r * h_n), so keep i_n and h_n apart.
    w_cat = w_cat.at[0:H, 2 * Hp:2 * Hp + H].set(gate(w_ih, 2).T)
    b_cat = b_cat.at[0, 2 * Hp:2 * Hp + H].set(b_ih[2 * H:3 * H])
    w_cat = w_cat.at[Hp:Hp + H, 3 * Hp:3 * Hp + H].set(gate(w_hh, 2).T)
    b_cat = b_cat.at[0, 3 * Hp:3 * Hp + H].set(b_hh[2 * H:3 * H])

    return emb_pad, w_cat, b_cat


# --------------------------------------------------------------------------
# Kernel: one grid step == CHUNK GRU timesteps.
# --------------------------------------------------------------------------
def _encoder_gru_kernel(ids_ref,   # SMEM scalar prefetch: (T_pad,) int32 token ids
                        emb_ref,   # (V, Hp)     whole embedding table (resident)
                        h0_ref,    # (1, Hp)     initial hidden (resident)
                        w_ref,     # (2Hp, 4Hp)  packed gate weights (resident)
                        b_ref,     # (1, 4Hp)    packed gate biases (resident)
                        out_ref,   # (CHUNK, Hp) per-chunk output rows
                        h_carry,   # VMEM scratch (1, Hp): recurrent hidden state
                        xh_ref):   # VMEM scratch (1, 2Hp): [x ; h] staging buffer
    Hp = h0_ref.shape[-1]
    chunk = out_ref.shape[0]
    c = pl.program_id(0)

    @pl.when(c == 0)
    def _():
        h_carry[...] = h0_ref[...]

    h = h_carry[...]                                       # (1, Hp)
    rows = []
    for i in range(chunk):                                 # unrolled at trace time
        tok = ids_ref[c * chunk + i]                       # SMEM scalar read
        # In-VMEM gather of the embedding row + static lane-aligned stores
        # into the persistent [x ; h] staging buffer (no per-step concatenate).
        xh_ref[:, 0:Hp] = emb_ref[pl.ds(tok, 1), :]        # (1, Hp)
        xh_ref[:, Hp:2 * Hp] = h

        # Single fused MXU dot: (1, 2Hp) @ (2Hp, 4Hp) -> [r|z|i_n|h_n]
        g = jnp.dot(xh_ref[...], w_ref[...],
                    preferred_element_type=jnp.float32) + b_ref[...]

        r = jax.nn.sigmoid(g[:, 0 * Hp:1 * Hp])
        z = jax.nn.sigmoid(g[:, 1 * Hp:2 * Hp])
        n = jnp.tanh(g[:, 2 * Hp:3 * Hp] + r * g[:, 3 * Hp:4 * Hp])
        h = (1.0 - z) * n + z * h                          # (1, Hp)
        rows.append(h)

    out_ref[...] = jnp.concatenate(rows, axis=0)           # one dense (CHUNK, Hp) store
    h_carry[...] = h                                       # carry to next chunk


# --------------------------------------------------------------------------
# Sequence forward: whole encoder loop in one pallas_call.
# Returns (outputs (T, 1, H), hidden (1, 1, H)) -- torch nn.GRU convention.
# --------------------------------------------------------------------------
@functools.partial(jax.jit, static_argnames=("hidden_size",))
def encoder_rnn_forward_seq(token_ids, hidden0, emb_pad, w_cat, b_cat, *, hidden_size):
    V, Hp = emb_pad.shape
    H = hidden_size
    T = token_ids.shape[0]
    T_pad = _round_up(max(T, 1), CHUNK)
    n_chunks = T_pad // CHUNK

    # Clamp ids so the in-kernel row gather can never go out of bounds, and
    # pad the sequence to a CHUNK multiple (padded steps compute garbage rows
    # that are sliced away below; they never affect rows < T).
    ids = jnp.clip(token_ids.astype(jnp.int32).reshape(T), 0, V - 1)
    ids = jnp.pad(ids, (0, T_pad - T))

    # Pad the initial hidden to the lane-aligned width (padded lanes are zero
    # and stay zero by construction of the packed weights/biases).
    h0 = jnp.zeros((1, Hp), jnp.float32).at[:, :H].set(
        hidden0.astype(jnp.float32).reshape(1, H))

    outputs_pad = pl.pallas_call(
        _encoder_gru_kernel,
        out_shape=jax.ShapeDtypeStruct((T_pad, Hp), jnp.float32),
        grid_spec=pltpu.PrefetchScalarGridSpec(
            num_scalar_prefetch=1,            # token ids land in SMEM
            grid=(n_chunks,),
            in_specs=[
                # Constant block index => fetched once, resident across chunks.
                pl.BlockSpec((V, Hp), lambda c, ids: (0, 0)),            # emb table
                pl.BlockSpec((1, Hp), lambda c, ids: (0, 0)),            # h0
                pl.BlockSpec((2 * Hp, 4 * Hp), lambda c, ids: (0, 0)),   # weights
                pl.BlockSpec((1, 4 * Hp), lambda c, ids: (0, 0)),        # biases
            ],
            out_specs=pl.BlockSpec((CHUNK, Hp), lambda c, ids: (c, 0)),
            scratch_shapes=[pltpu.VMEM((1, Hp), jnp.float32),       # h carry
                            pltpu.VMEM((1, 2 * Hp), jnp.float32)],  # [x ; h] staging
        ),
        compiler_params=pltpu.CompilerParams(
            dimension_semantics=("arbitrary",)),   # recurrence is sequential
    )(ids, emb_pad, h0, w_cat, b_cat)

    outputs = outputs_pad[:T, :H].reshape(T, 1, H)   # (seq, batch=1, H)
    hidden = outputs[-1].reshape(1, 1, H)            # final hidden == last output
    return outputs, hidden


# Single module.forward step (matches torch EncoderRNN.forward exactly).
def encoder_rnn_forward(token_idx, hidden, emb_pad, w_cat, b_cat, *, hidden_size):
    outputs, h_new = encoder_rnn_forward_seq(
        jnp.asarray(token_idx, jnp.int32).reshape(1), hidden,
        emb_pad, w_cat, b_cat, hidden_size=hidden_size)
    return outputs.reshape(1, 1, hidden_size), h_new


# --------------------------------------------------------------------------
# Pure-JAX reference mirroring torch.nn.Embedding + torch.nn.GRU.
# --------------------------------------------------------------------------
def _ref_gru_step(x, h, w_ih, w_hh, b_ih, b_hh):
    H = h.shape[-1]
    gi = x @ w_ih.T + b_ih
    gh = h @ w_hh.T + b_hh
    i_r, i_z, i_n = gi[:, :H], gi[:, H:2 * H], gi[:, 2 * H:]
    h_r, h_z, h_n = gh[:, :H], gh[:, H:2 * H], gh[:, 2 * H:]
    r = jax.nn.sigmoid(i_r + h_r)
    z = jax.nn.sigmoid(i_z + h_z)
    n = jnp.tanh(i_n + r * h_n)
    return (1.0 - z) * n + z * h


def _reference_seq(token_ids, hidden0, embedding, w_ih, w_hh, b_ih, b_hh):
    H = embedding.shape[1]
    h = hidden0.reshape(1, H)
    outs = []
    for t in range(token_ids.shape[0]):
        x = embedding[token_ids[t]].reshape(1, H)
        h = _ref_gru_step(x, h, w_ih, w_hh, b_ih, b_hh)
        outs.append(h)
    return jnp.stack(outs).reshape(-1, 1, H), h.reshape(1, 1, H)


if __name__ == "__main__":
    INPUT_SIZE = 16   # vocab size
    HIDDEN = 32
    SEQ_LEN = 8

    key = jax.random.PRNGKey(0)
    k_emb, k_wih, k_whh, k_bih, k_bhh, k_h, k_tok = jax.random.split(key, 7)

    bound = 1.0 / jnp.sqrt(HIDDEN)
    embedding = jax.random.normal(k_emb, (INPUT_SIZE, HIDDEN), jnp.float32)
    w_ih = jax.random.uniform(k_wih, (3 * HIDDEN, HIDDEN), jnp.float32, -bound, bound)
    w_hh = jax.random.uniform(k_whh, (3 * HIDDEN, HIDDEN), jnp.float32, -bound, bound)
    b_ih = jax.random.uniform(k_bih, (3 * HIDDEN,), jnp.float32, -bound, bound)
    b_hh = jax.random.uniform(k_bhh, (3 * HIDDEN,), jnp.float32, -bound, bound)

    hidden0 = jax.random.normal(k_h, (1, 1, HIDDEN), jnp.float32)
    tokens = jax.random.randint(k_tok, (SEQ_LEN,), 0, INPUT_SIZE, jnp.int32)

    # One-time parameter packing / padding / transpose.
    emb_pad, w_cat, b_cat = prepare_encoder_params(embedding, w_ih, w_hh, b_ih, b_hh)

    # (a) Single step: exactly the module's forward (output, hidden).
    out1, hid1 = encoder_rnn_forward(tokens[:1], hidden0, emb_pad, w_cat, b_cat,
                                     hidden_size=HIDDEN)
    out1 = jax.block_until_ready(out1)
    hid1 = jax.block_until_ready(hid1)
    ref_out1, ref_hid1 = _reference_seq(tokens[:1], hidden0,
                                        embedding, w_ih, w_hh, b_ih, b_hh)
    assert out1.shape == (1, 1, HIDDEN) and hid1.shape == (1, 1, HIDDEN)
    assert jnp.allclose(out1, ref_out1.reshape(1, 1, HIDDEN), atol=1e-5, rtol=1e-5)
    assert jnp.allclose(hid1, ref_hid1, atol=1e-5, rtol=1e-5)

    # (b) Whole encoder loop fused in a single pallas_call (chunked time axis).
    outs, hidT = encoder_rnn_forward_seq(tokens, hidden0, emb_pad, w_cat, b_cat,
                                         hidden_size=HIDDEN)
    outs = jax.block_until_ready(outs)
    hidT = jax.block_until_ready(hidT)
    ref_outs, ref_hidT = _reference_seq(tokens, hidden0,
                                        embedding, w_ih, w_hh, b_ih, b_hh)
    assert outs.shape == (SEQ_LEN, 1, HIDDEN) and hidT.shape == (1, 1, HIDDEN)
    assert jnp.allclose(outs, ref_outs, atol=1e-5, rtol=1e-5)
    assert jnp.allclose(hidT, ref_hidT, atol=1e-5, rtol=1e-5)

    print("KERNEL_OK")
</pallas_src>

<mosaic_0001>
module attributes {stable_mosaic.version = 11 : i64} {
  func.func @_encoder_gru_kernel(%arg0: i32, %arg1: memref<8xi32, #tpu.memory_space<smem>>, %arg2: memref<16x128xf32, #tpu.memory_space<vmem>>, %arg3: memref<1x128xf32, #tpu.memory_space<vmem>>, %arg4: memref<256x512xf32, #tpu.memory_space<vmem>>, %arg5: memref<1x512xf32, #tpu.memory_space<vmem>>, %arg6: memref<8x128xf32, #tpu.memory_space<vmem>>, %arg7: memref<1x128xf32, #tpu.memory_space<vmem>>, %arg8: memref<1x256xf32, #tpu.memory_space<vmem>>) attributes {dimension_semantics = [#tpu.dimension_semantics<arbitrary>], iteration_bounds = array<i64: 1>, scalar_prefetch = 1 : i64, scratch_operands = 2 : i64, tpu.core_type = #tpu.core_type<tc>, window_params = [{pipeline_mode = #tpu.pipeline_mode<synchronous>, transform_indices = @transform_0, window_bounds = array<i64: 16, 128>}, {pipeline_mode = #tpu.pipeline_mode<synchronous>, transform_indices = @transform_1, window_bounds = array<i64: 1, 128>}, {pipeline_mode = #tpu.pipeline_mode<synchronous>, transform_indices = @transform_2, window_bounds = array<i64: 256, 512>}, {pipeline_mode = #tpu.pipeline_mode<synchronous>, transform_indices = @transform_3, window_bounds = array<i64: 1, 512>}, {transform_indices = @transform_4, window_bounds = array<i64: 8, 128>}]} {
    %c0_i32 = arith.constant 0 : i32
    %0 = arith.cmpi eq, %arg0, %c0_i32 : i32
    %1 = arith.extui %0 : i1 to i32
    %c0_i32_0 = arith.constant 0 : i32
    %2 = arith.cmpi ne, %1, %c0_i32_0 : i32
    scf.if %2 {
      %c0_132 = arith.constant 0 : index
      %c0_133 = arith.constant 0 : index
      %287 = vector.load %arg3[%c0_132, %c0_133] : memref<1x128xf32, #tpu.memory_space<vmem>>, vector<1x128xf32>
      %c0_134 = arith.constant 0 : index
      %c0_135 = arith.constant 0 : index
      %288 = vector.load %arg7[%c0_134, %c0_135] : memref<1x128xf32, #tpu.memory_space<vmem>>, vector<1x128xf32>
      tpu.vector_store %arg7[%c0_134, %c0_135], %287 {strides = array<i32>} : memref<1x128xf32, #tpu.memory_space<vmem>>, vector<1x128xf32>,
    } else {
    }
    %c0 = arith.constant 0 : index
    %c0_1 = arith.constant 0 : index
    %3 = vector.load %arg7[%c0, %c0_1] : memref<1x128xf32, #tpu.memory_space<vmem>>, vector<1x128xf32>
    %c8_i32 = arith.constant 8 : i32
    %4 = arith.muli %arg0, %c8_i32 : i32
    %c0_i32_2 = arith.constant 0 : i32
    %5 = arith.addi %4, %c0_i32_2 : i32
    %6 = arith.index_cast %5 : i32 to index
    %7 = memref.load %arg1[%6] : memref<8xi32, #tpu.memory_space<smem>>
    %8 = arith.index_cast %7 : i32 to index
    %c0_3 = arith.constant 0 : index
    %9 = vector.load %arg2[%8, %c0_3] : memref<16x128xf32, #tpu.memory_space<vmem>>, vector<1x128xf32>
    %c0_4 = arith.constant 0 : index
    %c0_5 = arith.constant 0 : index
    %10 = vector.load %arg8[%c0_4, %c0_5] : memref<1x256xf32, #tpu.memory_space<vmem>>, vector<1x128xf32>
    tpu.vector_store %arg8[%c0_4, %c0_5], %9 {strides = array<i32>} : memref<1x256xf32, #tpu.memory_space<vmem>>, vector<1x128xf32>,
    %c0_6 = arith.constant 0 : index
    %c128 = arith.constant 128 : index
    %11 = vector.load %arg8[%c0_6, %c128] : memref<1x256xf32, #tpu.memory_space<vmem>>, vector<1x128xf32>
    tpu.vector_store %arg8[%c0_6, %c128], %3 {strides = array<i32>} : memref<1x256xf32, #tpu.memory_space<vmem>>, vector<1x128xf32>,
    %c0_7 = arith.constant 0 : index
    %c0_8 = arith.constant 0 : index
    %12 = vector.load %arg8[%c0_7, %c0_8] : memref<1x256xf32, #tpu.memory_space<vmem>>, vector<1x256xf32>
    %c0_9 = arith.constant 0 : index
    %c0_10 = arith.constant 0 : index
    %13 = vector.load %arg4[%c0_9, %c0_10] : memref<256x512xf32, #tpu.memory_space<vmem>>, vector<256x512xf32>
    %cst = arith.constant dense<0.000000e+00> : vector<1x512xf32>
    %14 = tpu.matmul %12, %13, %cst {dimension_numbers = #tpu.dot_dimension_numbers<[1], [0], [0], [1], [0, 0, 1, 1], [], []>} : vector<1x256xf32>, vector<256x512xf32>, vector<1x512xf32> -> vector<1x512xf32>
    %c0_11 = arith.constant 0 : index
    %c0_12 = arith.constant 0 : index
    %15 = vector.load %arg5[%c0_11, %c0_12] : memref<1x512xf32, #tpu.memory_space<vmem>>, vector<1x512xf32>
    %16 = arith.addf %14, %15 : vector<1x512xf32>
    %17 = vector.extract_strided_slice %16 {offsets = [0, 0], sizes = [1, 128], strides = [1, 1]} : vector<1x512xf32> to vector<1x128xf32>
    %18 = arith.negf %17 : vector<1x128xf32>
    %19 = math.exp %18 : vector<1x128xf32>
    %cst_13 = arith.constant 1.000000e+00 : f32
    %20 = vector.broadcast %cst_13 : f32 to vector<1x128xf32>
    %21 = arith.addf %20, %19 : vector<1x128xf32>
    %22 = arith.divf %20, %21 : vector<1x128xf32>
    %23 = vector.extract_strided_slice %16 {offsets = [0, 128], sizes = [1, 128], strides = [1, 1]} : vector<1x512xf32> to vector<1x128xf32>
    %24 = arith.negf %23 : vector<1x128xf32>
    %25 = math.exp %24 : vector<1x128xf32>
    %cst_14 = arith.constant 1.000000e+00 : f32
    %26 = vector.broadcast %cst_14 : f32 to vector<1x128xf32>
    %27 = arith.addf %26, %25 : vector<1x128xf32>
    %28 = arith.divf %26, %27 : vector<1x128xf32>
    %29 = vector.extract_strided_slice %16 {offsets = [0, 256], sizes = [1, 128], strides = [1, 1]} : vector<1x512xf32> to vector<1x128xf32>
    %30 = vector.extract_strided_slice %16 {offsets = [0, 384], sizes = [1, 128], strides = [1, 1]} : vector<1x512xf32> to vector<1x128xf32>
    %31 = arith.mulf %22, %30 : vector<1x128xf32>
    %32 = arith.addf %29, %31 : vector<1x128xf32>
    %33 = math.tanh %32 : vector<1x128xf32>
    %cst_15 = arith.constant 1.000000e+00 : f32
    %34 = vector.broadcast %cst_15 : f32 to vector<1x128xf32>
    %35 = arith.subf %34, %28 : vector<1x128xf32>
    %36 = arith.mulf %35, %33 : vector<1x128xf32>
    %37 = arith.mulf %28, %3 : vector<1x128xf32>
    %38 = arith.addf %36, %37 : vector<1x128xf32>
    %c8_i32_16 = arith.constant 8 : i32
    %39 = arith.muli %arg0, %c8_i32_16 : i32
    %c1_i32 = arith.constant 1 : i32
    %40 = arith.addi %39, %c1_i32 : i32
    %41 = arith.index_cast %40 : i32 to index
    %42 = memref.load %arg1[%41] : memref<8xi32, #tpu.memory_space<smem>>
    %43 = arith.index_cast %42 : i32 to index
    %c0_17 = arith.constant 0 : index
    %44 = vector.load %arg2[%43, %c0_17] : memref<16x128xf32, #tpu.memory_space<vmem>>, vector<1x128xf32>
    %c0_18 = arith.constant 0 : index
    %c0_19 = arith.constant 0 : index
    %45 = vector.load %arg8[%c0_18, %c0_19] : memref<1x256xf32, #tpu.memory_space<vmem>>, vector<1x128xf32>
    tpu.vector_store %arg8[%c0_18, %c0_19], %44 {strides = array<i32>} : memref<1x256xf32, #tpu.memory_space<vmem>>, vector<1x128xf32>,
    %c0_20 = arith.constant 0 : index
    %c128_21 = arith.constant 128 : index
    %46 = vector.load %arg8[%c0_20, %c128_21] : memref<1x256xf32, #tpu.memory_space<vmem>>, vector<1x128xf32>
    tpu.vector_store %arg8[%c0_20, %c128_21], %38 {strides = array<i32>} : memref<1x256xf32, #tpu.memory_space<vmem>>, vector<1x128xf32>,
    %c0_22 = arith.constant 0 : index
    %c0_23 = arith.constant 0 : index
    %47 = vector.load %arg8[%c0_22, %c0_23] : memref<1x256xf32, #tpu.memory_space<vmem>>, vector<1x256xf32>
    %c0_24 = arith.constant 0 : index
    %c0_25 = arith.constant 0 : index
    %48 = vector.load %arg4[%c0_24, %c0_25] : memref<256x512xf32, #tpu.memory_space<vmem>>, vector<256x512xf32>
    %cst_26 = arith.constant dense<0.000000e+00> : vector<1x512xf32>
    %49 = tpu.matmul %47, %48, %cst_26 {dimension_numbers = #tpu.dot_dimension_numbers<[1], [0], [0], [1], [0, 0, 1, 1], [], []>} : vector<1x256xf32>, vector<256x512xf32>, vector<1x512xf32> -> vector<1x512xf32>
    %c0_27 = arith.constant 0 : index
    %c0_28 = arith.constant 0 : index
    %50 = vector.load %arg5[%c0_27, %c0_28] : memref<1x512xf32, #tpu.memory_space<vmem>>, vector<1x512xf32>
    %51 = arith.addf %49, %50 : vector<1x512xf32>
    %52 = vector.extract_strided_slice %51 {offsets = [0, 0], sizes = [1, 128], strides = [1, 1]} : vector<1x512xf32> to vector<1x128xf32>
    %53 = arith.negf %52 : vector<1x128xf32>
    %54 = math.exp %53 : vector<1x128xf32>
    %cst_29 = arith.constant 1.000000e+00 : f32
    %55 = vector.broadcast %cst_29 : f32 to vector<1x128xf32>
    %56 = arith.addf %55, %54 : vector<1x128xf32>
    %57 = arith.divf %55, %56 : vector<1x128xf32>
    %58 = vector.extract_strided_slice %51 {offsets = [0, 128], sizes = [1, 128], strides = [1, 1]} : vector<1x512xf32> to vector<1x128xf32>
    %59 = arith.negf %58 : vector<1x128xf32>
    %60 = math.exp %59 : vector<1x128xf32>
    %cst_30 = arith.constant 1.000000e+00 : f32
    %61 = vector.broadcast %cst_30 : f32 to vector<1x128xf32>
    %62 = arith.addf %61, %60 : vector<1x128xf32>
    %63 = arith.divf %61, %62 : vector<1x128xf32>
    %64 = vector.extract_strided_slice %51 {offsets = [0, 256], sizes = [1, 128], strides = [1, 1]} : vector<1x512xf32> to vector<1x128xf32>
    %65 = vector.extract_strided_slice %51 {offsets = [0, 384], sizes = [1, 128], strides = [1, 1]} : vector<1x512xf32> to vector<1x128xf32>
    %66 = arith.mulf %57, %65 : vector<1x128xf32>
    %67 = arith.addf %64, %66 : vector<1x128xf32>
    %68 = math.tanh %67 : vector<1x128xf32>
    %cst_31 = arith.constant 1.000000e+00 : f32
    %69 = vector.broadcast %cst_31 : f32 to vector<1x128xf32>
    %70 = arith.subf %69, %63 : vector<1x128xf32>
    %71 = arith.mulf %70, %68 : vector<1x128xf32>
    %72 = arith.mulf %63, %38 : vector<1x128xf32>
    %73 = arith.addf %71, %72 : vector<1x128xf32>
    %c8_i32_32 = arith.constant 8 : i32
    %74 = arith.muli %arg0, %c8_i32_32 : i32
    %c2_i32 = arith.constant 2 : i32
    %75 = arith.addi %74, %c2_i32 : i32
    %76 = arith.index_cast %75 : i32 to index
    %77 = memref.load %arg1[%76] : memref<8xi32, #tpu.memory_space<smem>>
    %78 = arith.index_cast %77 : i32 to index
    %c0_33 = arith.constant 0 : index
    %79 = vector.load %arg2[%78, %c0_33] : memref<16x128xf32, #tpu.memory_space<vmem>>, vector<1x128xf32>
    %c0_34 = arith.constant 0 : index
    %c0_35 = arith.constant 0 : index
    %80 = vector.load %arg8[%c0_34, %c0_35] : memref<1x256xf32, #tpu.memory_space<vmem>>, vector<1x128xf32>
    tpu.vector_store %arg8[%c0_34, %c0_35], %79 {strides = array<i32>} : memref<1x256xf32, #tpu.memory_space<vmem>>, vector<1x128xf32>,
    %c0_36 = arith.constant 0 : index
    %c128_37 = arith.constant 128 : index
    %81 = vector.load %arg8[%c0_36, %c128_37] : memref<1x256xf32, #tpu.memory_space<vmem>>, vector<1x128xf32>
    tpu.vector_store %arg8[%c0_36, %c128_37], %73 {strides = array<i32>} : memref<1x256xf32, #tpu.memory_space<vmem>>, vector<1x128xf32>,
    %c0_38 = arith.constant 0 : index
    %c0_39 = arith.constant 0 : index
    %82 = vector.load %arg8[%c0_38, %c0_39] : memref<1x256xf32, #tpu.memory_space<vmem>>, vector<1x256xf32>
    %c0_40 = arith.constant 0 : index
    %c0_41 = arith.constant 0 : index
    %83 = vector.load %arg4[%c0_40, %c0_41] : memref<256x512xf32, #tpu.memory_space<vmem>>, vector<256x512xf32>
    %cst_42 = arith.constant dense<0.000000e+00> : vector<1x512xf32>
    %84 = tpu.matmul %82, %83, %cst_42 {dimension_numbers = #tpu.dot_dimension_numbers<[1], [0], [0], [1], [0, 0, 1, 1], [], []>} : vector<1x256xf32>, vector<256x512xf32>, vector<1x512xf32> -> vector<1x512xf32>
    %c0_43 = arith.constant 0 : index
    %c0_44 = arith.constant 0 : index
    %85 = vector.load %arg5[%c0_43, %c0_44] : memref<1x512xf32, #tpu.memory_space<vmem>>, vector<1x512xf32>
    %86 = arith.addf %84, %85 : vector<1x512xf32>
    %87 = vector.extract_strided_slice %86 {offsets = [0, 0], sizes = [1, 128], strides = [1, 1]} : vector<1x512xf32> to vector<1x128xf32>
    %88 = arith.negf %87 : vector<1x128xf32>
    %89 = math.exp %88 : vector<1x128xf32>
    %cst_45 = arith.constant 1.000000e+00 : f32
    %90 = vector.broadcast %cst_45 : f32 to vector<1x128xf32>
    %91 = arith.addf %90, %89 : vector<1x128xf32>
    %92 = arith.divf %90, %91 : vector<1x128xf32>
    %93 = vector.extract_strided_slice %86 {offsets = [0, 128], sizes = [1, 128], strides = [1, 1]} : vector<1x512xf32> to vector<1x128xf32>
    %94 = arith.negf %93 : vector<1x128xf32>
    %95 = math.exp %94 : vector<1x128xf32>
    %cst_46 = arith.constant 1.000000e+00 : f32
    %96 = vector.broadcast %cst_46 : f32 to vector<1x128xf32>
    %97 = arith.addf %96, %95 : vector<1x128xf32>
    %98 = arith.divf %96, %97 : vector<1x128xf32>
    %99 = vector.extract_strided_slice %86 {offsets = [0, 256], sizes = [1, 128], strides = [1, 1]} : vector<1x512xf32> to vector<1x128xf32>
    %100 = vector.extract_strided_slice %86 {offsets = [0, 384], sizes = [1, 128], strides = [1, 1]} : vector<1x512xf32> to vector<1x128xf32>
    %101 = arith.mulf %92, %100 : vector<1x128xf32>
    %102 = arith.addf %99, %101 : vector<1x128xf32>
    %103 = math.tanh %102 : vector<1x128xf32>
    %cst_47 = arith.constant 1.000000e+00 : f32
    %104 = vector.broadcast %cst_47 : f32 to vector<1x128xf32>
    %105 = arith.subf %104, %98 : vector<1x128xf32>
    %106 = arith.mulf %105, %103 : vector<1x128xf32>
    %107 = arith.mulf %98, %73 : vector<1x128xf32>
    %108 = arith.addf %106, %107 : vector<1x128xf32>
    %c8_i32_48 = arith.constant 8 : i32
    %109 = arith.muli %arg0, %c8_i32_48 : i32
    %c3_i32 = arith.constant 3 : i32
    %110 = arith.addi %109, %c3_i32 : i32
    %111 = arith.index_cast %110 : i32 to index
    %112 = memref.load %arg1[%111] : memref<8xi32, #tpu.memory_space<smem>>
    %113 = arith.index_cast %112 : i32 to index
    %c0_49 = arith.constant 0 : index
    %114 = vector.load %arg2[%113, %c0_49] : memref<16x128xf32, #tpu.memory_space<vmem>>, vector<1x128xf32>
    %c0_50 = arith.constant 0 : index
    %c0_51 = arith.constant 0 : index
    %115 = vector.load %arg8[%c0_50, %c0_51] : memref<1x256xf32, #tpu.memory_space<vmem>>, vector<1x128xf32>
    tpu.vector_store %arg8[%c0_50, %c0_51], %114 {strides = array<i32>} : memref<1x256xf32, #tpu.memory_space<vmem>>, vector<1x128xf32>,
    %c0_52 = arith.constant 0 : index
    %c128_53 = arith.constant 128 : index
    %116 = vector.load %arg8[%c0_52, %c128_53] : memref<1x256xf32, #tpu.memory_space<vmem>>, vector<1x128xf32>
    tpu.vector_store %arg8[%c0_52, %c128_53], %108 {strides = array<i32>} : memref<1x256xf32, #tpu.memory_space<vmem>>, vector<1x128xf32>,
    %c0_54 = arith.constant 0 : index
    %c0_55 = arith.constant 0 : index
    %117 = vector.load %arg8[%c0_54, %c0_55] : memref<1x256xf32, #tpu.memory_space<vmem>>, vector<1x256xf32>
    %c0_56 = arith.constant 0 : index
    %c0_57 = arith.constant 0 : index
    %118 = vector.load %arg4[%c0_56, %c0_57] : memref<256x512xf32, #tpu.memory_space<vmem>>, vector<256x512xf32>
    %cst_58 = arith.constant dense<0.000000e+00> : vector<1x512xf32>
    %119 = tpu.matmul %117, %118, %cst_58 {dimension_numbers = #tpu.dot_dimension_numbers<[1], [0], [0], [1], [0, 0, 1, 1], [], []>} : vector<1x256xf32>, vector<256x512xf32>, vector<1x512xf32> -> vector<1x512xf32>
    %c0_59 = arith.constant 0 : index
    %c0_60 = arith.constant 0 : index
    %120 = vector.load %arg5[%c0_59, %c0_60] : memref<1x512xf32, #tpu.memory_space<vmem>>, vector<1x512xf32>
    %121 = arith.addf %119, %120 : vector<1x512xf32>
    %122 = vector.extract_strided_slice %121 {offsets = [0, 0], sizes = [1, 128], strides = [1, 1]} : vector<1x512xf32> to vector<1x128xf32>
    %123 = arith.negf %122 : vector<1x128xf32>
    %124 = math.exp %123 : vector<1x128xf32>
    %cst_61 = arith.constant 1.000000e+00 : f32
    %125 = vector.broadcast %cst_61 : f32 to vector<1x128xf32>
    %126 = arith.addf %125, %124 : vector<1x128xf32>
    %127 = arith.divf %125, %126 : vector<1x128xf32>
    %128 = vector.extract_strided_slice %121 {offsets = [0, 128], sizes = [1, 128], strides = [1, 1]} : vector<1x512xf32> to vector<1x128xf32>
    %129 = arith.negf %128 : vector<1x128xf32>
    %130 = math.exp %129 : vector<1x128xf32>
    %cst_62 = arith.constant 1.000000e+00 : f32
    %131 = vector.broadcast %cst_62 : f32 to vector<1x128xf32>
    %132 = arith.addf %131, %130 : vector<1x128xf32>
    %133 = arith.divf %131, %132 : vector<1x128xf32>
    %134 = vector.extract_strided_slice %121 {offsets = [0, 256], sizes = [1, 128], strides = [1, 1]} : vector<1x512xf32> to vector<1x128xf32>
    %135 = vector.extract_strided_slice %121 {offsets = [0, 384], sizes = [1, 128], strides = [1, 1]} : vector<1x512xf32> to vector<1x128xf32>
    %136 = arith.mulf %127, %135 : vector<1x128xf32>
    %137 = arith.addf %134, %136 : vector<1x128xf32>
    %138 = math.tanh %137 : vector<1x128xf32>
    %cst_63 = arith.constant 1.000000e+00 : f32
    %139 = vector.broadcast %cst_63 : f32 to vector<1x128xf32>
    %140 = arith.subf %139, %133 : vector<1x128xf32>
    %141 = arith.mulf %140, %138 : vector<1x128xf32>
    %142 = arith.mulf %133, %108 : vector<1x128xf32>
    %143 = arith.addf %141, %142 : vector<1x128xf32>
    %c8_i32_64 = arith.constant 8 : i32
    %144 = arith.muli %arg0, %c8_i32_64 : i32
    %c4_i32 = arith.constant 4 : i32
    %145 = arith.addi %144, %c4_i32 : i32
    %146 = arith.index_cast %145 : i32 to index
    %147 = memref.load %arg1[%146] : memref<8xi32, #tpu.memory_space<smem>>
    %148 = arith.index_cast %147 : i32 to index
    %c0_65 = arith.constant 0 : index
    %149 = vector.load %arg2[%148, %c0_65] : memref<16x128xf32, #tpu.memory_space<vmem>>, vector<1x128xf32>
    %c0_66 = arith.constant 0 : index
    %c0_67 = arith.constant 0 : index
    %150 = vector.load %arg8[%c0_66, %c0_67] : memref<1x256xf32, #tpu.memory_space<vmem>>, vector<1x128xf32>
    tpu.vector_store %arg8[%c0_66, %c0_67], %149 {strides = array<i32>} : memref<1x256xf32, #tpu.memory_space<vmem>>, vector<1x128xf32>,
    %c0_68 = arith.constant 0 : index
    %c128_69 = arith.constant 128 : index
    %151 = vector.load %arg8[%c0_68, %c128_69] : memref<1x256xf32, #tpu.memory_space<vmem>>, vector<1x128xf32>
    tpu.vector_store %arg8[%c0_68, %c128_69], %143 {strides = array<i32>} : memref<1x256xf32, #tpu.memory_space<vmem>>, vector<1x128xf32>,
    %c0_70 = arith.constant 0 : index
    %c0_71 = arith.constant 0 : index
    %152 = vector.load %arg8[%c0_70, %c0_71] : memref<1x256xf32, #tpu.memory_space<vmem>>, vector<1x256xf32>
    %c0_72 = arith.constant 0 : index
    %c0_73 = arith.constant 0 : index
    %153 = vector.load %arg4[%c0_72, %c0_73] : memref<256x512xf32, #tpu.memory_space<vmem>>, vector<256x512xf32>
    %cst_74 = arith.constant dense<0.000000e+00> : vector<1x512xf32>
    %154 = tpu.matmul %152, %153, %cst_74 {dimension_numbers = #tpu.dot_dimension_numbers<[1], [0], [0], [1], [0, 0, 1, 1], [], []>} : vector<1x256xf32>, vector<256x512xf32>, vector<1x512xf32> -> vector<1x512xf32>
    %c0_75 = arith.constant 0 : index
    %c0_76 = arith.constant 0 : index
    %155 = vector.load %arg5[%c0_75, %c0_76] : memref<1x512xf32, #tpu.memory_space<vmem>>, vector<1x512xf32>
    %156 = arith.addf %154, %155 : vector<1x512xf32>
    %157 = vector.extract_strided_slice %156 {offsets = [0, 0], sizes = [1, 128], strides = [1, 1]} : vector<1x512xf32> to vector<1x128xf32>
    %158 = arith.negf %157 : vector<1x128xf32>
    %159 = math.exp %158 : vector<1x128xf32>
    %cst_77 = arith.constant 1.000000e+00 : f32
    %160 = vector.broadcast %cst_77 : f32 to vector<1x128xf32>
    %161 = arith.addf %160, %159 : vector<1x128xf32>
    %162 = arith.divf %160, %161 : vector<1x128xf32>
    %163 = vector.extract_strided_slice %156 {offsets = [0, 128], sizes = [1, 128], strides = [1, 1]} : vector<1x512xf32> to vector<1x128xf32>
    %164 = arith.negf %163 : vector<1x128xf32>
    %165 = math.exp %164 : vector<1x128xf32>
    %cst_78 = arith.constant 1.000000e+00 : f32
    %166 = vector.broadcast %cst_78 : f32 to vector<1x128xf32>
    %167 = arith.addf %166, %165 : vector<1x128xf32>
    %168 = arith.divf %166, %167 : vector<1x128xf32>
    %169 = vector.extract_strided_slice %156 {offsets = [0, 256], sizes = [1, 128], strides = [1, 1]} : vector<1x512xf32> to vector<1x128xf32>
    %170 = vector.extract_strided_slice %156 {offsets = [0, 384], sizes = [1, 128], strides = [1, 1]} : vector<1x512xf32> to vector<1x128xf32>
    %171 = arith.mulf %162, %170 : vector<1x128xf32>
    %172 = arith.addf %169, %171 : vector<1x128xf32>
    %173 = math.tanh %172 : vector<1x128xf32>
    %cst_79 = arith.constant 1.000000e+00 : f32
    %174 = vector.broadcast %cst_79 : f32 to vector<1x128xf32>
    %175 = arith.subf %174, %168 : vector<1x128xf32>
    %176 = arith.mulf %175, %173 : vector<1x128xf32>
    %177 = arith.mulf %168, %143 : vector<1x128xf32>
    %178 = arith.addf %176, %177 : vector<1x128xf32>
    %c8_i32_80 = arith.constant 8 : i32
    %179 = arith.muli %arg0, %c8_i32_80 : i32
    %c5_i32 = arith.constant 5 : i32
    %180 = arith.addi %179, %c5_i32 : i32
    %181 = arith.index_cast %180 : i32 to index
    %182 = memref.load %arg1[%181] : memref<8xi32, #tpu.memory_space<smem>>
    %183 = arith.index_cast %182 : i32 to index
    %c0_81 = arith.constant 0 : index
    %184 = vector.load %arg2[%183, %c0_81] : memref<16x128xf32, #tpu.memory_space<vmem>>, vector<1x128xf32>
    %c0_82 = arith.constant 0 : index
    %c0_83 = arith.constant 0 : index
    %185 = vector.load %arg8[%c0_82, %c0_83] : memref<1x256xf32, #tpu.memory_space<vmem>>, vector<1x128xf32>
    tpu.vector_store %arg8[%c0_82, %c0_83], %184 {strides = array<i32>} : memref<1x256xf32, #tpu.memory_space<vmem>>, vector<1x128xf32>,
    %c0_84 = arith.constant 0 : index
    %c128_85 = arith.constant 128 : index
    %186 = vector.load %arg8[%c0_84, %c128_85] : memref<1x256xf32, #tpu.memory_space<vmem>>, vector<1x128xf32>
    tpu.vector_store %arg8[%c0_84, %c128_85], %178 {strides = array<i32>} : memref<1x256xf32, #tpu.memory_space<vmem>>, vector<1x128xf32>,
    %c0_86 = arith.constant 0 : index
    %c0_87 = arith.constant 0 : index
    %187 = vector.load %arg8[%c0_86, %c0_87] : memref<1x256xf32, #tpu.memory_space<vmem>>, vector<1x256xf32>
    %c0_88 = arith.constant 0 : index
    %c0_89 = arith.constant 0 : index
    %188 = vector.load %arg4[%c0_88, %c0_89] : memref<256x512xf32, #tpu.memory_space<vmem>>, vector<256x512xf32>
    %cst_90 = arith.constant dense<0.000000e+00> : vector<1x512xf32>
    %189 = tpu.matmul %187, %188, %cst_90 {dimension_numbers = #tpu.dot_dimension_numbers<[1], [0], [0], [1], [0, 0, 1, 1], [], []>} : vector<1x256xf32>, vector<256x512xf32>, vector<1x512xf32> -> vector<1x512xf32>
    %c0_91 = arith.constant 0 : index
    %c0_92 = arith.constant 0 : index
    %190 = vector.load %arg5[%c0_91, %c0_92] : memref<1x512xf32, #tpu.memory_space<vmem>>, vector<1x512xf32>
    %191 = arith.addf %189, %190 : vector<1x512xf32>
    %192 = vector.extract_strided_slice %191 {offsets = [0, 0], sizes = [1, 128], strides = [1, 1]} : vector<1x512xf32> to vector<1x128xf32>
    %193 = arith.negf %192 : vector<1x128xf32>
    %194 = math.exp %193 : vector<1x128xf32>
    %cst_93 = arith.constant 1.000000e+00 : f32
    %195 = vector.broadcast %cst_93 : f32 to vector<1x128xf32>
    %196 = arith.addf %195, %194 : vector<1x128xf32>
    %197 = arith.divf %195, %196 : vector<1x128xf32>
    %198 = vector.extract_strided_slice %191 {offsets = [0, 128], sizes = [1, 128], strides = [1, 1]} : vector<1x512xf32> to vector<1x128xf32>
    %199 = arith.negf %198 : vector<1x128xf32>
    %200 = math.exp %199 : vector<1x128xf32>
    %cst_94 = arith.constant 1.000000e+00 : f32
    %201 = vector.broadcast %cst_94 : f32 to vector<1x128xf32>
    %202 = arith.addf %201, %200 : vector<1x128xf32>
    %203 = arith.divf %201, %202 : vector<1x128xf32>
    %204 = vector.extract_strided_slice %191 {offsets = [0, 256], sizes = [1, 128], strides = [1, 1]} : vector<1x512xf32> to vector<1x128xf32>
    %205 = vector.extract_strided_slice %191 {offsets = [0, 384], sizes = [1, 128], strides = [1, 1]} : vector<1x512xf32> to vector<1x128xf32>
    %206 = arith.mulf %197, %205 : vector<1x128xf32>
    %207 = arith.addf %204, %206 : vector<1x128xf32>
    %208 = math.tanh %207 : vector<1x128xf32>
    %cst_95 = arith.constant 1.000000e+00 : f32
    %209 = vector.broadcast %cst_95 : f32 to vector<1x128xf32>
    %210 = arith.subf %209, %203 : vector<1x128xf32>
    %211 = arith.mulf %210, %208 : vector<1x128xf32>
    %212 = arith.mulf %203, %178 : vector<1x128xf32>
    %213 = arith.addf %211, %212 : vector<1x128xf32>
    %c8_i32_96 = arith.constant 8 : i32
    %214 = arith.muli %arg0, %c8_i32_96 : i32
    %c6_i32 = arith.constant 6 : i32
    %215 = arith.addi %214, %c6_i32 : i32
    %216 = arith.index_cast %215 : i32 to index
    %217 = memref.load %arg1[%216] : memref<8xi32, #tpu.memory_space<smem>>
    %218 = arith.index_cast %217 : i32 to index
    %c0_97 = arith.constant 0 : index
    %219 = vector.load %arg2[%218, %c0_97] : memref<16x128xf32, #tpu.memory_space<vmem>>, vector<1x128xf32>
    %c0_98 = arith.constant 0 : index
    %c0_99 = arith.constant 0 : index
    %220 = vector.load %arg8[%c0_98, %c0_99] : memref<1x256xf32, #tpu.memory_space<vmem>>, vector<1x128xf32>
    tpu.vector_store %arg8[%c0_98, %c0_99], %219 {strides = array<i32>} : memref<1x256xf32, #tpu.memory_space<vmem>>, vector<1x128xf32>,
    %c0_100 = arith.constant 0 : index
    %c128_101 = arith.constant 128 : index
    %221 = vector.load %arg8[%c0_100, %c128_101] : memref<1x256xf32, #tpu.memory_space<vmem>>, vector<1x128xf32>
    tpu.vector_store %arg8[%c0_100, %c128_101], %213 {strides = array<i32>} : memref<1x256xf32, #tpu.memory_space<vmem>>, vector<1x128xf32>,
    %c0_102 = arith.constant 0 : index
    %c0_103 = arith.constant 0 : index
    %222 = vector.load %arg8[%c0_102, %c0_103] : memref<1x256xf32, #tpu.memory_space<vmem>>, vector<1x256xf32>
    %c0_104 = arith.constant 0 : index
    %c0_105 = arith.constant 0 : index
    %223 = vector.load %arg4[%c0_104, %c0_105] : memref<256x512xf32, #tpu.memory_space<vmem>>, vector<256x512xf32>
    %cst_106 = arith.constant dense<0.000000e+00> : vector<1x512xf32>
    %224 = tpu.matmul %222, %223, %cst_106 {dimension_numbers = #tpu.dot_dimension_numbers<[1], [0], [0], [1], [0, 0, 1, 1], [], []>} : vector<1x256xf32>, vector<256x512xf32>, vector<1x512xf32> -> vector<1x512xf32>
    %c0_107 = arith.constant 0 : index
    %c0_108 = arith.constant 0 : index
    %225 = vector.load %arg5[%c0_107, %c0_108] : memref<1x512xf32, #tpu.memory_space<vmem>>, vector<1x512xf32>
    %226 = arith.addf %224, %225 : vector<1x512xf32>
    %227 = vector.extract_strided_slice %226 {offsets = [0, 0], sizes = [1, 128], strides = [1, 1]} : vector<1x512xf32> to vector<1x128xf32>
    %228 = arith.negf %227 : vector<1x128xf32>
    %229 = math.exp %228 : vector<1x128xf32>
    %cst_109 = arith.constant 1.000000e+00 : f32
    %230 = vector.broadcast %cst_109 : f32 to vector<1x128xf32>
    %231 = arith.addf %230, %229 : vector<1x128xf32>
    %232 = arith.divf %230, %231 : vector<1x128xf32>
    %233 = vector.extract_strided_slice %226 {offsets = [0, 128], sizes = [1, 128], strides = [1, 1]} : vector<1x512xf32> to vector<1x128xf32>
    %234 = arith.negf %233 : vector<1x128xf32>
    %235 = math.exp %234 : vector<1x128xf32>
    %cst_110 = arith.constant 1.000000e+00 : f32
    %236 = vector.broadcast %cst_110 : f32 to vector<1x128xf32>
    %237 = arith.addf %236, %235 : vector<1x128xf32>
    %238 = arith.divf %236, %237 : vector<1x128xf32>
    %239 = vector.extract_strided_slice %226 {offsets = [0, 256], sizes = [1, 128], strides = [1, 1]} : vector<1x512xf32> to vector<1x128xf32>
    %240 = vector.extract_strided_slice %226 {offsets = [0, 384], sizes = [1, 128], strides = [1, 1]} : vector<1x512xf32> to vector<1x128xf32>
    %241 = arith.mulf %232, %240 : vector<1x128xf32>
    %242 = arith.addf %239, %241 : vector<1x128xf32>
    %243 = math.tanh %242 : vector<1x128xf32>
    %cst_111 = arith.constant 1.000000e+00 : f32
    %244 = vector.broadcast %cst_111 : f32 to vector<1x128xf32>
    %245 = arith.subf %244, %238 : vector<1x128xf32>
    %246 = arith.mulf %245, %243 : vector<1x128xf32>
    %247 = arith.mulf %238, %213 : vector<1x128xf32>
    %248 = arith.addf %246, %247 : vector<1x128xf32>
    %c8_i32_112 = arith.constant 8 : i32
    %249 = arith.muli %arg0, %c8_i32_112 : i32
    %c7_i32 = arith.constant 7 : i32
    %250 = arith.addi %249, %c7_i32 : i32
    %251 = arith.index_cast %250 : i32 to index
    %252 = memref.load %arg1[%251] : memref<8xi32, #tpu.memory_space<smem>>
    %253 = arith.index_cast %252 : i32 to index
    %c0_113 = arith.constant 0 : index
    %254 = vector.load %arg2[%253, %c0_113] : memref<16x128xf32, #tpu.memory_space<vmem>>, vector<1x128xf32>
    %c0_114 = arith.constant 0 : index
    %c0_115 = arith.constant 0 : index
    %255 = vector.load %arg8[%c0_114, %c0_115] : memref<1x256xf32, #tpu.memory_space<vmem>>, vector<1x128xf32>
    tpu.vector_store %arg8[%c0_114, %c0_115], %254 {strides = array<i32>} : memref<1x256xf32, #tpu.memory_space<vmem>>, vector<1x128xf32>,
    %c0_116 = arith.constant 0 : index
    %c128_117 = arith.constant 128 : index
    %256 = vector.load %arg8[%c0_116, %c128_117] : memref<1x256xf32, #tpu.memory_space<vmem>>, vector<1x128xf32>
    tpu.vector_store %arg8[%c0_116, %c128_117], %248 {strides = array<i32>} : memref<1x256xf32, #tpu.memory_space<vmem>>, vector<1x128xf32>,
    %c0_118 = arith.constant 0 : index
    %c0_119 = arith.constant 0 : index
    %257 = vector.load %arg8[%c0_118, %c0_119] : memref<1x256xf32, #tpu.memory_space<vmem>>, vector<1x256xf32>
    %c0_120 = arith.constant 0 : index
    %c0_121 = arith.constant 0 : index
    %258 = vector.load %arg4[%c0_120, %c0_121] : memref<256x512xf32, #tpu.memory_space<vmem>>, vector<256x512xf32>
    %cst_122 = arith.constant dense<0.000000e+00> : vector<1x512xf32>
    %259 = tpu.matmul %257, %258, %cst_122 {dimension_numbers = #tpu.dot_dimension_numbers<[1], [0], [0], [1], [0, 0, 1, 1], [], []>} : vector<1x256xf32>, vector<256x512xf32>, vector<1x512xf32> -> vector<1x512xf32>
    %c0_123 = arith.constant 0 : index
    %c0_124 = arith.constant 0 : index
    %260 = vector.load %arg5[%c0_123, %c0_124] : memref<1x512xf32, #tpu.memory_space<vmem>>, vector<1x512xf32>
    %261 = arith.addf %259, %260 : vector<1x512xf32>
    %262 = vector.extract_strided_slice %261 {offsets = [0, 0], sizes = [1, 128], strides = [1, 1]} : vector<1x512xf32> to vector<1x128xf32>
    %263 = arith.negf %262 : vector<1x128xf32>
    %264 = math.exp %263 : vector<1x128xf32>
    %cst_125 = arith.constant 1.000000e+00 : f32
    %265 = vector.broadcast %cst_125 : f32 to vector<1x128xf32>
    %266 = arith.addf %265, %264 : vector<1x128xf32>
    %267 = arith.divf %265, %266 : vector<1x128xf32>
    %268 = vector.extract_strided_slice %261 {offsets = [0, 128], sizes = [1, 128], strides = [1, 1]} : vector<1x512xf32> to vector<1x128xf32>
    %269 = arith.negf %268 : vector<1x128xf32>
    %270 = math.exp %269 : vector<1x128xf32>
    %cst_126 = arith.constant 1.000000e+00 : f32
    %271 = vector.broadcast %cst_126 : f32 to vector<1x128xf32>
    %272 = arith.addf %271, %270 : vector<1x128xf32>
    %273 = arith.divf %271, %272 : vector<1x128xf32>
    %274 = vector.extract_strided_slice %261 {offsets = [0, 256], sizes = [1, 128], strides = [1, 1]} : vector<1x512xf32> to vector<1x128xf32>
    %275 = vector.extract_strided_slice %261 {offsets = [0, 384], sizes = [1, 128], strides = [1, 1]} : vector<1x512xf32> to vector<1x128xf32>
    %276 = arith.mulf %267, %275 : vector<1x128xf32>
    %277 = arith.addf %274, %276 : vector<1x128xf32>
    %278 = math.tanh %277 : vector<1x128xf32>
    %cst_127 = arith.constant 1.000000e+00 : f32
    %279 = vector.broadcast %cst_127 : f32 to vector<1x128xf32>
    %280 = arith.subf %279, %273 : vector<1x128xf32>
    %281 = arith.mulf %280, %278 : vector<1x128xf32>
    %282 = arith.mulf %273, %248 : vector<1x128xf32>
    %283 = arith.addf %281, %282 : vector<1x128xf32>
    %284 = tpu.concatenate %38, %73, %108, %143, %178, %213, %248, %283 in 0 : vector<1x128xf32>, vector<1x128xf32>, vector<1x128xf32>, vector<1x128xf32>, vector<1x128xf32>, vector<1x128xf32>, vector<1x128xf32>, vector<1x128xf32> -> vector<8x128xf32>
    %c0_128 = arith.constant 0 : index
    %c0_129 = arith.constant 0 : index
    %285 = vector.load %arg6[%c0_128, %c0_129] : memref<8x128xf32, #tpu.memory_space<vmem>>, vector<8x128xf32>
    tpu.vector_store %arg6[%c0_128, %c0_129], %284 {strides = array<i32>} : memref<8x128xf32, #tpu.memory_space<vmem>>, vector<8x128xf32>,
    %c0_130 = arith.constant 0 : index
    %c0_131 = arith.constant 0 : index
    %286 = vector.load %arg7[%c0_130, %c0_131] : memref<1x128xf32, #tpu.memory_space<vmem>>, vector<1x128xf32>
    tpu.vector_store %arg7[%c0_130, %c0_131], %283 {strides = array<i32>} : memref<1x128xf32, #tpu.memory_space<vmem>>, vector<1x128xf32>,
    return
  }
  func.func @transform_0(%arg0: i32, %arg1: memref<8xi32, #tpu.memory_space<smem>>) -> (i32, i32) {
    %c0_i32 = arith.constant 0 : i32
    %c0_i32_0 = arith.constant 0 : i32
    %c0_i32_1 = arith.constant 0 : i32
    return %c0_i32, %c0_i32_0 : i32, i32
  }
  func.func @transform_1(%arg0: i32, %arg1: memref<8xi32, #tpu.memory_space<smem>>) -> (i32, i32) {
    %c0_i32 = arith.constant 0 : i32
    %c0_i32_0 = arith.constant 0 : i32
    %c0_i32_1 = arith.constant 0 : i32
    return %c0_i32, %c0_i32_0 : i32, i32
  }
  func.func @transform_2(%arg0: i32, %arg1: memref<8xi32, #tpu.memory_space<smem>>) -> (i32, i32) {
    %c0_i32 = arith.constant 0 : i32
    %c0_i32_0 = arith.constant 0 : i32
    %c0_i32_1 = arith.constant 0 : i32
    return %c0_i32, %c0_i32_0 : i32, i32
  }
  func.func @transform_3(%arg0: i32, %arg1: memref<8xi32, #tpu.memory_space<smem>>) -> (i32, i32) {
    %c0_i32 = arith.constant 0 : i32
    %c0_i32_0 = arith.constant 0 : i32
    %c0_i32_1 = arith.constant 0 : i32
    return %c0_i32, %c0_i32_0 : i32, i32
  }
  func.func @transform_4(%arg0: i32, %arg1: memref<8xi32, #tpu.memory_space<smem>>) -> (i32, i32) {
    %c0_i32 = arith.constant 0 : i32
    %c0_i32_0 = arith.constant 0 : i32
    return %arg0, %c0_i32 : i32, i32
  }
}

</mosaic_0001>

<llo_original>
// kernel: encoder_rnn_forward_seq.1
$region0: #{encoder_rnn_forward_seq.1}
  #allocation0 [shape = 'u32[]', space=smem, size = 0x4, offset = 0x4, fixed_abs, tag = 'smem constant byte address 0x4 - core index']
  #allocation1 [shape = 'u32[72,128]{1,0:T(1,128)}', space=vmem, size = 0x9000, scoped, tag = 'internal scratch']
  #allocation2 [shape = 'f32[1,128]{1,0:T(1,128)}', space=vmem, size = 0x200, scoped, tag = 'scratch operand']
  #allocation3 [shape = 'f32[1,256]{1,0:T(1,128)}', space=vmem, size = 0x400, scoped, tag = 'scratch operand']
  #allocation4 [shape = 's32[1]{0}', space=sflag, size = 0x4, scoped, tag = 'scoped memory for encoder_rnn_forward_seq.1']
  #allocation5 [shape = 'u8[512]{0}', space=smem, size = 0x200, scoped, tag = 'prefetched SMEM operand 0']
  %s0 = inlined_call_operand.vmem [shape: s32[8], index: 0, kind: input, shape index: {}]
  %s1 = inlined_call_operand.hbm [shape: f32[16,128], index: 1, kind: input, shape index: {}]
  %s2 = inlined_call_operand.vmem [shape: f32[1,128], index: 2, kind: input, shape index: {}]
  %s3 = inlined_call_operand.hbm [shape: f32[256,512], index: 3, kind: input, shape index: {}]
  %s4 = inlined_call_operand.vmem [shape: f32[1,512], index: 4, kind: input, shape index: {}]
  %s5 = inlined_call_operand.vmem [shape: f32[8,128], index: 5, kind: output, shape index: {}]
  %s6 = sld [smem:[#allocation0]]
  $region38: #{encoder_rnn_forward_seq.1} parent=0
    _
  %s8 = ssub.s32 1, %s6
  %s9 = scalar_select 0, %s8, %s6
  %s11 = sshll.u32 %s0, 4
  %s12 = int_to_ptr.vmem [resolvable:$true] %s11
  %14 = dma.vmem_to_smem %s12, 16, [#allocation5], [#allocation4]
  %16 = dma.done [#allocation4], 16
  %17 = sfence
  $region1: #{encoder_rnn_forward_seq.1} parent=0
    #allocation6 [shape = 'u8[8192]{0}', space=vmem, size = 0x2000, scoped, tag = 'input window, operand 1, single buffered']
    #allocation7 [shape = 's32[1]{0}', space=sflag, size = 0x4, scoped, tag = 'scoped memory for encoder_rnn_forward_seq.1']
    #allocation8 [shape = 'u8[524288]{0}', space=vmem, size = 0x80000, scoped, tag = 'input window, operand 3, single buffered']
    #allocation9 [shape = 's32[1]{0}', space=sflag, size = 0x4, scoped, tag = 'scoped memory for encoder_rnn_forward_seq.1']
    %18 = vsyncpa [#allocation7], 0
    %19 = vsyncpa [#allocation9], 0
    // Predicated region
    $region2: #{encoder_rnn_forward_seq.1} parent=1 // pred_check
      _
    $region3: #{encoder_rnn_forward_seq.1} parent=1 // pred_check_branch
      %21 = sbr.rel (0) target = $region5
    $region4: #{encoder_rnn_forward_seq.1} parent=1 // pred_region
      %23 = vsyncadd [#allocation7], 0
      %s24 = sshll.u32 %s1, 4
      %s25 = int_to_ptr.hbm [resolvable:$true] %s24
      %s26 = sshll.u32 [#allocation6], 4
      %s27 = int_to_ptr.vmem [resolvable:$true] %s26
      %32 = dma.hbm_to_vmem [thread:$0]  %s25, 256, %s27, [#allocation7], 128, 128, 8
    $region5: #{encoder_rnn_forward_seq.1} parent=1 // pred_fallthru
      _
    // Predicated region
    $region6: #{encoder_rnn_forward_seq.1} parent=1 // pred_check
      _
    $region7: #{encoder_rnn_forward_seq.1} parent=1 // pred_check_branch
      %34 = sbr.rel (0) target = $region9
    $region8: #{encoder_rnn_forward_seq.1} parent=1 // pred_region
      _
    $region9: #{encoder_rnn_forward_seq.1} parent=1 // pred_fallthru
      _
    // Predicated region
    $region10: #{encoder_rnn_forward_seq.1} parent=1 // pred_check
      _
    $region11: #{encoder_rnn_forward_seq.1} parent=1 // pred_check_branch
      %36 = sbr.rel (0) target = $region13
    $region12: #{encoder_rnn_forward_seq.1} parent=1 // pred_region
      %38 = vsyncadd [#allocation9], 0
      %s39 = sshll.u32 %s3, 4
      %s40 = int_to_ptr.hbm [resolvable:$true] %s39
      %s41 = sshll.u32 [#allocation8], 4
      %s42 = int_to_ptr.vmem [resolvable:$true] %s41
      %47 = dma.hbm_to_vmem [thread:$0]  %s40, 16384, %s42, [#allocation9], 512, 512, 32
    $region13: #{encoder_rnn_forward_seq.1} parent=1 // pred_fallthru
      _
    // Predicated region
    $region14: #{encoder_rnn_forward_seq.1} parent=1 // pred_check
      _
    $region15: #{encoder_rnn_forward_seq.1} parent=1 // pred_check_branch
      %49 = sbr.rel (0) target = $region17
    $region16: #{encoder_rnn_forward_seq.1} parent=1 // pred_region
      _
    $region17: #{encoder_rnn_forward_seq.1} parent=1 // pred_fallthru
      _
    // Predicated region
    $region18: #{encoder_rnn_forward_seq.1} parent=1 // pred_check
      _
    $region19: #{encoder_rnn_forward_seq.1} parent=1 // pred_check_branch
      %51 = sbr.rel (0) target = $region21
    $region20: #{encoder_rnn_forward_seq.1} parent=1 // pred_region
      %53 = dma.done [#allocation7], 256
    $region21: #{encoder_rnn_forward_seq.1} parent=1 // pred_fallthru
      _
    // Predicated region
    $region22: #{encoder_rnn_forward_seq.1} parent=1 // pred_check
      _
    $region23: #{encoder_rnn_forward_seq.1} parent=1 // pred_check_branch
      %55 = sbr.rel (0) target = $region25
    $region24: #{encoder_rnn_forward_seq.1} parent=1 // pred_region
      %57 = dma.done [#allocation9], 16384
    $region25: #{encoder_rnn_forward_seq.1} parent=1 // pred_fallthru
      _
    %p58 = scmp.eq.s32.totalorder 0, 0
    // Predicated region
    $region26: #{encoder_rnn_forward_seq.1} parent=1 // pred_check
      %p59 = pneg %p58
    $region27: #{encoder_rnn_forward_seq.1} parent=1 // pred_check_branch
      %61 = sbr.rel (%p59) target = $region29
    $region28: #{encoder_rnn_forward_seq.1} parent=1 // pred_region
      %v62 = vld [vmem:[%s2] sm:$0x1]
      %63 = vst [vmem:[#allocation2] sm:$0x1] %v62
    $region29: #{encoder_rnn_forward_seq.1} parent=1 // pred_fallthru
      _
    %v64 = vld [vmem:[#allocation2] sm:$0x1]
    %s65 = smul.u32 0, 8
    %s66 = sld [smem:[#allocation5 + %s65]]
    %s67 = scalar_lea.vmem [#allocation6], %s66
    %v68 = vld [vmem:[%s67] sm:$0x1]
    %v69 = vlaneseq
    %vm70 = vcmp.ge.s32.totalorder %v69, 0
    %vm71 = vcmp.lt.s32.totalorder %v69, 128
    %vm72 = vmand %vm70, %vm71
    %73 = vst.msk [vmem:[#allocation3] sm:$0x1] %vm72, %v68
    %74 = vst.msk [vmem:[#allocation3 + $0x1] sm:$0x1] %vm72, %v64
    %v75 = vld [vmem:[#allocation3] sm:$0x3]
    %v76 = vld [vmem:[#allocation8] sm:$0xff]
    %v77 = vld [vmem:[#allocation8 + $0x8] sm:$0xff]
    %v78 = vld [vmem:[#allocation8 + $0x10] sm:$0xff]
    %v79 = vld [vmem:[#allocation8 + $0x18] sm:$0xff]
    %v80 = vld [vmem:[#allocation8 + $0x20] sm:$0xff]
    %v81 = vld [vmem:[#allocation8 + $0x28] sm:$0xff]
    %v82 = vld [vmem:[#allocation8 + $0x30] sm:$0xff]
    %v83 = vld [vmem:[#allocation8 + $0x38] sm:$0xff]
    %v84 = vld [vmem:[#allocation8 + $0x40] sm:$0xff]
    %v85 = vld [vmem:[#allocation8 + $0x48] sm:$0xff]
    %v86 = vld [vmem:[#allocation8 + $0x50] sm:$0xff]
    %v87 = vld [vmem:[#allocation8 + $0x58] sm:$0xff]
    %v88 = vld [vmem:[#allocation8 + $0x60] sm:$0xff]
    %v89 = vld [vmem:[#allocation8 + $0x68] sm:$0xff]
    %v90 = vld [vmem:[#allocation8 + $0x70] sm:$0xff]
    %v91 = vld [vmem:[#allocation8 + $0x78] sm:$0xff]
    %v92 = vld [vmem:[#allocation8 + $0x80] sm:$0xff]
    %v93 = vld [vmem:[#allocation8 + $0x88] sm:$0xff]
    %v94 = vld [vmem:[#allocation8 + $0x90] sm:$0xff]
    %v95 = vld [vmem:[#allocation8 + $0x98] sm:$0xff]
    %v96 = vld [vmem:[#allocation8 + $0xa0] sm:$0xff]
    %v97 = vld [vmem:[#allocation8 + $0xa8] sm:$0xff]
    %v98 = vld [vmem:[#allocation8 + $0xb0] sm:$0xff]
    %v99 = vld [vmem:[#allocation8 + $0xb8] sm:$0xff]
    %v100 = vld [vmem:[#allocation8 + $0xc0] sm:$0xff]
    %v101 = vld [vmem:[#allocation8 + $0xc8] sm:$0xff]
    %v102 = vld [vmem:[#allocation8 + $0xd0] sm:$0xff]
    %v103 = vld [vmem:[#allocation8 + $0xd8] sm:$0xff]
    %v104 = vld [vmem:[#allocation8 + $0xe0] sm:$0xff]
    %v105 = vld [vmem:[#allocation8 + $0xe8] sm:$0xff]
    %v106 = vld [vmem:[#allocation8 + $0xf0] sm:$0xff]
    %v107 = vld [vmem:[#allocation8 + $0xf8] sm:$0xff]
    %v108 = vld [vmem:[#allocation8 + $0x100] sm:$0xff]
    %v109 = vld [vmem:[#allocation8 + $0x108] sm:$0xff]
    %v110 = vld [vmem:[#allocation8 + $0x110] sm:$0xff]
    %v111 = vld [vmem:[#allocation8 + $0x118] sm:$0xff]
    %v112 = vld [vmem:[#allocation8 + $0x120] sm:$0xff]
    %v113 = vld [vmem:[#allocation8 + $0x128] sm:$0xff]
    %v114 = vld [vmem:[#allocation8 + $0x130] sm:$0xff]
    %v115 = vld [vmem:[#allocation8 + $0x138] sm:$0xff]
    %v116 = vld [vmem:[#allocation8 + $0x140] sm:$0xff]
    %v117 = vld [vmem:[#allocation8 + $0x148] sm:$0xff]
    %v118 = vld [vmem:[#allocation8 + $0x150] sm:$0xff]
    %v119 = vld [vmem:[#allocation8 + $0x158] sm:$0xff]
    %v120 = vld [vmem:[#allocation8 + $0x160] sm:$0xff]
    %v121 = vld [vmem:[#allocation8 + $0x168] sm:$0xff]
    %v122 = vld [vmem:[#allocation8 + $0x170] sm:$0xff]
    %v123 = vld [vmem:[#allocation8 + $0x178] sm:$0xff]
    %v124 = vld [vmem:[#allocation8 + $0x180] sm:$0xff]
    %v125 = vld [vmem:[#allocation8 + $0x188] sm:$0xff]
    %v126 = vld [vmem:[#allocation8 + $0x190] sm:$0xff]
    %v127 = vld [vmem:[#allocation8 + $0x198] sm:$0xff]
    %v128 = vld [vmem:[#allocation8 + $0x1a0] sm:$0xff]
    %v129 = vld [vmem:[#allocation8 + $0x1a8] sm:$0xff]
    %v130 = vld [vmem:[#allocation8 + $0x1b0] sm:$0xff]
    %v131 = vld [vmem:[#allocation8 + $0x1b8] sm:$0xff]
    %v132 = vld [vmem:[#allocation8 + $0x1c0] sm:$0xff]
    %v133 = vld [vmem:[#allocation8 + $0x1c8] sm:$0xff]
    %v134 = vld [vmem:[#allocation8 + $0x1d0] sm:$0xff]
    %v135 = vld [vmem:[#allocation8 + $0x1d8] sm:$0xff]
    %v136 = vld [vmem:[#allocation8 + $0x1e0] sm:$0xff]
    %v137 = vld [vmem:[#allocation8 + $0x1e8] sm:$0xff]
    %v138 = vld [vmem:[#allocation8 + $0x1f0] sm:$0xff]
    %v139 = vld [vmem:[#allocation8 + $0x1f8] sm:$0xff]
    %v140 = vld [vmem:[#allocation8 + $0x200] sm:$0xff]
    %v141 = vld [vmem:[#allocation8 + $0x208] sm:$0xff]
    %v142 = vld [vmem:[#allocation8 + $0x210] sm:$0xff]
    %v143 = vld [vmem:[#allocation8 + $0x218] sm:$0xff]
    %v144 = vld [vmem:[#allocation8 + $0x220] sm:$0xff]
    %v145 = vld [vmem:[#allocation8 + $0x228] sm:$0xff]
    %v146 = vld [vmem:[#allocation8 + $0x230] sm:$0xff]
    %v147 = vld [vmem:[#allocation8 + $0x238] sm:$0xff]
    %v148 = vld [vmem:[#allocation8 + $0x240] sm:$0xff]
    %v149 = vld [vmem:[#allocation8 + $0x248] sm:$0xff]
    %v150 = vld [vmem:[#allocation8 + $0x250] sm:$0xff]
    %v151 = vld [vmem:[#allocation8 + $0x258] sm:$0xff]
    %v152 = vld [vmem:[#allocation8 + $0x260] sm:$0xff]
    %v153 = vld [vmem:[#allocation8 + $0x268] sm:$0xff]
    %v154 = vld [vmem:[#allocation8 + $0x270] sm:$0xff]
    %v155 = vld [vmem:[#allocation8 + $0x278] sm:$0xff]
    %v156 = vld [vmem:[#allocation8 + $0x280] sm:$0xff]
    %v157 = vld [vmem:[#allocation8 + $0x288] sm:$0xff]
    %v158 = vld [vmem:[#allocation8 + $0x290] sm:$0xff]
    %v159 = vld [vmem:[#allocation8 + $0x298] sm:$0xff]
    %v160 = vld [vmem:[#allocation8 + $0x2a0] sm:$0xff]
    %v161 = vld [vmem:[#allocation8 + $0x2a8] sm:$0xff]
    %v162 = vld [vmem:[#allocation8 + $0x2b0] sm:$0xff]
    %v163 = vld [vmem:[#allocation8 + $0x2b8] sm:$0xff]
    %v164 = vld [vmem:[#allocation8 + $0x2c0] sm:$0xff]
    %v165 = vld [vmem:[#allocation8 + $0x2c8] sm:$0xff]
    %v166 = vld [vmem:[#allocation8 + $0x2d0] sm:$0xff]
    %v167 = vld [vmem:[#allocation8 + $0x2d8] sm:$0xff]
    %v168 = vld [vmem:[#allocation8 + $0x2e0] sm:$0xff]
    %v169 = vld [vmem:[#allocation8 + $0x2e8] sm:$0xff]
    %v170 = vld [vmem:[#allocation8 + $0x2f0] sm:$0xff]
    %v171 = vld [vmem:[#allocation8 + $0x2f8] sm:$0xff]
    %v172 = vld [vmem:[#allocation8 + $0x300] sm:$0xff]
    %v173 = vld [vmem:[#allocation8 + $0x308] sm:$0xff]
    %v174 = vld [vmem:[#allocation8 + $0x310] sm:$0xff]
    %v175 = vld [vmem:[#allocation8 + $0x318] sm:$0xff]
    %v176 = vld [vmem:[#allocation8 + $0x320] sm:$0xff]
    %v177 = vld [vmem:[#allocation8 + $0x328] sm:$0xff]
    %v178 = vld [vmem:[#allocation8 + $0x330] sm:$0xff]
    %v179 = vld [vmem:[#allocation8 + $0x338] sm:$0xff]
    %v180 = vld [vmem:[#allocation8 + $0x340] sm:$0xff]
    %v181 = vld [vmem:[#allocation8 + $0x348] sm:$0xff]
    %v182 = vld [vmem:[#allocation8 + $0x350] sm:$0xff]
    %v183 = vld [vmem:[#allocation8 + $0x358] sm:$0xff]
    %v184 = vld [vmem:[#allocation8 + $0x360] sm:$0xff]
    %v185 = vld [vmem:[#allocation8 + $0x368] sm:$0xff]
    %v186 = vld [vmem:[#allocation8 + $0x370] sm:$0xff]
    %v187 = vld [vmem:[#allocation8 + $0x378] sm:$0xff]
    %v188 = vld [vmem:[#allocation8 + $0x380] sm:$0xff]
    %v189 = vld [vmem:[#allocation8 + $0x388] sm:$0xff]
    %v190 = vld [vmem:[#allocation8 + $0x390] sm:$0xff]
    %v191 = vld [vmem:[#allocation8 + $0x398] sm:$0xff]
    %v192 = vld [vmem:[#allocation8 + $0x3a0] sm:$0xff]
    %v193 = vld [vmem:[#allocation8 + $0x3a8] sm:$0xff]
    %v194 = vld [vmem:[#allocation8 + $0x3b0] sm:$0xff]
    %v195 = vld [vmem:[#allocation8 + $0x3b8] sm:$0xff]
    %v196 = vld [vmem:[#allocation8 + $0x3c0] sm:$0xff]
    %v197 = vld [vmem:[#allocation8 + $0x3c8] sm:$0xff]
    %v198 = vld [vmem:[#allocation8 + $0x3d0] sm:$0xff]
    %v199 = vld [vmem:[#allocation8 + $0x3d8] sm:$0xff]
    %v200 = vld [vmem:[#allocation8 + $0x3e0] sm:$0xff]
    %v201 = vld [vmem:[#allocation8 + $0x3e8] sm:$0xff]
    %v202 = vld [vmem:[#allocation8 + $0x3f0] sm:$0xff]
    %v203 = vld [vmem:[#allocation8 + $0x3f8] sm:$0xff]
    %v204 = vld [vmem:[%s4] sm:$0xf]
    %v206 = vperm.slane %v75, 0
    %v207 = vperm.slane %v75, 1
    %v211 = vperm.slane %v204, 0
    %v212 = vperm.slane %v204, 1
    %v213 = vperm.slane %v204, 2
    %v214 = vperm.slane %v204, 3
    %219 = vmatpush.msra.mxu0 %v136
    %220 = vmatpush.msra.mxu0 %v132
    %221 = vmatpush.msra.mxu0 %v128
    %222 = vmatpush.msra.mxu0 %v124
    %223 = vmatpush.msra.mxu0 %v120
    %224 = vmatpush.msra.mxu0 %v116
    %225 = vmatpush.msra.mxu0 %v112
    %226 = vmatpush.msra.mxu0 %v108
    %227 = vmatpush.msra.mxu0 %v104
    %228 = vmatpush.msra.mxu0 %v100
    %229 = vmatpush.msra.mxu0 %v96
    %230 = vmatpush.msra.mxu0 %v92
    %231 = vmatpush.msra.mxu0 %v88
    %232 = vmatpush.msra.mxu0 %v84
    %233 = vmatpush.msra.mxu0 %v80
    %234 = vmatpush.msra.mxu0 %v76
    %235 = vmatmul.f32.gmra.mxu0 %v206
    %v236 = vpop.f32.mrf.mxu0
    %v237 = vadd.f32 %v211, %v236
    %238 = vdwg.mxu0
    %239 = vmatpush.msra.mxu0 %v200
    %240 = vmatpush.msra.mxu0 %v196
    %241 = vmatpush.msra.mxu0 %v192
    %242 = vmatpush.msra.mxu0 %v188
    %243 = vmatpush.msra.mxu0 %v184
    %244 = vmatpush.msra.mxu0 %v180
    %245 = vmatpush.msra.mxu0 %v176
    %246 = vmatpush.msra.mxu0 %v172
    %247 = vmatpush.msra.mxu0 %v168
    %248 = vmatpush.msra.mxu0 %v164
    %249 = vmatpush.msra.mxu0 %v160
    %250 = vmatpush.msra.mxu0 %v156
    %251 = vmatpush.msra.mxu0 %v152
    %252 = vmatpush.msra.mxu0 %v148
    %253 = vmatpush.msra.mxu0 %v144
    %254 = vmatpush.msra.mxu0 %v140
    %255 = vmatmul.f32.gmra.mxu0 %v207
    %v256 = vpop.f32.mrf.mxu0
    %v257 = vadd.f32 %v237, %v256
    %258 = vdwg.mxu0
    %259 = vmatpush.msra.mxu0 %v137
    %260 = vmatpush.msra.mxu0 %v133
    %261 = vmatpush.msra.mxu0 %v129
    %262 = vmatpush.msra.mxu0 %v125
    %263 = vmatpush.msra.mxu0 %v121
    %264 = vmatpush.msra.mxu0 %v117
    %265 = vmatpush.msra.mxu0 %v113
    %266 = vmatpush.msra.mxu0 %v109
    %267 = vmatpush.msra.mxu0 %v105
    %268 = vmatpush.msra.mxu0 %v101
    %269 = vmatpush.msra.mxu0 %v97
    %270 = vmatpush.msra.mxu0 %v93
    %271 = vmatpush.msra.mxu0 %v89
    %272 = vmatpush.msra.mxu0 %v85
    %273 = vmatpush.msra.mxu0 %v81
    %274 = vmatpush.msra.mxu0 %v77
    %275 = vmatmul.f32.gmra.mxu0 %v206
    %v276 = vpop.f32.mrf.mxu0
    %v277 = vadd.f32 %v212, %v276
    %278 = vdwg.mxu0
    %279 = vmatpush.msra.mxu0 %v201
    %280 = vmatpush.msra.mxu0 %v197
    %281 = vmatpush.msra.mxu0 %v193
    %282 = vmatpush.msra.mxu0 %v189
    %283 = vmatpush.msra.mxu0 %v185
    %284 = vmatpush.msra.mxu0 %v181
    %285 = vmatpush.msra.mxu0 %v177
    %286 = vmatpush.msra.mxu0 %v173
    %287 = vmatpush.msra.mxu0 %v169
    %288 = vmatpush.msra.mxu0 %v165
    %289 = vmatpush.msra.mxu0 %v161
    %290 = vmatpush.msra.mxu0 %v157
    %291 = vmatpush.msra.mxu0 %v153
    %292 = vmatpush.msra.mxu0 %v149
    %293 = vmatpush.msra.mxu0 %v145
    %294 = vmatpush.msra.mxu0 %v141
    %295 = vmatmul.f32.gmra.mxu0 %v207
    %v296 = vpop.f32.mrf.mxu0
    %v297 = vadd.f32 %v277, %v296
    %298 = vdwg.mxu0
    %299 = vmatpush.msra.mxu0 %v138
    %300 = vmatpush.msra.mxu0 %v134
    %301 = vmatpush.msra.mxu0 %v130
    %302 = vmatpush.msra.mxu0 %v126
    %303 = vmatpush.msra.mxu0 %v122
    %304 = vmatpush.msra.mxu0 %v118
    %305 = vmatpush.msra.mxu0 %v114
    %306 = vmatpush.msra.mxu0 %v110
    %307 = vmatpush.msra.mxu0 %v106
    %308 = vmatpush.msra.mxu0 %v102
    %309 = vmatpush.msra.mxu0 %v98
    %310 = vmatpush.msra.mxu0 %v94
    %311 = vmatpush.msra.mxu0 %v90
    %312 = vmatpush.msra.mxu0 %v86
    %313 = vmatpush.msra.mxu0 %v82
    %314 = vmatpush.msra.mxu0 %v78
    %315 = vmatmul.f32.gmra.mxu0 %v206
    %v316 = vpop.f32.mrf.mxu0
    %v317 = vadd.f32 %v213, %v316
    %318 = vdwg.mxu0
    %319 = vmatpush.msra.mxu0 %v202
    %320 = vmatpush.msra.mxu0 %v198
    %321 = vmatpush.msra.mxu0 %v194
    %322 = vmatpush.msra.mxu0 %v190
    %323 = vmatpush.msra.mxu0 %v186
    %324 = vmatpush.msra.mxu0 %v182
    %325 = vmatpush.msra.mxu0 %v178
    %326 = vmatpush.msra.mxu0 %v174
    %327 = vmatpush.msra.mxu0 %v170
    %328 = vmatpush.msra.mxu0 %v166
    %329 = vmatpush.msra.mxu0 %v162
    %330 = vmatpush.msra.mxu0 %v158
    %331 = vmatpush.msra.mxu0 %v154
    %332 = vmatpush.msra.mxu0 %v150
    %333 = vmatpush.msra.mxu0 %v146
    %334 = vmatpush.msra.mxu0 %v142
    %335 = vmatmul.f32.gmra.mxu0 %v207
    %v336 = vpop.f32.mrf.mxu0
    %v337 = vadd.f32 %v317, %v336
    %338 = vdwg.mxu0
    %339 = vmatpush.msra.mxu0 %v139
    %340 = vmatpush.msra.mxu0 %v135
    %341 = vmatpush.msra.mxu0 %v131
    %342 = vmatpush.msra.mxu0 %v127
    %343 = vmatpush.msra.mxu0 %v123
    %344 = vmatpush.msra.mxu0 %v119
    %345 = vmatpush.msra.mxu0 %v115
    %346 = vmatpush.msra.mxu0 %v111
    %347 = vmatpush.msra.mxu0 %v107
    %348 = vmatpush.msra.mxu0 %v103
    %349 = vmatpush.msra.mxu0 %v99
    %350 = vmatpush.msra.mxu0 %v95
    %351 = vmatpush.msra.mxu0 %v91
    %352 = vmatpush.msra.mxu0 %v87
    %353 = vmatpush.msra.mxu0 %v83
    %354 = vmatpush.msra.mxu0 %v79
    %355 = vmatmul.f32.gmra.mxu0 %v206
    %v356 = vpop.f32.mrf.mxu0
    %v357 = vadd.f32 %v214, %v356
    %358 = vdwg.mxu0
    %359 = vmatpush.msra.mxu0 %v203
    %360 = vmatpush.msra.mxu0 %v199
    %361 = vmatpush.msra.mxu0 %v195
    %362 = vmatpush.msra.mxu0 %v191
    %363 = vmatpush.msra.mxu0 %v187
    %364 = vmatpush.msra.mxu0 %v183
    %365 = vmatpush.msra.mxu0 %v179
    %366 = vmatpush.msra.mxu0 %v175
    %367 = vmatpush.msra.mxu0 %v171
    %368 = vmatpush.msra.mxu0 %v167
    %369 = vmatpush.msra.mxu0 %v163
    %370 = vmatpush.msra.mxu0 %v159
    %371 = vmatpush.msra.mxu0 %v155
    %372 = vmatpush.msra.mxu0 %v151
    %373 = vmatpush.msra.mxu0 %v147
    %374 = vmatpush.msra.mxu0 %v143
    %375 = vmatmul.f32.gmra.mxu0 %v207
    %v376 = vpop.f32.mrf.mxu0
    %v377 = vadd.f32 %v357, %v376
    %378 = vdwg.mxu0
    %v379 = vxor.u32 %v257, 2147483648
    %v380 = vmul.f32 %v379, 1.442695
    %v381 = vpow.pop %v380
    %v382 = vadd.f32 %v381, 1.0
    %v383 = vrcp.pop %v382
    %v384 = vmul.f32 %v382, %v383
    %v385 = vsub.f32 1.0, %v384
    %v386 = vmul.f32 %v383, %v385
    %v387 = vadd.f32 %v383, %v386
    %vm388 = vweird.f32 %v382
    %vm389 = vweird.f32 %v383
    %vm390 = vmor %vm388, %vm389
    %v391 = vsel %vm390, %v383, %v387
    %v392 = vand.u32 2147483647, %v382
    %vm393 = vcmp.eq.f32.partialorder %v392, 8.507059e+37
    %v394 = vand.u32 %v382, 2147483648
    %v395 = vor.u32 1.1754944e-38, %v394
    %v396 = vsel %vm393, %v395, %v391
    %v397 = vmul.f32 1.0, %v396
    %v398 = vxor.u32 %v297, 2147483648
    %v399 = vmul.f32 %v398, 1.442695
    %v400 = vpow.pop %v399
    %v401 = vadd.f32 %v400, 1.0
    %v402 = vrcp.pop %v401
    %v403 = vmul.f32 %v401, %v402
    %v404 = vsub.f32 1.0, %v403
    %v405 = vmul.f32 %v402, %v404
    %v406 = vadd.f32 %v402, %v405
    %vm407 = vweird.f32 %v401
    %vm408 = vweird.f32 %v402
    %vm409 = vmor %vm407, %vm408
    %v410 = vsel %vm409, %v402, %v406
    %v411 = vand.u32 2147483647, %v401
    %vm412 = vcmp.eq.f32.partialorder %v411, 8.507059e+37
    %v413 = vand.u32 %v401, 2147483648
    %v414 = vor.u32 1.1754944e-38, %v413
    %v415 = vsel %vm412, %v414, %v410
    %v416 = vmul.f32 1.0, %v415
    %v417 = vmul.f32 %v397, %v377
    %v418 = vadd.f32 %v337, %v417
    %v419 = vtanh.pop %v418
    %v420 = vsub.f32 1.0, %v416
    %v421 = vmul.f32 %v420, %v419
    %v422 = vmul.f32 %v416, %v64
    %v423 = vadd.f32 %v421, %v422
    %s424 = sadd.s32 %s65, 1
    %s425 = sld [smem:[#allocation5 + %s424]]
    %s426 = scalar_lea.vmem [#allocation6], %s425
    %v427 = vld [vmem:[%s426] sm:$0x1]
    %428 = vst.msk [vmem:[#allocation3] sm:$0x1] %vm72, %v427
    %429 = vst.msk [vmem:[#allocation3 + $0x1] sm:$0x1] %vm72, %v423
    %v430 = vld [vmem:[#allocation3] sm:$0x3]
    %v431 = vld [vmem:[#allocation8] sm:$0xff]
    %v432 = vld [vmem:[#allocation8 + $0x8] sm:$0xff]
    %v433 = vld [vmem:[#allocation8 + $0x10] sm:$0xff]
    %v434 = vld [vmem:[#allocation8 + $0x18] sm:$0xff]
    %v435 = vld [vmem:[#allocation8 + $0x20] sm:$0xff]
    %v436 = vld [vmem:[#allocation8 + $0x28] sm:$0xff]
    %v437 = vld [vmem:[#allocation8 + $0x30] sm:$0xff]
    %v438 = vld [vmem:[#allocation8 + $0x38] sm:$0xff]
    %v439 = vld [vmem:[#allocation8 + $0x40] sm:$0xff]
    %v440 = vld [vmem:[#allocation8 + $0x48] sm:$0xff]
    %v441 = vld [vmem:[#allocation8 + $0x50] sm:$0xff]
    %v442 = vld [vmem:[#allocation8 + $0x58] sm:$0xff]
    %v443 = vld [vmem:[#allocation8 + $0x60] sm:$0xff]
    %v444 = vld [vmem:[#allocation8 + $0x68] sm:$0xff]
    %v445 = vld [vmem:[#allocation8 + $0x70] sm:$0xff]
    %v446 = vld [vmem:[#allocation8 + $0x78] sm:$0xff]
    %v447 = vld [vmem:[#allocation8 + $0x80] sm:$0xff]
    %v448 = vld [vmem:[#allocation8 + $0x88] sm:$0xff]
    %v449 = vld [vmem:[#allocation8 + $0x90] sm:$0xff]
    %v450 = vld [vmem:[#allocation8 + $0x98] sm:$0xff]
    %v451 = vld [vmem:[#allocation8 + $0xa0] sm:$0xff]
    %v452 = vld [vmem:[#allocation8 + $0xa8] sm:$0xff]
    %v453 = vld [vmem:[#allocation8 + $0xb0] sm:$0xff]
    %v454 = vld [vmem:[#allocation8 + $0xb8] sm:$0xff]
    %v455 = vld [vmem:[#allocation8 + $0xc0] sm:$0xff]
    %v456 = vld [vmem:[#allocation8 + $0xc8] sm:$0xff]
    %v457 = vld [vmem:[#allocation8 + $0xd0] sm:$0xff]
    %v458 = vld [vmem:[#allocation8 + $0xd8] sm:$0xff]
    %v459 = vld [vmem:[#allocation8 + $0xe0] sm:$0xff]
    %v460 = vld [vmem:[#allocation8 + $0xe8] sm:$0xff]
    %v461 = vld [vmem:[#allocation8 + $0xf0] sm:$0xff]
    %v462 = vld [vmem:[#allocation8 + $0xf8] sm:$0xff]
    %v463 = vld [vmem:[#allocation8 + $0x100] sm:$0xff]
    %v464 = vld [vmem:[#allocation8 + $0x108] sm:$0xff]
    %v465 = vld [vmem:[#allocation8 + $0x110] sm:$0xff]
    %v466 = vld [vmem:[#allocation8 + $0x118] sm:$0xff]
    %v467 = vld [vmem:[#allocation8 + $0x120] sm:$0xff]
    %v468 = vld [vmem:[#allocation8 + $0x128] sm:$0xff]
    %v469 = vld [vmem:[#allocation8 + $0x130] sm:$0xff]
    %v470 = vld [vmem:[#allocation8 + $0x138] sm:$0xff]
    %v471 = vld [vmem:[#allocation8 + $0x140] sm:$0xff]
    %v472 = vld [vmem:[#allocation8 + $0x148] sm:$0xff]
    %v473 = vld [vmem:[#allocation8 + $0x150] sm:$0xff]
    %v474 = vld [vmem:[#allocation8 + $0x158] sm:$0xff]
    %v475 = vld [vmem:[#allocation8 + $0x160] sm:$0xff]
    %v476 = vld [vmem:[#allocation8 + $0x168] sm:$0xff]
    %v477 = vld [vmem:[#allocation8 + $0x170] sm:$0xff]
    %v478 = vld [vmem:[#allocation8 + $0x178] sm:$0xff]
    %v479 = vld [vmem:[#allocation8 + $0x180] sm:$0xff]
    %v480 = vld [vmem:[#allocation8 + $0x188] sm:$0xff]
    %v481 = vld [vmem:[#allocation8 + $0x190] sm:$0xff]
    %v482 = vld [vmem:[#allocation8 + $0x198] sm:$0xff]
    %v483 = vld [vmem:[#allocation8 + $0x1a0] sm:$0xff]
    %v484 = vld [vmem:[#allocation8 + $0x1a8] sm:$0xff]
    %v485 = vld [vmem:[#allocation8 + $0x1b0] sm:$0xff]
    %v486 = vld [vmem:[#allocation8 + $0x1b8] sm:$0xff]
    %v487 = vld [vmem:[#allocation8 + $0x1c0] sm:$0xff]
    %v488 = vld [vmem:[#allocation8 + $0x1c8] sm:$0xff]
    %v489 = vld [vmem:[#allocation8 + $0x1d0] sm:$0xff]
    %v490 = vld [vmem:[#allocation8 + $0x1d8] sm:$0xff]
    %v491 = vld [vmem:[#allocation8 + $0x1e0] sm:$0xff]
    %v492 = vld [vmem:[#allocation8 + $0x1e8] sm:$0xff]
    %v493 = vld [vmem:[#allocation8 + $0x1f0] sm:$0xff]
    %v494 = vld [vmem:[#allocation8 + $0x1f8] sm:$0xff]
    %v495 = vld [vmem:[#allocation8 + $0x200] sm:$0xff]
    %v496 = vld [vmem:[#allocation8 + $0x208] sm:$0xff]
    %v497 = vld [vmem:[#allocation8 + $0x210] sm:$0xff]
    %v498 = vld [vmem:[#allocation8 + $0x218] sm:$0xff]
    %v499 = vld [vmem:[#allocation8 + $0x220] sm:$0xff]
    %v500 = vld [vmem:[#allocation8 + $0x228] sm:$0xff]
    %v501 = vld [vmem:[#allocation8 + $0x230] sm:$0xff]
    %v502 = vld [vmem:[#allocation8 + $0x238] sm:$0xff]
    %v503 = vld [vmem:[#allocation8 + $0x240] sm:$0xff]
    %v504 = vld [vmem:[#allocation8 + $0x248] sm:$0xff]
    %v505 = vld [vmem:[#allocation8 + $0x250] sm:$0xff]
    %v506 = vld [vmem:[#allocation8 + $0x258] sm:$0xff]
    %v507 = vld [vmem:[#allocation8 + $0x260] sm:$0xff]
    %v508 = vld [vmem:[#allocation8 + $0x268] sm:$0xff]
    %v509 = vld [vmem:[#allocation8 + $0x270] sm:$0xff]
    %v510 = vld [vmem:[#allocation8 + $0x278] sm:$0xff]
    %v511 = vld [vmem:[#allocation8 + $0x280] sm:$0xff]
    %v512 = vld [vmem:[#allocation8 + $0x288] sm:$0xff]
    %v513 = vld [vmem:[#allocation8 + $0x290] sm:$0xff]
    %v514 = vld [vmem:[#allocation8 + $0x298] sm:$0xff]
    %v515 = vld [vmem:[#allocation8 + $0x2a0] sm:$0xff]
    %v516 = vld [vmem:[#allocation8 + $0x2a8] sm:$0xff]
    %v517 = vld [vmem:[#allocation8 + $0x2b0] sm:$0xff]
    %v518 = vld [vmem:[#allocation8 + $0x2b8] sm:$0xff]
    %v519 = vld [vmem:[#allocation8 + $0x2c0] sm:$0xff]
    %v520 = vld [vmem:[#allocation8 + $0x2c8] sm:$0xff]
    %v521 = vld [vmem:[#allocation8 + $0x2d0] sm:$0xff]
    %v522 = vld [vmem:[#allocation8 + $0x2d8] sm:$0xff]
    %v523 = vld [vmem:[#allocation8 + $0x2e0] sm:$0xff]
    %v524 = vld [vmem:[#allocation8 + $0x2e8] sm:$0xff]
    %v525 = vld [vmem:[#allocation8 + $0x2f0] sm:$0xff]
    %v526 = vld [vmem:[#allocation8 + $0x2f8] sm:$0xff]
    %v527 = vld [vmem:[#allocation8 + $0x300] sm:$0xff]
    %v528 = vld [vmem:[#allocation8 + $0x308] sm:$0xff]
    %v529 = vld [vmem:[#allocation8 + $0x310] sm:$0xff]
    %v530 = vld [vmem:[#allocation8 + $0x318] sm:$0xff]
    %v531 = vld [vmem:[#allocation8 + $0x320] sm:$0xff]
    %v532 = vld [vmem:[#allocation8 + $0x328] sm:$0xff]
    %v533 = vld [vmem:[#allocation8 + $0x330] sm:$0xff]
    %v534 = vld [vmem:[#allocation8 + $0x338] sm:$0xff]
    %v535 = vld [vmem:[#allocation8 + $0x340] sm:$0xff]
    %v536 = vld [vmem:[#allocation8 + $0x348] sm:$0xff]
    %v537 = vld [vmem:[#allocation8 + $0x350] sm:$0xff]
    %v538 = vld [vmem:[#allocation8 + $0x358] sm:$0xff]
    %v539 = vld [vmem:[#allocation8 + $0x360] sm:$0xff]
    %v540 = vld [vmem:[#allocation8 + $0x368] sm:$0xff]
    %v541 = vld [vmem:[#allocation8 + $0x370] sm:$0xff]
    %v542 = vld [vmem:[#allocation8 + $0x378] sm:$0xff]
    %v543 = vld [vmem:[#allocation8 + $0x380] sm:$0xff]
    %v544 = vld [vmem:[#allocation8 + $0x388] sm:$0xff]
    %v545 = vld [vmem:[#allocation8 + $0x390] sm:$0xff]
    %v546 = vld [vmem:[#allocation8 + $0x398] sm:$0xff]
    %v547 = vld [vmem:[#allocation8 + $0x3a0] sm:$0xff]
    %v548 = vld [vmem:[#allocation8 + $0x3a8] sm:$0xff]
    %v549 = vld [vmem:[#allocation8 + $0x3b0] sm:$0xff]
    %v550 = vld [vmem:[#allocation8 + $0x3b8] sm:$0xff]
    %v551 = vld [vmem:[#allocation8 + $0x3c0] sm:$0xff]
    %v552 = vld [vmem:[#allocation8 + $0x3c8] sm:$0xff]
    %v553 = vld [vmem:[#allocation8 + $0x3d0] sm:$0xff]
    %v554 = vld [vmem:[#allocation8 + $0x3d8] sm:$0xff]
    %v555 = vld [vmem:[#allocation8 + $0x3e0] sm:$0xff]
    %v556 = vld [vmem:[#allocation8 + $0x3e8] sm:$0xff]
    %v557 = vld [vmem:[#allocation8 + $0x3f0] sm:$0xff]
    %v558 = vld [vmem:[#allocation8 + $0x3f8] sm:$0xff]
    %v559 = vld [vmem:[%s4] sm:$0xf]
    %v561 = vperm.slane %v430, 0
    %v562 = vperm.slane %v430, 1
    %v566 = vperm.slane %v559, 0
    %v567 = vperm.slane %v559, 1
    %v568 = vperm.slane %v559, 2
    %v569 = vperm.slane %v559, 3
    %574 = vmatpush.msra.mxu0 %v491
    %575 = vmatpush.msra.mxu0 %v487
    %576 = vmatpush.msra.mxu0 %v483
    %577 = vmatpush.msra.mxu0 %v479
    %578 = vmatpush.msra.mxu0 %v475
    %579 = vmatpush.msra.mxu0 %v471
    %580 = vmatpush.msra.mxu0 %v467
    %581 = vmatpush.msra.mxu0 %v463
    %582 = vmatpush.msra.mxu0 %v459
    %583 = vmatpush.msra.mxu0 %v455
    %584 = vmatpush.msra.mxu0 %v451
    %585 = vmatpush.msra.mxu0 %v447
    %586 = vmatpush.msra.mxu0 %v443
    %587 = vmatpush.msra.mxu0 %v439
    %588 = vmatpush.msra.mxu0 %v435
    %589 = vmatpush.msra.mxu0 %v431
    %590 = vmatmul.f32.gmra.mxu0 %v561
    %v591 = vpop.f32.mrf.mxu0
    %v592 = vadd.f32 %v566, %v591
    %593 = vdwg.mxu0
    %594 = vmatpush.msra.mxu0 %v555
    %595 = vmatpush.msra.mxu0 %v551
    %596 = vmatpush.msra.mxu0 %v547
    %597 = vmatpush.msra.mxu0 %v543
    %598 = vmatpush.msra.mxu0 %v539
    %599 = vmatpush.msra.mxu0 %v535
    %600 = vmatpush.msra.mxu0 %v531
    %601 = vmatpush.msra.mxu0 %v527
    %602 = vmatpush.msra.mxu0 %v523
    %603 = vmatpush.msra.mxu0 %v519
    %604 = vmatpush.msra.mxu0 %v515
    %605 = vmatpush.msra.mxu0 %v511
    %606 = vmatpush.msra.mxu0 %v507
    %607 = vmatpush.msra.mxu0 %v503
    %608 = vmatpush.msra.mxu0 %v499
    %609 = vmatpush.msra.mxu0 %v495
    %610 = vmatmul.f32.gmra.mxu0 %v562
    %v611 = vpop.f32.mrf.mxu0
    %v612 = vadd.f32 %v592, %v611
    %613 = vdwg.mxu0
    %614 = vmatpush.msra.mxu0 %v492
    %615 = vmatpush.msra.mxu0 %v488
    %616 = vmatpush.msra.mxu0 %v484
    %617 = vmatpush.msra.mxu0 %v480
    %618 = vmatpush.msra.mxu0 %v476
    %619 = vmatpush.msra.mxu0 %v472
    %620 = vmatpush.msra.mxu0 %v468
    %621 = vmatpush.msra.mxu0 %v464
    %622 = vmatpush.msra.mxu0 %v460
    %623 = vmatpush.msra.mxu0 %v456
    %624 = vmatpush.msra.mxu0 %v452
    %625 = vmatpush.msra.mxu0 %v448
    %626 = vmatpush.msra.mxu0 %v444
    %627 = vmatpush.msra.mxu0 %v440
    %628 = vmatpush.msra.mxu0 %v436
    %629 = vmatpush.msra.mxu0 %v432
    %630 = vmatmul.f32.gmra.mxu0 %v561
    %v631 = vpop.f32.mrf.mxu0
    %v632 = vadd.f32 %v567, %v631
    %633 = vdwg.mxu0
    %634 = vmatpush.msra.mxu0 %v556
    %635 = vmatpush.msra.mxu0 %v552
    %636 = vmatpush.msra.mxu0 %v548
    %637 = vmatpush.msra.mxu0 %v544
    %638 = vmatpush.msra.mxu0 %v540
    %639 = vmatpush.msra.mxu0 %v536
    %640 = vmatpush.msra.mxu0 %v532
    %641 = vmatpush.msra.mxu0 %v528
    %642 = vmatpush.msra.mxu0 %v524
    %643 = vmatpush.msra.mxu0 %v520
    %644 = vmatpush.msra.mxu0 %v516
    %645 = vmatpush.msra.mxu0 %v512
    %646 = vmatpush.msra.mxu0 %v508
    %647 = vmatpush.msra.mxu0 %v504
    %648 = vmatpush.msra.mxu0 %v500
    %649 = vmatpush.msra.mxu0 %v496
    %650 = vmatmul.f32.gmra.mxu0 %v562
    %v651 = vpop.f32.mrf.mxu0
    %v652 = vadd.f32 %v632, %v651
    %653 = vdwg.mxu0
    %654 = vmatpush.msra.mxu0 %v493
    %655 = vmatpush.msra.mxu0 %v489
    %656 = vmatpush.msra.mxu0 %v485
    %657 = vmatpush.msra.mxu0 %v481
    %658 = vmatpush.msra.mxu0 %v477
    %659 = vmatpush.msra.mxu0 %v473
    %660 = vmatpush.msra.mxu0 %v469
    %661 = vmatpush.msra.mxu0 %v465
    %662 = vmatpush.msra.mxu0 %v461
    %663 = vmatpush.msra.mxu0 %v457
    %664 = vmatpush.msra.mxu0 %v453
    %665 = vmatpush.msra.mxu0 %v449
    %666 = vmatpush.msra.mxu0 %v445
    %667 = vmatpush.msra.mxu0 %v441
    %668 = vmatpush.msra.mxu0 %v437
    %669 = vmatpush.msra.mxu0 %v433
    %670 = vmatmul.f32.gmra.mxu0 %v561
    %v671 = vpop.f32.mrf.mxu0
    %v672 = vadd.f32 %v568, %v671
    %673 = vdwg.mxu0
    %674 = vmatpush.msra.mxu0 %v557
    %675 = vmatpush.msra.mxu0 %v553
    %676 = vmatpush.msra.mxu0 %v549
    %677 = vmatpush.msra.mxu0 %v545
    %678 = vmatpush.msra.mxu0 %v541
    %679 = vmatpush.msra.mxu0 %v537
    %680 = vmatpush.msra.mxu0 %v533
    %681 = vmatpush.msra.mxu0 %v529
    %682 = vmatpush.msra.mxu0 %v525
    %683 = vmatpush.msra.mxu0 %v521
    %684 = vmatpush.msra.mxu0 %v517
    %685 = vmatpush.msra.mxu0 %v513
    %686 = vmatpush.msra.mxu0 %v509
    %687 = vmatpush.msra.mxu0 %v505
    %688 = vmatpush.msra.mxu0 %v501
    %689 = vmatpush.msra.mxu0 %v497
    %690 = vmatmul.f32.gmra.mxu0 %v562
    %v691 = vpop.f32.mrf.mxu0
    %v692 = vadd.f32 %v672, %v691
    %693 = vdwg.mxu0
    %694 = vmatpush.msra.mxu0 %v494
    %695 = vmatpush.msra.mxu0 %v490
    %696 = vmatpush.msra.mxu0 %v486
    %697 = vmatpush.msra.mxu0 %v482
    %698 = vmatpush.msra.mxu0 %v478
    %699 = vmatpush.msra.mxu0 %v474
    %700 = vmatpush.msra.mxu0 %v470
    %701 = vmatpush.msra.mxu0 %v466
    %702 = vmatpush.msra.mxu0 %v462
    %703 = vmatpush.msra.mxu0 %v458
    %704 = vmatpush.msra.mxu0 %v454
    %705 = vmatpush.msra.mxu0 %v450
    %706 = vmatpush.msra.mxu0 %v446
    %707 = vmatpush.msra.mxu0 %v442
    %708 = vmatpush.msra.mxu0 %v438
    %709 = vmatpush.msra.mxu0 %v434
    %710 = vmatmul.f32.gmra.mxu0 %v561
    %v711 = vpop.f32.mrf.mxu0
    %v712 = vadd.f32 %v569, %v711
    %713 = vdwg.mxu0
    %714 = vmatpush.msra.mxu0 %v558
    %715 = vmatpush.msra.mxu0 %v554
    %716 = vmatpush.msra.mxu0 %v550
    %717 = vmatpush.msra.mxu0 %v546
    %718 = vmatpush.msra.mxu0 %v542
    %719 = vmatpush.msra.mxu0 %v538
    %720 = vmatpush.msra.mxu0 %v534
    %721 = vmatpush.msra.mxu0 %v530
    %722 = vmatpush.msra.mxu0 %v526
    %723 = vmatpush.msra.mxu0 %v522
    %724 = vmatpush.msra.mxu0 %v518
    %725 = vmatpush.msra.mxu0 %v514
    %726 = vmatpush.msra.mxu0 %v510
    %727 = vmatpush.msra.mxu0 %v506
    %728 = vmatpush.msra.mxu0 %v502
    %729 = vmatpush.msra.mxu0 %v498
    %730 = vmatmul.f32.gmra.mxu0 %v562
    %v731 = vpop.f32.mrf.mxu0
    %v732 = vadd.f32 %v712, %v731
    %733 = vdwg.mxu0
    %v734 = vxor.u32 %v612, 2147483648
    %v735 = vmul.f32 %v734, 1.442695
    %v736 = vpow.pop %v735
    %v737 = vadd.f32 %v736, 1.0
    %v738 = vrcp.pop %v737
    %v739 = vmul.f32 %v737, %v738
    %v740 = vsub.f32 1.0, %v739
    %v741 = vmul.f32 %v738, %v740
    %v742 = vadd.f32 %v738, %v741
    %vm743 = vweird.f32 %v737
    %vm744 = vweird.f32 %v738
    %vm745 = vmor %vm743, %vm744
    %v746 = vsel %vm745, %v738, %v742
    %v747 = vand.u32 2147483647, %v737
    %vm748 = vcmp.eq.f32.partialorder %v747, 8.507059e+37
    %v749 = vand.u32 %v737, 2147483648
    %v750 = vor.u32 1.1754944e-38, %v749
    %v751 = vsel %vm748, %v750, %v746
    %v752 = vmul.f32 1.0, %v751
    %v753 = vxor.u32 %v652, 2147483648
    %v754 = vmul.f32 %v753, 1.442695
    %v755 = vpow.pop %v754
    %v756 = vadd.f32 %v755, 1.0
    %v757 = vrcp.pop %v756
    %v758 = vmul.f32 %v756, %v757
    %v759 = vsub.f32 1.0, %v758
    %v760 = vmul.f32 %v757, %v759
    %v761 = vadd.f32 %v757, %v760
    %vm762 = vweird.f32 %v756
    %vm763 = vweird.f32 %v757
    %vm764 = vmor %vm762, %vm763
    %v765 = vsel %vm764, %v757, %v761
    %v766 = vand.u32 2147483647, %v756
    %vm767 = vcmp.eq.f32.partialorder %v766, 8.507059e+37
    %v768 = vand.u32 %v756, 2147483648
    %v769 = vor.u32 1.1754944e-38, %v768
    %v770 = vsel %vm767, %v769, %v765
    %v771 = vmul.f32 1.0, %v770
    %v772 = vmul.f32 %v752, %v732
    %v773 = vadd.f32 %v692, %v772
    %v774 = vtanh.pop %v773
    %v775 = vsub.f32 1.0, %v771
    %v776 = vmul.f32 %v775, %v774
    %v777 = vmul.f32 %v771, %v423
    %v778 = vadd.f32 %v776, %v777
    %s779 = sadd.s32 %s65, 2
    %s780 = sld [smem:[#allocation5 + %s779]]
    %s781 = scalar_lea.vmem [#allocation6], %s780
    %v782 = vld [vmem:[%s781] sm:$0x1]
    %783 = vst.msk [vmem:[#allocation3] sm:$0x1] %vm72, %v782
    %784 = vst.msk [vmem:[#allocation3 + $0x1] sm:$0x1] %vm72, %v778
    %v785 = vld [vmem:[#allocation3] sm:$0x3]
    %v786 = vld [vmem:[#allocation8] sm:$0xff]
    %v787 = vld [vmem:[#allocation8 + $0x8] sm:$0xff]
    %v788 = vld [vmem:[#allocation8 + $0x10] sm:$0xff]
    %v789 = vld [vmem:[#allocation8 + $0x18] sm:$0xff]
    %v790 = vld [vmem:[#allocation8 + $0x20] sm:$0xff]
    %v791 = vld [vmem:[#allocation8 + $0x28] sm:$0xff]
    %v792 = vld [vmem:[#allocation8 + $0x30] sm:$0xff]
    %v793 = vld [vmem:[#allocation8 + $0x38] sm:$0xff]
    %v794 = vld [vmem:[#allocation8 + $0x40] sm:$0xff]
    %v795 = vld [vmem:[#allocation8 + $0x48] sm:$0xff]
    %v796 = vld [vmem:[#allocation8 + $0x50] sm:$0xff]
    %v797 = vld [vmem:[#allocation8 + $0x58] sm:$0xff]
    %v798 = vld [vmem:[#allocation8 + $0x60] sm:$0xff]
    %v799 = vld [vmem:[#allocation8 + $0x68] sm:$0xff]
    %v800 = vld [vmem:[#allocation8 + $0x70] sm:$0xff]
    %v801 = vld [vmem:[#allocation8 + $0x78] sm:$0xff]
    %v802 = vld [vmem:[#allocation8 + $0x80] sm:$0xff]
    %v803 = vld [vmem:[#allocation8 + $0x88] sm:$0xff]
    %v804 = vld [vmem:[#allocation8 + $0x90] sm:$0xff]
    %v805 = vld [vmem:[#allocation8 + $0x98] sm:$0xff]
    %v806 = vld [vmem:[#allocation8 + $0xa0] sm:$0xff]
    %v807 = vld [vmem:[#allocation8 + $0xa8] sm:$0xff]
    %v808 = vld [vmem:[#allocation8 + $0xb0] sm:$0xff]
    %v809 = vld [vmem:[#allocation8 + $0xb8] sm:$0xff]
    %v810 = vld [vmem:[#allocation8 + $0xc0] sm:$0xff]
    %v811 = vld [vmem:[#allocation8 + $0xc8] sm:$0xff]
    %v812 = vld [vmem:[#allocation8 + $0xd0] sm:$0xff]
    %v813 = vld [vmem:[#allocation8 + $0xd8] sm:$0xff]
    %v814 = vld [vmem:[#allocation8 + $0xe0] sm:$0xff]
    %v815 = vld [vmem:[#allocation8 + $0xe8] sm:$0xff]
    %v816 = vld [vmem:[#allocation8 + $0xf0] sm:$0xff]
    %v817 = vld [vmem:[#allocation8 + $0xf8] sm:$0xff]
    %v818 = vld [vmem:[#allocation8 + $0x100] sm:$0xff]
    %v819 = vld [vmem:[#allocation8 + $0x108] sm:$0xff]
    %v820 = vld [vmem:[#allocation8 + $0x110] sm:$0xff]
    %v821 = vld [vmem:[#allocation8 + $0x118] sm:$0xff]
    %v822 = vld [vmem:[#allocation8 + $0x120] sm:$0xff]
    %v823 = vld [vmem:[#allocation8 + $0x128] sm:$0xff]
    %v824 = vld [vmem:[#allocation8 + $0x130] sm:$0xff]
    %v825 = vld [vmem:[#allocation8 + $0x138] sm:$0xff]
    %v826 = vld [vmem:[#allocation8 + $0x140] sm:$0xff]
    %v827 = vld [vmem:[#allocation8 + $0x148] sm:$0xff]
    %v828 = vld [vmem:[#allocation8 + $0x150] sm:$0xff]
    %v829 = vld [vmem:[#allocation8 + $0x158] sm:$0xff]
    %v830 = vld [vmem:[#allocation8 + $0x160] sm:$0xff]
    %v831 = vld [vmem:[#allocation8 + $0x168] sm:$0xff]
    %v832 = vld [vmem:[#allocation8 + $0x170] sm:$0xff]
    %v833 = vld [vmem:[#allocation8 + $0x178] sm:$0xff]
    %v834 = vld [vmem:[#allocation8 + $0x180] sm:$0xff]
    %v835 = vld [vmem:[#allocation8 + $0x188] sm:$0xff]
    %v836 = vld [vmem:[#allocation8 + $0x190] sm:$0xff]
    %v837 = vld [vmem:[#allocation8 + $0x198] sm:$0xff]
    %v838 = vld [vmem:[#allocation8 + $0x1a0] sm:$0xff]
    %v839 = vld [vmem:[#allocation8 + $0x1a8] sm:$0xff]
    %v840 = vld [vmem:[#allocation8 + $0x1b0] sm:$0xff]
    %v841 = vld [vmem:[#allocation8 + $0x1b8] sm:$0xff]
    %v842 = vld [vmem:[#allocation8 + $0x1c0] sm:$0xff]
    %v843 = vld [vmem:[#allocation8 + $0x1c8] sm:$0xff]
    %v844 = vld [vmem:[#allocation8 + $0x1d0] sm:$0xff]
    %v845 = vld [vmem:[#allocation8 + $0x1d8] sm:$0xff]
    %v846 = vld [vmem:[#allocation8 + $0x1e0] sm:$0xff]
    %v847 = vld [vmem:[#allocation8 + $0x1e8] sm:$0xff]
    %v848 = vld [vmem:[#allocation8 + $0x1f0] sm:$0xff]
    %v849 = vld [vmem:[#allocation8 + $0x1f8] sm:$0xff]
    %v850 = vld [vmem:[#allocation8 + $0x200] sm:$0xff]
    %v851 = vld [vmem:[#allocation8 + $0x208] sm:$0xff]
    %v852 = vld [vmem:[#allocation8 + $0x210] sm:$0xff]
    %v853 = vld [vmem:[#allocation8 + $0x218] sm:$0xff]
    %v854 = vld [vmem:[#allocation8 + $0x220] sm:$0xff]
    %v855 = vld [vmem:[#allocation8 + $0x228] sm:$0xff]
    %v856 = vld [vmem:[#allocation8 + $0x230] sm:$0xff]
    %v857 = vld [vmem:[#allocation8 + $0x238] sm:$0xff]
    %v858 = vld [vmem:[#allocation8 + $0x240] sm:$0xff]
    %v859 = vld [vmem:[#allocation8 + $0x248] sm:$0xff]
    %v860 = vld [vmem:[#allocation8 + $0x250] sm:$0xff]
    %v861 = vld [vmem:[#allocation8 + $0x258] sm:$0xff]
    %v862 = vld [vmem:[#allocation8 + $0x260] sm:$0xff]
    %v863 = vld [vmem:[#allocation8 + $0x268] sm:$0xff]
    %v864 = vld [vmem:[#allocation8 + $0x270] sm:$0xff]
    %v865 = vld [vmem:[#allocation8 + $0x278] sm:$0xff]
    %v866 = vld [vmem:[#allocation8 + $0x280] sm:$0xff]
    %v867 = vld [vmem:[#allocation8 + $0x288] sm:$0xff]
    %v868 = vld [vmem:[#allocation8 + $0x290] sm:$0xff]
    %v869 = vld [vmem:[#allocation8 + $0x298] sm:$0xff]
    %v870 = vld [vmem:[#allocation8 + $0x2a0] sm:$0xff]
    %v871 = vld [vmem:[#allocation8 + $0x2a8] sm:$0xff]
    %v872 = vld [vmem:[#allocation8 + $0x2b0] sm:$0xff]
    %v873 = vld [vmem:[#allocation8 + $0x2b8] sm:$0xff]
    %v874 = vld [vmem:[#allocation8 + $0x2c0] sm:$0xff]
    %v875 = vld [vmem:[#allocation8 + $0x2c8] sm:$0xff]
    %v876 = vld [vmem:[#allocation8 + $0x2d0] sm:$0xff]
    %v877 = vld [vmem:[#allocation8 + $0x2d8] sm:$0xff]
    %v878 = vld [vmem:[#allocation8 + $0x2e0] sm:$0xff]
    %v879 = vld [vmem:[#allocation8 + $0x2e8] sm:$0xff]
    %v880 = vld [vmem:[#allocation8 + $0x2f0] sm:$0xff]
    %v881 = vld [vmem:[#allocation8 + $0x2f8] sm:$0xff]
    %v882 = vld [vmem:[#allocation8 + $0x300] sm:$0xff]
    %v883 = vld [vmem:[#allocation8 + $0x308] sm:$0xff]
    %v884 = vld [vmem:[#allocation8 + $0x310] sm:$0xff]
    %v885 = vld [vmem:[#allocation8 + $0x318] sm:$0xff]
    %v886 = vld [vmem:[#allocation8 + $0x320] sm:$0xff]
    %v887 = vld [vmem:[#allocation8 + $0x328] sm:$0xff]
    %v888 = vld [vmem:[#allocation8 + $0x330] sm:$0xff]
    %v889 = vld [vmem:[#allocation8 + $0x338] sm:$0xff]
    %v890 = vld [vmem:[#allocation8 + $0x340] sm:$0xff]
    %v891 = vld [vmem:[#allocation8 + $0x348] sm:$0xff]
    %v892 = vld [vmem:[#allocation8 + $0x350] sm:$0xff]
    %v893 = vld [vmem:[#allocation8 + $0x358] sm:$0xff]
    %v894 = vld [vmem:[#allocation8 + $0x360] sm:$0xff]
    %v895 = vld [vmem:[#allocation8 + $0x368] sm:$0xff]
    %v896 = vld [vmem:[#allocation8 + $0x370] sm:$0xff]
    %v897 = vld [vmem:[#allocation8 + $0x378] sm:$0xff]
    %v898 = vld [vmem:[#allocation8 + $0x380] sm:$0xff]
    %v899 = vld [vmem:[#allocation8 + $0x388] sm:$0xff]
    %v900 = vld [vmem:[#allocation8 + $0x390] sm:$0xff]
    %v901 = vld [vmem:[#allocation8 + $0x398] sm:$0xff]
    %v902 = vld [vmem:[#allocation8 + $0x3a0] sm:$0xff]
    %v903 = vld [vmem:[#allocation8 + $0x3a8] sm:$0xff]
    %v904 = vld [vmem:[#allocation8 + $0x3b0] sm:$0xff]
    %v905 = vld [vmem:[#allocation8 + $0x3b8] sm:$0xff]
    %v906 = vld [vmem:[#allocation8 + $0x3c0] sm:$0xff]
    %v907 = vld [vmem:[#allocation8 + $0x3c8] sm:$0xff]
    %v908 = vld [vmem:[#allocation8 + $0x3d0] sm:$0xff]
    %v909 = vld [vmem:[#allocation8 + $0x3d8] sm:$0xff]
    %v910 = vld [vmem:[#allocation8 + $0x3e0] sm:$0xff]
    %v911 = vld [vmem:[#allocation8 + $0x3e8] sm:$0xff]
    %v912 = vld [vmem:[#allocation8 + $0x3f0] sm:$0xff]
    %v913 = vld [vmem:[#allocation8 + $0x3f8] sm:$0xff]
    %v914 = vld [vmem:[%s4] sm:$0xf]
    %v916 = vperm.slane %v785, 0
    %v917 = vperm.slane %v785, 1
    %v921 = vperm.slane %v914, 0
    %v922 = vperm.slane %v914, 1
    %v923 = vperm.slane %v914, 2
    %v924 = vperm.slane %v914, 3
    %929 = vmatpush.msra.mxu0 %v846
    %930 = vmatpush.msra.mxu0 %v842
    %931 = vmatpush.msra.mxu0 %v838
    %932 = vmatpush.msra.mxu0 %v834
    %933 = vmatpush.msra.mxu0 %v830
    %934 = vmatpush.msra.mxu0 %v826
    %935 = vmatpush.msra.mxu0 %v822
    %936 = vmatpush.msra.mxu0 %v818
    %937 = vmatpush.msra.mxu0 %v814
    %938 = vmatpush.msra.mxu0 %v810
    %939 = vmatpush.msra.mxu0 %v806
    %940 = vmatpush.msra.mxu0 %v802
    %941 = vmatpush.msra.mxu0 %v798
    %942 = vmatpush.msra.mxu0 %v794
    %943 = vmatpush.msra.mxu0 %v790
    %944 = vmatpush.msra.mxu0 %v786
    %945 = vmatmul.f32.gmra.mxu0 %v916
    %v946 = vpop.f32.mrf.mxu0
    %v947 = vadd.f32 %v921, %v946
    %948 = vdwg.mxu0
    %949 = vmatpush.msra.mxu0 %v910
    %950 = vmatpush.msra.mxu0 %v906
    %951 = vmatpush.msra.mxu0 %v902
    %952 = vmatpush.msra.mxu0 %v898
    %953 = vmatpush.msra.mxu0 %v894
    %954 = vmatpush.msra.mxu0 %v890
    %955 = vmatpush.msra.mxu0 %v886
    %956 = vmatpush.msra.mxu0 %v882
    %957 = vmatpush.msra.mxu0 %v878
    %958 = vmatpush.msra.mxu0 %v874
    %959 = vmatpush.msra.mxu0 %v870
    %960 = vmatpush.msra.mxu0 %v866
    %961 = vmatpush.msra.mxu0 %v862
    %962 = vmatpush.msra.mxu0 %v858
    %963 = vmatpush.msra.mxu0 %v854
    %964 = vmatpush.msra.mxu0 %v850
    %965 = vmatmul.f32.gmra.mxu0 %v917
    %v966 = vpop.f32.mrf.mxu0
    %v967 = vadd.f32 %v947, %v966
    %968 = vdwg.mxu0
    %969 = vmatpush.msra.mxu0 %v847
    %970 = vmatpush.msra.mxu0 %v843
    %971 = vmatpush.msra.mxu0 %v839
    %972 = vmatpush.msra.mxu0 %v835
    %973 = vmatpush.msra.mxu0 %v831
    %974 = vmatpush.msra.mxu0 %v827
    %975 = vmatpush.msra.mxu0 %v823
    %976 = vmatpush.msra.mxu0 %v819
    %977 = vmatpush.msra.mxu0 %v815
    %978 = vmatpush.msra.mxu0 %v811
    %979 = vmatpush.msra.mxu0 %v807
    %980 = vmatpush.msra.mxu0 %v803
    %981 = vmatpush.msra.mxu0 %v799
    %982 = vmatpush.msra.mxu0 %v795
    %983 = vmatpush.msra.mxu0 %v791
    %984 = vmatpush.msra.mxu0 %v787
    %985 = vmatmul.f32.gmra.mxu0 %v916
    %v986 = vpop.f32.mrf.mxu0
    %v987 = vadd.f32 %v922, %v986
    %988 = vdwg.mxu0
    %989 = vmatpush.msra.mxu0 %v911
    %990 = vmatpush.msra.mxu0 %v907
    %991 = vmatpush.msra.mxu0 %v903
    %992 = vmatpush.msra.mxu0 %v899
    %993 = vmatpush.msra.mxu0 %v895
    %994 = vmatpush.msra.mxu0 %v891
    %995 = vmatpush.msra.mxu0 %v887
    %996 = vmatpush.msra.mxu0 %v883
    %997 = vmatpush.msra.mxu0 %v879
    %998 = vmatpush.msra.mxu0 %v875
    %999 = vmatpush.msra.mxu0 %v871
    %1000 = vmatpush.msra.mxu0 %v867
    %1001 = vmatpush.msra.mxu0 %v863
    %1002 = vmatpush.msra.mxu0 %v859
    %1003 = vmatpush.msra.mxu0 %v855
    %1004 = vmatpush.msra.mxu0 %v851
    %1005 = vmatmul.f32.gmra.mxu0 %v917
    %v1006 = vpop.f32.mrf.mxu0
    %v1007 = vadd.f32 %v987, %v1006
    %1008 = vdwg.mxu0
    %1009 = vmatpush.msra.mxu0 %v848
    %1010 = vmatpush.msra.mxu0 %v844
    %1011 = vmatpush.msra.mxu0 %v840
    %1012 = vmatpush.msra.mxu0 %v836
    %1013 = vmatpush.msra.mxu0 %v832
    %1014 = vmatpush.msra.mxu0 %v828
    %1015 = vmatpush.msra.mxu0 %v824
    %1016 = vmatpush.msra.mxu0 %v820
    %1017 = vmatpush.msra.mxu0 %v816
    %1018 = vmatpush.msra.mxu0 %v812
    %1019 = vmatpush.msra.mxu0 %v808
    %1020 = vmatpush.msra.mxu0 %v804
    %1021 = vmatpush.msra.mxu0 %v800
    %1022 = vmatpush.msra.mxu0 %v796
    %1023 = vmatpush.msra.mxu0 %v792
    %1024 = vmatpush.msra.mxu0 %v788
    %1025 = vmatmul.f32.gmra.mxu0 %v916
    %v1026 = vpop.f32.mrf.mxu0
    %v1027 = vadd.f32 %v923, %v1026
    %1028 = vdwg.mxu0
    %1029 = vmatpush.msra.mxu0 %v912
    %1030 = vmatpush.msra.mxu0 %v908
    %1031 = vmatpush.msra.mxu0 %v904
    %1032 = vmatpush.msra.mxu0 %v900
    %1033 = vmatpush.msra.mxu0 %v896
    %1034 = vmatpush.msra.mxu0 %v892
    %1035 = vmatpush.msra.mxu0 %v888
    %1036 = vmatpush.msra.mxu0 %v884
    %1037 = vmatpush.msra.mxu0 %v880
    %1038 = vmatpush.msra.mxu0 %v876
    %1039 = vmatpush.msra.mxu0 %v872
    %1040 = vmatpush.msra.mxu0 %v868
    %1041 = vmatpush.msra.mxu0 %v864
    %1042 = vmatpush.msra.mxu0 %v860
    %1043 = vmatpush.msra.mxu0 %v856
    %1044 = vmatpush.msra.mxu0 %v852
    %1045 = vmatmul.f32.gmra.mxu0 %v917
    %v1046 = vpop.f32.mrf.mxu0
    %v1047 = vadd.f32 %v1027, %v1046
    %1048 = vdwg.mxu0
    %1049 = vmatpush.msra.mxu0 %v849
    %1050 = vmatpush.msra.mxu0 %v845
    %1051 = vmatpush.msra.mxu0 %v841
    %1052 = vmatpush.msra.mxu0 %v837
    %1053 = vmatpush.msra.mxu0 %v833
    %1054 = vmatpush.msra.mxu0 %v829
    %1055 = vmatpush.msra.mxu0 %v825
    %1056 = vmatpush.msra.mxu0 %v821
    %1057 = vmatpush.msra.mxu0 %v817
    %1058 = vmatpush.msra.mxu0 %v813
    %1059 = vmatpush.msra.mxu0 %v809
    %1060 = vmatpush.msra.mxu0 %v805
    %1061 = vmatpush.msra.mxu0 %v801
    %1062 = vmatpush.msra.mxu0 %v797
    %1063 = vmatpush.msra.mxu0 %v793
    %1064 = vmatpush.msra.mxu0 %v789
    %1065 = vmatmul.f32.gmra.mxu0 %v916
    %v1066 = vpop.f32.mrf.mxu0
    %v1067 = vadd.f32 %v924, %v1066
    %1068 = vdwg.mxu0
    %1069 = vmatpush.msra.mxu0 %v913
    %1070 = vmatpush.msra.mxu0 %v909
    %1071 = vmatpush.msra.mxu0 %v905
    %1072 = vmatpush.msra.mxu0 %v901
    %1073 = vmatpush.msra.mxu0 %v897
    %1074 = vmatpush.msra.mxu0 %v893
    %1075 = vmatpush.msra.mxu0 %v889
    %1076 = vmatpush.msra.mxu0 %v885
    %1077 = vmatpush.msra.mxu0 %v881
    %1078 = vmatpush.msra.mxu0 %v877
    %1079 = vmatpush.msra.mxu0 %v873
    %1080 = vmatpush.msra.mxu0 %v869
    %1081 = vmatpush.msra.mxu0 %v865
    %1082 = vmatpush.msra.mxu0 %v861
    %1083 = vmatpush.msra.mxu0 %v857
    %1084 = vmatpush.msra.mxu0 %v853
    %1085 = vmatmul.f32.gmra.mxu0 %v917
    %v1086 = vpop.f32.mrf.mxu0
    %v1087 = vadd.f32 %v1067, %v1086
    %1088 = vdwg.mxu0
    %v1089 = vxor.u32 %v967, 2147483648
    %v1090 = vmul.f32 %v1089, 1.442695
    %v1091 = vpow.pop %v1090
    %v1092 = vadd.f32 %v1091, 1.0
    %v1093 = vrcp.pop %v1092
    %v1094 = vmul.f32 %v1092, %v1093
    %v1095 = vsub.f32 1.0, %v1094
    %v1096 = vmul.f32 %v1093, %v1095
    %v1097 = vadd.f32 %v1093, %v1096
    %vm1098 = vweird.f32 %v1092
    %vm1099 = vweird.f32 %v1093
    %vm1100 = vmor %vm1098, %vm1099
    %v1101 = vsel %vm1100, %v1093, %v1097
    %v1102 = vand.u32 2147483647, %v1092
    %vm1103 = vcmp.eq.f32.partialorder %v1102, 8.507059e+37
    %v1104 = vand.u32 %v1092, 2147483648
    %v1105 = vor.u32 1.1754944e-38, %v1104
    %v1106 = vsel %vm1103, %v1105, %v1101
    %v1107 = vmul.f32 1.0, %v1106
    %v1108 = vxor.u32 %v1007, 2147483648
    %v1109 = vmul.f32 %v1108, 1.442695
    %v1110 = vpow.pop %v1109
    %v1111 = vadd.f32 %v1110, 1.0
    %v1112 = vrcp.pop %v1111
    %v1113 = vmul.f32 %v1111, %v1112
    %v1114 = vsub.f32 1.0, %v1113
    %v1115 = vmul.f32 %v1112, %v1114
    %v1116 = vadd.f32 %v1112, %v1115
    %vm1117 = vweird.f32 %v1111
    %vm1118 = vweird.f32 %v1112
    %vm1119 = vmor %vm1117, %vm1118
    %v1120 = vsel %vm1119, %v1112, %v1116
    %v1121 = vand.u32 2147483647, %v1111
    %vm1122 = vcmp.eq.f32.partialorder %v1121, 8.507059e+37
    %v1123 = vand.u32 %v1111, 2147483648
    %v1124 = vor.u32 1.1754944e-38, %v1123
    %v1125 = vsel %vm1122, %v1124, %v1120
    %v1126 = vmul.f32 1.0, %v1125
    %v1127 = vmul.f32 %v1107, %v1087
    %v1128 = vadd.f32 %v1047, %v1127
    %v1129 = vtanh.pop %v1128
    %v1130 = vsub.f32 1.0, %v1126
    %v1131 = vmul.f32 %v1130, %v1129
    %v1132 = vmul.f32 %v1126, %v778
    %v1133 = vadd.f32 %v1131, %v1132
    %s1134 = sadd.s32 %s65, 3
    %s1135 = sld [smem:[#allocation5 + %s1134]]
    %s1136 = scalar_lea.vmem [#allocation6], %s1135
    %v1137 = vld [vmem:[%s1136] sm:$0x1]
    %1138 = vst.msk [vmem:[#allocation3] sm:$0x1] %vm72, %v1137
    %1139 = vst.msk [vmem:[#allocation3 + $0x1] sm:$0x1] %vm72, %v1133
    %v1140 = vld [vmem:[#allocation3] sm:$0x3]
    %v1141 = vld [vmem:[#allocation8] sm:$0xff]
    %v1142 = vld [vmem:[#allocation8 + $0x8] sm:$0xff]
    %v1143 = vld [vmem:[#allocation8 + $0x10] sm:$0xff]
    %v1144 = vld [vmem:[#allocation8 + $0x18] sm:$0xff]
    %v1145 = vld [vmem:[#allocation8 + $0x20] sm:$0xff]
    %v1146 = vld [vmem:[#allocation8 + $0x28] sm:$0xff]
    %v1147 = vld [vmem:[#allocation8 + $0x30] sm:$0xff]
    %v1148 = vld [vmem:[#allocation8 + $0x38] sm:$0xff]
    %v1149 = vld [vmem:[#allocation8 + $0x40] sm:$0xff]
    %v1150 = vld [vmem:[#allocation8 + $0x48] sm:$0xff]
    %v1151 = vld [vmem:[#allocation8 + $0x50] sm:$0xff]
    %v1152 = vld [vmem:[#allocation8 + $0x58] sm:$0xff]
    %v1153 = vld [vmem:[#allocation8 + $0x60] sm:$0xff]
    %v1154 = vld [vmem:[#allocation8 + $0x68] sm:$0xff]
    %v1155 = vld [vmem:[#allocation8 + $0x70] sm:$0xff]
    %v1156 = vld [vmem:[#allocation8 + $0x78] sm:$0xff]
    %v1157 = vld [vmem:[#allocation8 + $0x80] sm:$0xff]
    %v1158 = vld [vmem:[#allocation8 + $0x88] sm:$0xff]
    %v1159 = vld [vmem:[#allocation8 + $0x90] sm:$0xff]
    %v1160 = vld [vmem:[#allocation8 + $0x98] sm:$0xff]
    %v1161 = vld [vmem:[#allocation8 + $0xa0] sm:$0xff]
    %v1162 = vld [vmem:[#allocation8 + $0xa8] sm:$0xff]
    %v1163 = vld [vmem:[#allocation8 + $0xb0] sm:$0xff]
    %v1164 = vld [vmem:[#allocation8 + $0xb8] sm:$0xff]
    %v1165 = vld [vmem:[#allocation8 + $0xc0] sm:$0xff]
    %v1166 = vld [vmem:[#allocation8 + $0xc8] sm:$0xff]
    %v1167 = vld [vmem:[#allocation8 + $0xd0] sm:$0xff]
    %v1168 = vld [vmem:[#allocation8 + $0xd8] sm:$0xff]
    %v1169 = vld [vmem:[#allocation8 + $0xe0] sm:$0xff]
    %v1170 = vld [vmem:[#allocation8 + $0xe8] sm:$0xff]
    %v1171 = vld [vmem:[#allocation8 + $0xf0] sm:$0xff]
    %v1172 = vld [vmem:[#allocation8 + $0xf8] sm:$0xff]
    %v1173 = vld [vmem:[#allocation8 + $0x100] sm:$0xff]
    %v1174 = vld [vmem:[#allocation8 + $0x108] sm:$0xff]
    %v1175 = vld [vmem:[#allocation8 + $0x110] sm:$0xff]
    %v1176 = vld [vmem:[#allocation8 + $0x118] sm:$0xff]
    %v1177 = vld [vmem:[#allocation8 + $0x120] sm:$0xff]
    %v1178 = vld [vmem:[#allocation8 + $0x128] sm:$0xff]
    %v1179 = vld [vmem:[#allocation8 + $0x130] sm:$0xff]
    %v1180 = vld [vmem:[#allocation8 + $0x138] sm:$0xff]
    %v1181 = vld [vmem:[#allocation8 + $0x140] sm:$0xff]
    %v1182 = vld [vmem:[#allocation8 + $0x148] sm:$0xff]
    %v1183 = vld [vmem:[#allocation8 + $0x150] sm:$0xff]
    %v1184 = vld [vmem:[#allocation8 + $0x158] sm:$0xff]
    %v1185 = vld [vmem:[#allocation8 + $0x160] sm:$0xff]
    %v1186 = vld [vmem:[#allocation8 + $0x168] sm:$0xff]
    %v1187 = vld [vmem:[#allocation8 + $0x170] sm:$0xff]
    %v1188 = vld [vmem:[#allocation8 + $0x178] sm:$0xff]
    %v1189 = vld [vmem:[#allocation8 + $0x180] sm:$0xff]
    %v1190 = vld [vmem:[#allocation8 + $0x188] sm:$0xff]
    %v1191 = vld [vmem:[#allocation8 + $0x190] sm:$0xff]
    %v1192 = vld [vmem:[#allocation8 + $0x198] sm:$0xff]
    %v1193 = vld [vmem:[#allocation8 + $0x1a0] sm:$0xff]
    %v1194 = vld [vmem:[#allocation8 + $0x1a8] sm:$0xff]
    %v1195 = vld [vmem:[#allocation8 + $0x1b0] sm:$0xff]
    %v1196 = vld [vmem:[#allocation8 + $0x1b8] sm:$0xff]
    %v1197 = vld [vmem:[#allocation8 + $0x1c0] sm:$0xff]
    %v1198 = vld [vmem:[#allocation8 + $0x1c8] sm:$0xff]
    %v1199 = vld [vmem:[#allocation8 + $0x1d0] sm:$0xff]
    %v1200 = vld [vmem:[#allocation8 + $0x1d8] sm:$0xff]
    %v1201 = vld [vmem:[#allocation8 + $0x1e0] sm:$0xff]
    %v1202 = vld [vmem:[#allocation8 + $0x1e8] sm:$0xff]
    %v1203 = vld [vmem:[#allocation8 + $0x1f0] sm:$0xff]
    %v1204 = vld [vmem:[#allocation8 + $0x1f8] sm:$0xff]
    %v1205 = vld [vmem:[#allocation8 + $0x200] sm:$0xff]
    %v1206 = vld [vmem:[#allocation8 + $0x208] sm:$0xff]
    %v1207 = vld [vmem:[#allocation8 + $0x210] sm:$0xff]
    %v1208 = vld [vmem:[#allocation8 + $0x218] sm:$0xff]
    %v1209 = vld [vmem:[#allocation8 + $0x220] sm:$0xff]
    %v1210 = vld [vmem:[#allocation8 + $0x228] sm:$0xff]
    %v1211 = vld [vmem:[#allocation8 + $0x230] sm:$0xff]
    %v1212 = vld [vmem:[#allocation8 + $0x238] sm:$0xff]
    %v1213 = vld [vmem:[#allocation8 + $0x240] sm:$0xff]
    %v1214 = vld [vmem:[#allocation8 + $0x248] sm:$0xff]
    %v1215 = vld [vmem:[#allocation8 + $0x250] sm:$0xff]
    %v1216 = vld [vmem:[#allocation8 + $0x258] sm:$0xff]
    %v1217 = vld [vmem:[#allocation8 + $0x260] sm:$0xff]
    %v1218 = vld [vmem:[#allocation8 + $0x268] sm:$0xff]
    %v1219 = vld [vmem:[#allocation8 + $0x270] sm:$0xff]
    %v1220 = vld [vmem:[#allocation8 + $0x278] sm:$0xff]
    %v1221 = vld [vmem:[#allocation8 + $0x280] sm:$0xff]
    %v1222 = vld [vmem:[#allocation8 + $0x288] sm:$0xff]
    %v1223 = vld [vmem:[#allocation8 + $0x290] sm:$0xff]
    %v1224 = vld [vmem:[#allocation8 + $0x298] sm:$0xff]
    %v1225 = vld [vmem:[#allocation8 + $0x2a0] sm:$0xff]
    %v1226 = vld [vmem:[#allocation8 + $0x2a8] sm:$0xff]
    %v1227 = vld [vmem:[#allocation8 + $0x2b0] sm:$0xff]
    %v1228 = vld [vmem:[#allocation8 + $0x2b8] sm:$0xff]
    %v1229 = vld [vmem:[#allocation8 + $0x2c0] sm:$0xff]
    %v1230 = vld [vmem:[#allocation8 + $0x2c8] sm:$0xff]
    %v1231 = vld [vmem:[#allocation8 + $0x2d0] sm:$0xff]
    %v1232 = vld [vmem:[#allocation8 + $0x2d8] sm:$0xff]
    %v1233 = vld [vmem:[#allocation8 + $0x2e0] sm:$0xff]
    %v1234 = vld [vmem:[#allocation8 + $0x2e8] sm:$0xff]
    %v1235 = vld [vmem:[#allocation8 + $0x2f0] sm:$0xff]
    %v1236 = vld [vmem:[#allocation8 + $0x2f8] sm:$0xff]
    %v1237 = vld [vmem:[#allocation8 + $0x300] sm:$0xff]
    %v1238 = vld [vmem:[#allocation8 + $0x308] sm:$0xff]
    %v1239 = vld [vmem:[#allocation8 + $0x310] sm:$0xff]
    %v1240 = vld [vmem:[#allocation8 + $0x318] sm:$0xff]
    %v1241 = vld [vmem:[#allocation8 + $0x320] sm:$0xff]
    %v1242 = vld [vmem:[#allocation8 + $0x328] sm:$0xff]
    %v1243 = vld [vmem:[#allocation8 + $0x330] sm:$0xff]
    %v1244 = vld [vmem:[#allocation8 + $0x338] sm:$0xff]
    %v1245 = vld [vmem:[#allocation8 + $0x340] sm:$0xff]
    %v1246 = vld [vmem:[#allocation8 + $0x348] sm:$0xff]
    %v1247 = vld [vmem:[#allocation8 + $0x350] sm:$0xff]
    %v1248 = vld [vmem:[#allocation8 + $0x358] sm:$0xff]
    %v1249 = vld [vmem:[#allocation8 + $0x360] sm:$0xff]
    %v1250 = vld [vmem:[#allocation8 + $0x368] sm:$0xff]
    %v1251 = vld [vmem:[#allocation8 + $0x370] sm:$0xff]
    %v1252 = vld [vmem:[#allocation8 + $0x378] sm:$0xff]
    %v1253 = vld [vmem:[#allocation8 + $0x380] sm:$0xff]
    %v1254 = vld [vmem:[#allocation8 + $0x388] sm:$0xff]
    %v1255 = vld [vmem:[#allocation8 + $0x390] sm:$0xff]
    %v1256 = vld [vmem:[#allocation8 + $0x398] sm:$0xff]
    %v1257 = vld [vmem:[#allocation8 + $0x3a0] sm:$0xff]
    %v1258 = vld [vmem:[#allocation8 + $0x3a8] sm:$0xff]
    %v1259 = vld [vmem:[#allocation8 + $0x3b0] sm:$0xff]
    %v1260 = vld [vmem:[#allocation8 + $0x3b8] sm:$0xff]
    %v1261 = vld [vmem:[#allocation8 + $0x3c0] sm:$0xff]
    %v1262 = vld [vmem:[#allocation8 + $0x3c8] sm:$0xff]
    %v1263 = vld [vmem:[#allocation8 + $0x3d0] sm:$0xff]
    %v1264 = vld [vmem:[#allocation8 + $0x3d8] sm:$0xff]
    %v1265 = vld [vmem:[#allocation8 + $0x3e0] sm:$0xff]
    %v1266 = vld [vmem:[#allocation8 + $0x3e8] sm:$0xff]
    %v1267 = vld [vmem:[#allocation8 + $0x3f0] sm:$0xff]
    %v1268 = vld [vmem:[#allocation8 + $0x3f8] sm:$0xff]
    %v1269 = vld [vmem:[%s4] sm:$0xf]
    %v1271 = vperm.slane %v1140, 0
    %v1272 = vperm.slane %v1140, 1
    %v1276 = vperm.slane %v1269, 0
    %v1277 = vperm.slane %v1269, 1
    %v1278 = vperm.slane %v1269, 2
    %v1279 = vperm.slane %v1269, 3
    %1284 = vmatpush.msra.mxu0 %v1201
    %1285 = vmatpush.msra.mxu0 %v1197
    %1286 = vmatpush.msra.mxu0 %v1193
    %1287 = vmatpush.msra.mxu0 %v1189
    %1288 = vmatpush.msra.mxu0 %v1185
    %1289 = vmatpush.msra.mxu0 %v1181
    %1290 = vmatpush.msra.mxu0 %v1177
    %1291 = vmatpush.msra.mxu0 %v1173
    %1292 = vmatpush.msra.mxu0 %v1169
    %1293 = vmatpush.msra.mxu0 %v1165
    %1294 = vmatpush.msra.mxu0 %v1161
    %1295 = vmatpush.msra.mxu0 %v1157
    %1296 = vmatpush.msra.mxu0 %v1153
    %1297 = vmatpush.msra.mxu0 %v1149
    %1298 = vmatpush.msra.mxu0 %v1145
    %1299 = vmatpush.msra.mxu0 %v1141
    %1300 = vmatmul.f32.gmra.mxu0 %v1271
    %v1301 = vpop.f32.mrf.mxu0
    %v1302 = vadd.f32 %v1276, %v1301
    %1303 = vdwg.mxu0
    %1304 = vmatpush.msra.mxu0 %v1265
    %1305 = vmatpush.msra.mxu0 %v1261
    %1306 = vmatpush.msra.mxu0 %v1257
    %1307 = vmatpush.msra.mxu0 %v1253
    %1308 = vmatpush.msra.mxu0 %v1249
    %1309 = vmatpush.msra.mxu0 %v1245
    %1310 = vmatpush.msra.mxu0 %v1241
    %1311 = vmatpush.msra.mxu0 %v1237
    %1312 = vmatpush.msra.mxu0 %v1233
    %1313 = vmatpush.msra.mxu0 %v1229
    %1314 = vmatpush.msra.mxu0 %v1225
    %1315 = vmatpush.msra.mxu0 %v1221
    %1316 = vmatpush.msra.mxu0 %v1217
    %1317 = vmatpush.msra.mxu0 %v1213
    %1318 = vmatpush.msra.mxu0 %v1209
    %1319 = vmatpush.msra.mxu0 %v1205
    %1320 = vmatmul.f32.gmra.mxu0 %v1272
    %v1321 = vpop.f32.mrf.mxu0
    %v1322 = vadd.f32 %v1302, %v1321
    %1323 = vdwg.mxu0
    %1324 = vmatpush.msra.mxu0 %v1202
    %1325 = vmatpush.msra.mxu0 %v1198
    %1326 = vmatpush.msra.mxu0 %v1194
    %1327 = vmatpush.msra.mxu0 %v1190
    %1328 = vmatpush.msra.mxu0 %v1186
    %1329 = vmatpush.msra.mxu0 %v1182
    %1330 = vmatpush.msra.mxu0 %v1178
    %1331 = vmatpush.msra.mxu0 %v1174
    %1332 = vmatpush.msra.mxu0 %v1170
    %1333 = vmatpush.msra.mxu0 %v1166
    %1334 = vmatpush.msra.mxu0 %v1162
    %1335 = vmatpush.msra.mxu0 %v1158
    %1336 = vmatpush.msra.mxu0 %v1154
    %1337 = vmatpush.msra.mxu0 %v1150
    %1338 = vmatpush.msra.mxu0 %v1146
    %1339 = vmatpush.msra.mxu0 %v1142
    %1340 = vmatmul.f32.gmra.mxu0 %v1271
    %v1341 = vpop.f32.mrf.mxu0
    %v1342 = vadd.f32 %v1277, %v1341
    %1343 = vdwg.mxu0
    %1344 = vmatpush.msra.mxu0 %v1266
    %1345 = vmatpush.msra.mxu0 %v1262
    %1346 = vmatpush.msra.mxu0 %v1258
    %1347 = vmatpush.msra.mxu0 %v1254
    %1348 = vmatpush.msra.mxu0 %v1250
    %1349 = vmatpush.msra.mxu0 %v1246
    %1350 = vmatpush.msra.mxu0 %v1242
    %1351 = vmatpush.msra.mxu0 %v1238
    %1352 = vmatpush.msra.mxu0 %v1234
    %1353 = vmatpush.msra.mxu0 %v1230
    %1354 = vmatpush.msra.mxu0 %v1226
    %1355 = vmatpush.msra.mxu0 %v1222
    %1356 = vmatpush.msra.mxu0 %v1218
    %1357 = vmatpush.msra.mxu0 %v1214
    %1358 = vmatpush.msra.mxu0 %v1210
    %1359 = vmatpush.msra.mxu0 %v1206
    %1360 = vmatmul.f32.gmra.mxu0 %v1272
    %v1361 = vpop.f32.mrf.mxu0
    %v1362 = vadd.f32 %v1342, %v1361
    %1363 = vdwg.mxu0
    %1364 = vmatpush.msra.mxu0 %v1203
    %1365 = vmatpush.msra.mxu0 %v1199
    %1366 = vmatpush.msra.mxu0 %v1195
    %1367 = vmatpush.msra.mxu0 %v1191
    %1368 = vmatpush.msra.mxu0 %v1187
    %1369 = vmatpush.msra.mxu0 %v1183
    %1370 = vmatpush.msra.mxu0 %v1179
    %1371 = vmatpush.msra.mxu0 %v1175
    %1372 = vmatpush.msra.mxu0 %v1171
    %1373 = vmatpush.msra.mxu0 %v1167
    %1374 = vmatpush.msra.mxu0 %v1163
    %1375 = vmatpush.msra.mxu0 %v1159
    %1376 = vmatpush.msra.mxu0 %v1155
    %1377 = vmatpush.msra.mxu0 %v1151
    %1378 = vmatpush.msra.mxu0 %v1147
    %1379 = vmatpush.msra.mxu0 %v1143
    %1380 = vmatmul.f32.gmra.mxu0 %v1271
    %v1381 = vpop.f32.mrf.mxu0
    %v1382 = vadd.f32 %v1278, %v1381
    %1383 = vdwg.mxu0
    %1384 = vmatpush.msra.mxu0 %v1267
    %1385 = vmatpush.msra.mxu0 %v1263
    %1386 = vmatpush.msra.mxu0 %v1259
    %1387 = vmatpush.msra.mxu0 %v1255
    %1388 = vmatpush.msra.mxu0 %v1251
    %1389 = vmatpush.msra.mxu0 %v1247
    %1390 = vmatpush.msra.mxu0 %v1243
    %1391 = vmatpush.msra.mxu0 %v1239
    %1392 = vmatpush.msra.mxu0 %v1235
    %1393 = vmatpush.msra.mxu0 %v1231
    %1394 = vmatpush.msra.mxu0 %v1227
    %1395 = vmatpush.msra.mxu0 %v1223
    %1396 = vmatpush.msra.mxu0 %v1219
    %1397 = vmatpush.msra.mxu0 %v1215
    %1398 = vmatpush.msra.mxu0 %v1211
    %1399 = vmatpush.msra.mxu0 %v1207
    %1400 = vmatmul.f32.gmra.mxu0 %v1272
    %v1401 = vpop.f32.mrf.mxu0
    %v1402 = vadd.f32 %v1382, %v1401
    %1403 = vdwg.mxu0
    %1404 = vmatpush.msra.mxu0 %v1204
    %1405 = vmatpush.msra.mxu0 %v1200
    %1406 = vmatpush.msra.mxu0 %v1196
    %1407 = vmatpush.msra.mxu0 %v1192
    %1408 = vmatpush.msra.mxu0 %v1188
    %1409 = vmatpush.msra.mxu0 %v1184
    %1410 = vmatpush.msra.mxu0 %v1180
    %1411 = vmatpush.msra.mxu0 %v1176
    %1412 = vmatpush.msra.mxu0 %v1172
    %1413 = vmatpush.msra.mxu0 %v1168
    %1414 = vmatpush.msra.mxu0 %v1164
    %1415 = vmatpush.msra.mxu0 %v1160
    %1416 = vmatpush.msra.mxu0 %v1156
    %1417 = vmatpush.msra.mxu0 %v1152
    %1418 = vmatpush.msra.mxu0 %v1148
    %1419 = vmatpush.msra.mxu0 %v1144
    %1420 = vmatmul.f32.gmra.mxu0 %v1271
    %v1421 = vpop.f32.mrf.mxu0
    %v1422 = vadd.f32 %v1279, %v1421
    %1423 = vdwg.mxu0
    %1424 = vmatpush.msra.mxu0 %v1268
    %1425 = vmatpush.msra.mxu0 %v1264
    %1426 = vmatpush.msra.mxu0 %v1260
    %1427 = vmatpush.msra.mxu0 %v1256
    %1428 = vmatpush.msra.mxu0 %v1252
    %1429 = vmatpush.msra.mxu0 %v1248
    %1430 = vmatpush.msra.mxu0 %v1244
    %1431 = vmatpush.msra.mxu0 %v1240
    %1432 = vmatpush.msra.mxu0 %v1236
    %1433 = vmatpush.msra.mxu0 %v1232
    %1434 = vmatpush.msra.mxu0 %v1228
    %1435 = vmatpush.msra.mxu0 %v1224
    %1436 = vmatpush.msra.mxu0 %v1220
    %1437 = vmatpush.msra.mxu0 %v1216
    %1438 = vmatpush.msra.mxu0 %v1212
    %1439 = vmatpush.msra.mxu0 %v1208
    %1440 = vmatmul.f32.gmra.mxu0 %v1272
    %v1441 = vpop.f32.mrf.mxu0
    %v1442 = vadd.f32 %v1422, %v1441
    %1443 = vdwg.mxu0
    %v1444 = vxor.u32 %v1322, 2147483648
    %v1445 = vmul.f32 %v1444, 1.442695
    %v1446 = vpow.pop %v1445
    %v1447 = vadd.f32 %v1446, 1.0
    %v1448 = vrcp.pop %v1447
    %v1449 = vmul.f32 %v1447, %v1448
    %v1450 = vsub.f32 1.0, %v1449
    %v1451 = vmul.f32 %v1448, %v1450
    %v1452 = vadd.f32 %v1448, %v1451
    %vm1453 = vweird.f32 %v1447
    %vm1454 = vweird.f32 %v1448
    %vm1455 = vmor %vm1453, %vm1454
    %v1456 = vsel %vm1455, %v1448, %v1452
    %v1457 = vand.u32 2147483647, %v1447
    %vm1458 = vcmp.eq.f32.partialorder %v1457, 8.507059e+37
    %v1459 = vand.u32 %v1447, 2147483648
    %v1460 = vor.u32 1.1754944e-38, %v1459
    %v1461 = vsel %vm1458, %v1460, %v1456
    %v1462 = vmul.f32 1.0, %v1461
    %v1463 = vxor.u32 %v1362, 2147483648
    %v1464 = vmul.f32 %v1463, 1.442695
    %v1465 = vpow.pop %v1464
    %v1466 = vadd.f32 %v1465, 1.0
    %v1467 = vrcp.pop %v1466
    %v1468 = vmul.f32 %v1466, %v1467
    %v1469 = vsub.f32 1.0, %v1468
    %v1470 = vmul.f32 %v1467, %v1469
    %v1471 = vadd.f32 %v1467, %v1470
    %vm1472 = vweird.f32 %v1466
    %vm1473 = vweird.f32 %v1467
    %vm1474 = vmor %vm1472, %vm1473
    %v1475 = vsel %vm1474, %v1467, %v1471
    %v1476 = vand.u32 2147483647, %v1466
    %vm1477 = vcmp.eq.f32.partialorder %v1476, 8.507059e+37
    %v1478 = vand.u32 %v1466, 2147483648
    %v1479 = vor.u32 1.1754944e-38, %v1478
    %v1480 = vsel %vm1477, %v1479, %v1475
    %v1481 = vmul.f32 1.0, %v1480
    %v1482 = vmul.f32 %v1462, %v1442
    %v1483 = vadd.f32 %v1402, %v1482
    %v1484 = vtanh.pop %v1483
    %v1485 = vsub.f32 1.0, %v1481
    %v1486 = vmul.f32 %v1485, %v1484
    %v1487 = vmul.f32 %v1481, %v1133
    %v1488 = vadd.f32 %v1486, %v1487
    %s1489 = sadd.s32 %s65, 4
    %s1490 = sld [smem:[#allocation5 + %s1489]]
    %s1491 = scalar_lea.vmem [#allocation6], %s1490
    %v1492 = vld [vmem:[%s1491] sm:$0x1]
    %1493 = vst.msk [vmem:[#allocation3] sm:$0x1] %vm72, %v1492
    %1494 = vst.msk [vmem:[#allocation3 + $0x1] sm:$0x1] %vm72, %v1488
    %v1495 = vld [vmem:[#allocation3] sm:$0x3]
    %v1496 = vld [vmem:[#allocation8] sm:$0xff]
    %v1497 = vld [vmem:[#allocation8 + $0x8] sm:$0xff]
    %v1498 = vld [vmem:[#allocation8 + $0x10] sm:$0xff]
    %v1499 = vld [vmem:[#allocation8 + $0x18] sm:$0xff]
    %v1500 = vld [vmem:[#allocation8 + $0x20] sm:$0xff]
    %v1501 = vld [vmem:[#allocation8 + $0x28] sm:$0xff]
    %v1502 = vld [vmem:[#allocation8 + $0x30] sm:$0xff]
    %v1503 = vld [vmem:[#allocation8 + $0x38] sm:$0xff]
    %v1504 = vld [vmem:[#allocation8 + $0x40] sm:$0xff]
    %v1505 = vld [vmem:[#allocation8 + $0x48] sm:$0xff]
    %v1506 = vld [vmem:[#allocation8 + $0x50] sm:$0xff]
    %v1507 = vld [vmem:[#allocation8 + $0x58] sm:$0xff]
    %v1508 = vld [vmem:[#allocation8 + $0x60] sm:$0xff]
    %v1509 = vld [vmem:[#allocation8 + $0x68] sm:$0xff]
    %v1510 = vld [vmem:[#allocation8 + $0x70] sm:$0xff]
    %v1511 = vld [vmem:[#allocation8 + $0x78] sm:$0xff]
    %v1512 = vld [vmem:[#allocation8 + $0x80] sm:$0xff]
    %v1513 = vld [vmem:[#allocation8 + $0x88] sm:$0xff]
    %v1514 = vld [vmem:[#allocation8 + $0x90] sm:$0xff]
    %v1515 = vld [vmem:[#allocation8 + $0x98] sm:$0xff]
    %v1516 = vld [vmem:[#allocation8 + $0xa0] sm:$0xff]
    %v1517 = vld [vmem:[#allocation8 + $0xa8] sm:$0xff]
    %v1518 = vld [vmem:[#allocation8 + $0xb0] sm:$0xff]
    %v1519 = vld [vmem:[#allocation8 + $0xb8] sm:$0xff]
    %v1520 = vld [vmem:[#allocation8 + $0xc0] sm:$0xff]
    %v1521 = vld [vmem:[#allocation8 + $0xc8] sm:$0xff]
    %v1522 = vld [vmem:[#allocation8 + $0xd0] sm:$0xff]
    %v1523 = vld [vmem:[#allocation8 + $0xd8] sm:$0xff]
    %v1524 = vld [vmem:[#allocation8 + $0xe0] sm:$0xff]
    %v1525 = vld [vmem:[#allocation8 + $0xe8] sm:$0xff]
    %v1526 = vld [vmem:[#allocation8 + $0xf0] sm:$0xff]
    %v1527 = vld [vmem:[#allocation8 + $0xf8] sm:$0xff]
    %v1528 = vld [vmem:[#allocation8 + $0x100] sm:$0xff]
    %v1529 = vld [vmem:[#allocation8 + $0x108] sm:$0xff]
    %v1530 = vld [vmem:[#allocation8 + $0x110] sm:$0xff]
    %v1531 = vld [vmem:[#allocation8 + $0x118] sm:$0xff]
    %v1532 = vld [vmem:[#allocation8 + $0x120] sm:$0xff]
    %v1533 = vld [vmem:[#allocation8 + $0x128] sm:$0xff]
    %v1534 = vld [vmem:[#allocation8 + $0x130] sm:$0xff]
    %v1535 = vld [vmem:[#allocation8 + $0x138] sm:$0xff]
    %v1536 = vld [vmem:[#allocation8 + $0x140] sm:$0xff]
    %v1537 = vld [vmem:[#allocation8 + $0x148] sm:$0xff]
    %v1538 = vld [vmem:[#allocation8 + $0x150] sm:$0xff]
    %v1539 = vld [vmem:[#allocation8 + $0x158] sm:$0xff]
    %v1540 = vld [vmem:[#allocation8 + $0x160] sm:$0xff]
    %v1541 = vld [vmem:[#allocation8 + $0x168] sm:$0xff]
    %v1542 = vld [vmem:[#allocation8 + $0x170] sm:$0xff]
    %v1543 = vld [vmem:[#allocation8 + $0x178] sm:$0xff]
    %v1544 = vld [vmem:[#allocation8 + $0x180] sm:$0xff]
    %v1545 = vld [vmem:[#allocation8 + $0x188] sm:$0xff]
    %v1546 = vld [vmem:[#allocation8 + $0x190] sm:$0xff]
    %v1547 = vld [vmem:[#allocation8 + $0x198] sm:$0xff]
    %v1548 = vld [vmem:[#allocation8 + $0x1a0] sm:$0xff]
    %v1549 = vld [vmem:[#allocation8 + $0x1a8] sm:$0xff]
    %v1550 = vld [vmem:[#allocation8 + $0x1b0] sm:$0xff]
    %v1551 = vld [vmem:[#allocation8 + $0x1b8] sm:$0xff]
    %v1552 = vld [vmem:[#allocation8 + $0x1c0] sm:$0xff]
    %v1553 = vld [vmem:[#allocation8 + $0x1c8] sm:$0xff]
    %v1554 = vld [vmem:[#allocation8 + $0x1d0] sm:$0xff]
    %v1555 = vld [vmem:[#allocation8 + $0x1d8] sm:$0xff]
    %v1556 = vld [vmem:[#allocation8 + $0x1e0] sm:$0xff]
    %v1557 = vld [vmem:[#allocation8 + $0x1e8] sm:$0xff]
    %v1558 = vld [vmem:[#allocation8 + $0x1f0] sm:$0xff]
    %v1559 = vld [vmem:[#allocation8 + $0x1f8] sm:$0xff]
    %v1560 = vld [vmem:[#allocation8 + $0x200] sm:$0xff]
    %v1561 = vld [vmem:[#allocation8 + $0x208] sm:$0xff]
    %v1562 = vld [vmem:[#allocation8 + $0x210] sm:$0xff]
    %v1563 = vld [vmem:[#allocation8 + $0x218] sm:$0xff]
    %v1564 = vld [vmem:[#allocation8 + $0x220] sm:$0xff]
    %v1565 = vld [vmem:[#allocation8 + $0x228] sm:$0xff]
    %v1566 = vld [vmem:[#allocation8 + $0x230] sm:$0xff]
    %v1567 = vld [vmem:[#allocation8 + $0x238] sm:$0xff]
    %v1568 = vld [vmem:[#allocation8 + $0x240] sm:$0xff]
    %v1569 = vld [vmem:[#allocation8 + $0x248] sm:$0xff]
    %v1570 = vld [vmem:[#allocation8 + $0x250] sm:$0xff]
    %v1571 = vld [vmem:[#allocation8 + $0x258] sm:$0xff]
    %v1572 = vld [vmem:[#allocation8 + $0x260] sm:$0xff]
    %v1573 = vld [vmem:[#allocation8 + $0x268] sm:$0xff]
    %v1574 = vld [vmem:[#allocation8 + $0x270] sm:$0xff]
    %v1575 = vld [vmem:[#allocation8 + $0x278] sm:$0xff]
    %v1576 = vld [vmem:[#allocation8 + $0x280] sm:$0xff]
    %v1577 = vld [vmem:[#allocation8 + $0x288] sm:$0xff]
    %v1578 = vld [vmem:[#allocation8 + $0x290] sm:$0xff]
    %v1579 = vld [vmem:[#allocation8 + $0x298] sm:$0xff]
    %v1580 = vld [vmem:[#allocation8 + $0x2a0] sm:$0xff]
    %v1581 = vld [vmem:[#allocation8 + $0x2a8] sm:$0xff]
    %v1582 = vld [vmem:[#allocation8 + $0x2b0] sm:$0xff]
    %v1583 = vld [vmem:[#allocation8 + $0x2b8] sm:$0xff]
    %v1584 = vld [vmem:[#allocation8 + $0x2c0] sm:$0xff]
    %v1585 = vld [vmem:[#allocation8 + $0x2c8] sm:$0xff]
    %v1586 = vld [vmem:[#allocation8 + $0x2d0] sm:$0xff]
    %v1587 = vld [vmem:[#allocation8 + $0x2d8] sm:$0xff]
    %v1588 = vld [vmem:[#allocation8 + $0x2e0] sm:$0xff]
    %v1589 = vld [vmem:[#allocation8 + $0x2e8] sm:$0xff]
    %v1590 = vld [vmem:[#allocation8 + $0x2f0] sm:$0xff]
    %v1591 = vld [vmem:[#allocation8 + $0x2f8] sm:$0xff]
    %v1592 = vld [vmem:[#allocation8 + $0x300] sm:$0xff]
    %v1593 = vld [vmem:[#allocation8 + $0x308] sm:$0xff]
    %v1594 = vld [vmem:[#allocation8 + $0x310] sm:$0xff]
    %v1595 = vld [vmem:[#allocation8 + $0x318] sm:$0xff]
    %v1596 = vld [vmem:[#allocation8 + $0x320] sm:$0xff]
    %v1597 = vld [vmem:[#allocation8 + $0x328] sm:$0xff]
    %v1598 = vld [vmem:[#allocation8 + $0x330] sm:$0xff]
    %v1599 = vld [vmem:[#allocation8 + $0x338] sm:$0xff]
    %v1600 = vld [vmem:[#allocation8 + $0x340] sm:$0xff]
    %v1601 = vld [vmem:[#allocation8 + $0x348] sm:$0xff]
    %v1602 = vld [vmem:[#allocation8 + $0x350] sm:$0xff]
    %v1603 = vld [vmem:[#allocation8 + $0x358] sm:$0xff]
    %v1604 = vld [vmem:[#allocation8 + $0x360] sm:$0xff]
    %v1605 = vld [vmem:[#allocation8 + $0x368] sm:$0xff]
    %v1606 = vld [vmem:[#allocation8 + $0x370] sm:$0xff]
    %v1607 = vld [vmem:[#allocation8 + $0x378] sm:$0xff]
    %v1608 = vld [vmem:[#allocation8 + $0x380] sm:$0xff]
    %v1609 = vld [vmem:[#allocation8 + $0x388] sm:$0xff]
    %v1610 = vld [vmem:[#allocation8 + $0x390] sm:$0xff]
    %v1611 = vld [vmem:[#allocation8 + $0x398] sm:$0xff]
    %v1612 = vld [vmem:[#allocation8 + $0x3a0] sm:$0xff]
    %v1613 = vld [vmem:[#allocation8 + $0x3a8] sm:$0xff]
    %v1614 = vld [vmem:[#allocation8 + $0x3b0] sm:$0xff]
    %v1615 = vld [vmem:[#allocation8 + $0x3b8] sm:$0xff]
    %v1616 = vld [vmem:[#allocation8 + $0x3c0] sm:$0xff]
    %v1617 = vld [vmem:[#allocation8 + $0x3c8] sm:$0xff]
    %v1618 = vld [vmem:[#allocation8 + $0x3d0] sm:$0xff]
    %v1619 = vld [vmem:[#allocation8 + $0x3d8] sm:$0xff]
    %v1620 = vld [vmem:[#allocation8 + $0x3e0] sm:$0xff]
    %v1621 = vld [vmem:[#allocation8 + $0x3e8] sm:$0xff]
    %v1622 = vld [vmem:[#allocation8 + $0x3f0] sm:$0xff]
    %v1623 = vld [vmem:[#allocation8 + $0x3f8] sm:$0xff]
    %v1624 = vld [vmem:[%s4] sm:$0xf]
    %v1626 = vperm.slane %v1495, 0
    %v1627 = vperm.slane %v1495, 1
    %v1631 = vperm.slane %v1624, 0
    %v1632 = vperm.slane %v1624, 1
    %v1633 = vperm.slane %v1624, 2
    %v1634 = vperm.slane %v1624, 3
    %1639 = vmatpush.msra.mxu0 %v1556
    %1640 = vmatpush.msra.mxu0 %v1552
    %1641 = vmatpush.msra.mxu0 %v1548
    %1642 = vmatpush.msra.mxu0 %v1544
    %1643 = vmatpush.msra.mxu0 %v1540
    %1644 = vmatpush.msra.mxu0 %v1536
    %1645 = vmatpush.msra.mxu0 %v1532
    %1646 = vmatpush.msra.mxu0 %v1528
    %1647 = vmatpush.msra.mxu0 %v1524
    %1648 = vmatpush.msra.mxu0 %v1520
    %1649 = vmatpush.msra.mxu0 %v1516
    %1650 = vmatpush.msra.mxu0 %v1512
    %1651 = vmatpush.msra.mxu0 %v1508
    %1652 = vmatpush.msra.mxu0 %v1504
    %1653 = vmatpush.msra.mxu0 %v1500
    %1654 = vmatpush.msra.mxu0 %v1496
    %1655 = vmatmul.f32.gmra.mxu0 %v1626
    %v1656 = vpop.f32.mrf.mxu0
    %v1657 = vadd.f32 %v1631, %v1656
    %1658 = vdwg.mxu0
    %1659 = vmatpush.msra.mxu0 %v1620
    %1660 = vmatpush.msra.mxu0 %v1616
    %1661 = vmatpush.msra.mxu0 %v1612
    %1662 = vmatpush.msra.mxu0 %v1608
    %1663 = vmatpush.msra.mxu0 %v1604
    %1664 = vmatpush.msra.mxu0 %v1600
    %1665 = vmatpush.msra.mxu0 %v1596
    %1666 = vmatpush.msra.mxu0 %v1592
    %1667 = vmatpush.msra.mxu0 %v1588
    %1668 = vmatpush.msra.mxu0 %v1584
    %1669 = vmatpush.msra.mxu0 %v1580
    %1670 = vmatpush.msra.mxu0 %v1576
    %1671 = vmatpush.msra.mxu0 %v1572
    %1672 = vmatpush.msra.mxu0 %v1568
    %1673 = vmatpush.msra.mxu0 %v1564
    %1674 = vmatpush.msra.mxu0 %v1560
    %1675 = vmatmul.f32.gmra.mxu0 %v1627
    %v1676 = vpop.f32.mrf.mxu0
    %v1677 = vadd.f32 %v1657, %v1676
    %1678 = vdwg.mxu0
    %1679 = vmatpush.msra.mxu0 %v1557
    %1680 = vmatpush.msra.mxu0 %v1553
    %1681 = vmatpush.msra.mxu0 %v1549
    %1682 = vmatpush.msra.mxu0 %v1545
    %1683 = vmatpush.msra.mxu0 %v1541
    %1684 = vmatpush.msra.mxu0 %v1537
    %1685 = vmatpush.msra.mxu0 %v1533
    %1686 = vmatpush.msra.mxu0 %v1529
    %1687 = vmatpush.msra.mxu0 %v1525
    %1688 = vmatpush.msra.mxu0 %v1521
    %1689 = vmatpush.msra.mxu0 %v1517
    %1690 = vmatpush.msra.mxu0 %v1513
    %1691 = vmatpush.msra.mxu0 %v1509
    %1692 = vmatpush.msra.mxu0 %v1505
    %1693 = vmatpush.msra.mxu0 %v1501
    %1694 = vmatpush.msra.mxu0 %v1497
    %1695 = vmatmul.f32.gmra.mxu0 %v1626
    %v1696 = vpop.f32.mrf.mxu0
    %v1697 = vadd.f32 %v1632, %v1696
    %1698 = vdwg.mxu0
    %1699 = vmatpush.msra.mxu0 %v1621
    %1700 = vmatpush.msra.mxu0 %v1617
    %1701 = vmatpush.msra.mxu0 %v1613
    %1702 = vmatpush.msra.mxu0 %v1609
    %1703 = vmatpush.msra.mxu0 %v1605
    %1704 = vmatpush.msra.mxu0 %v1601
    %1705 = vmatpush.msra.mxu0 %v1597
    %1706 = vmatpush.msra.mxu0 %v1593
    %1707 = vmatpush.msra.mxu0 %v1589
    %1708 = vmatpush.msra.mxu0 %v1585
    %1709 = vmatpush.msra.mxu0 %v1581
    %1710 = vmatpush.msra.mxu0 %v1577
    %1711 = vmatpush.msra.mxu0 %v1573
    %1712 = vmatpush.msra.mxu0 %v1569
    %1713 = vmatpush.msra.mxu0 %v1565
    %1714 = vmatpush.msra.mxu0 %v1561
    %1715 = vmatmul.f32.gmra.mxu0 %v1627
    %v1716 = vpop.f32.mrf.mxu0
    %v1717 = vadd.f32 %v1697, %v1716
    %1718 = vdwg.mxu0
    %1719 = vmatpush.msra.mxu0 %v1558
    %1720 = vmatpush.msra.mxu0 %v1554
    %1721 = vmatpush.msra.mxu0 %v1550
    %1722 = vmatpush.msra.mxu0 %v1546
    %1723 = vmatpush.msra.mxu0 %v1542
    %1724 = vmatpush.msra.mxu0 %v1538
    %1725 = vmatpush.msra.mxu0 %v1534
    %1726 = vmatpush.msra.mxu0 %v1530
    %1727 = vmatpush.msra.mxu0 %v1526
    %1728 = vmatpush.msra.mxu0 %v1522
    %1729 = vmatpush.msra.mxu0 %v1518
    %1730 = vmatpush.msra.mxu0 %v1514
    %1731 = vmatpush.msra.mxu0 %v1510
    %1732 = vmatpush.msra.mxu0 %v1506
    %1733 = vmatpush.msra.mxu0 %v1502
    %1734 = vmatpush.msra.mxu0 %v1498
    %1735 = vmatmul.f32.gmra.mxu0 %v1626
    %v1736 = vpop.f32.mrf.mxu0
    %v1737 = vadd.f32 %v1633, %v1736
    %1738 = vdwg.mxu0
    %1739 = vmatpush.msra.mxu0 %v1622
    %1740 = vmatpush.msra.mxu0 %v1618
    %1741 = vmatpush.msra.mxu0 %v1614
    %1742 = vmatpush.msra.mxu0 %v1610
    %1743 = vmatpush.msra.mxu0 %v1606
    %1744 = vmatpush.msra.mxu0 %v1602
    %1745 = vmatpush.msra.mxu0 %v1598
    %1746 = vmatpush.msra.mxu0 %v1594
    %1747 = vmatpush.msra.mxu0 %v1590
    %1748 = vmatpush.msra.mxu0 %v1586
    %1749 = vmatpush.msra.mxu0 %v1582
    %1750 = vmatpush.msra.mxu0 %v1578
    %1751 = vmatpush.msra.mxu0 %v1574
    %1752 = vmatpush.msra.mxu0 %v1570
    %1753 = vmatpush.msra.mxu0 %v1566
    %1754 = vmatpush.msra.mxu0 %v1562
    %1755 = vmatmul.f32.gmra.mxu0 %v1627
    %v1756 = vpop.f32.mrf.mxu0
    %v1757 = vadd.f32 %v1737, %v1756
    %1758 = vdwg.mxu0
    %1759 = vmatpush.msra.mxu0 %v1559
    %1760 = vmatpush.msra.mxu0 %v1555
    %1761 = vmatpush.msra.mxu0 %v1551
    %1762 = vmatpush.msra.mxu0 %v1547
    %1763 = vmatpush.msra.mxu0 %v1543
    %1764 = vmatpush.msra.mxu0 %v1539
    %1765 = vmatpush.msra.mxu0 %v1535
    %1766 = vmatpush.msra.mxu0 %v1531
    %1767 = vmatpush.msra.mxu0 %v1527
    %1768 = vmatpush.msra.mxu0 %v1523
    %1769 = vmatpush.msra.mxu0 %v1519
    %1770 = vmatpush.msra.mxu0 %v1515
    %1771 = vmatpush.msra.mxu0 %v1511
    %1772 = vmatpush.msra.mxu0 %v1507
    %1773 = vmatpush.msra.mxu0 %v1503
    %1774 = vmatpush.msra.mxu0 %v1499
    %1775 = vmatmul.f32.gmra.mxu0 %v1626
    %v1776 = vpop.f32.mrf.mxu0
    %v1777 = vadd.f32 %v1634, %v1776
    %1778 = vdwg.mxu0
    %1779 = vmatpush.msra.mxu0 %v1623
    %1780 = vmatpush.msra.mxu0 %v1619
    %1781 = vmatpush.msra.mxu0 %v1615
    %1782 = vmatpush.msra.mxu0 %v1611
    %1783 = vmatpush.msra.mxu0 %v1607
    %1784 = vmatpush.msra.mxu0 %v1603
    %1785 = vmatpush.msra.mxu0 %v1599
    %1786 = vmatpush.msra.mxu0 %v1595
    %1787 = vmatpush.msra.mxu0 %v1591
    %1788 = vmatpush.msra.mxu0 %v1587
    %1789 = vmatpush.msra.mxu0 %v1583
    %1790 = vmatpush.msra.mxu0 %v1579
    %1791 = vmatpush.msra.mxu0 %v1575
    %1792 = vmatpush.msra.mxu0 %v1571
    %1793 = vmatpush.msra.mxu0 %v1567
    %1794 = vmatpush.msra.mxu0 %v1563
    %1795 = vmatmul.f32.gmra.mxu0 %v1627
    %v1796 = vpop.f32.mrf.mxu0
    %v1797 = vadd.f32 %v1777, %v1796
    %1798 = vdwg.mxu0
    %v1799 = vxor.u32 %v1677, 2147483648
    %v1800 = vmul.f32 %v1799, 1.442695
    %v1801 = vpow.pop %v1800
    %v1802 = vadd.f32 %v1801, 1.0
    %v1803 = vrcp.pop %v1802
    %v1804 = vmul.f32 %v1802, %v1803
    %v1805 = vsub.f32 1.0, %v1804
    %v1806 = vmul.f32 %v1803, %v1805
    %v1807 = vadd.f32 %v1803, %v1806
    %vm1808 = vweird.f32 %v1802
    %vm1809 = vweird.f32 %v1803
    %vm1810 = vmor %vm1808, %vm1809
    %v1811 = vsel %vm1810, %v1803, %v1807
    %v1812 = vand.u32 2147483647, %v1802
    %vm1813 = vcmp.eq.f32.partialorder %v1812, 8.507059e+37
    %v1814 = vand.u32 %v1802, 2147483648
    %v1815 = vor.u32 1.1754944e-38, %v1814
    %v1816 = vsel %vm1813, %v1815, %v1811
    %v1817 = vmul.f32 1.0, %v1816
    %v1818 = vxor.u32 %v1717, 2147483648
    %v1819 = vmul.f32 %v1818, 1.442695
    %v1820 = vpow.pop %v1819
    %v1821 = vadd.f32 %v1820, 1.0
    %v1822 = vrcp.pop %v1821
    %v1823 = vmul.f32 %v1821, %v1822
    %v1824 = vsub.f32 1.0, %v1823
    %v1825 = vmul.f32 %v1822, %v1824
    %v1826 = vadd.f32 %v1822, %v1825
    %vm1827 = vweird.f32 %v1821
    %vm1828 = vweird.f32 %v1822
    %vm1829 = vmor %vm1827, %vm1828
    %v1830 = vsel %vm1829, %v1822, %v1826
    %v1831 = vand.u32 2147483647, %v1821
    %vm1832 = vcmp.eq.f32.partialorder %v1831, 8.507059e+37
    %v1833 = vand.u32 %v1821, 2147483648
    %v1834 = vor.u32 1.1754944e-38, %v1833
    %v1835 = vsel %vm1832, %v1834, %v1830
    %v1836 = vmul.f32 1.0, %v1835
    %v1837 = vmul.f32 %v1817, %v1797
    %v1838 = vadd.f32 %v1757, %v1837
    %v1839 = vtanh.pop %v1838
    %v1840 = vsub.f32 1.0, %v1836
    %v1841 = vmul.f32 %v1840, %v1839
    %v1842 = vmul.f32 %v1836, %v1488
    %v1843 = vadd.f32 %v1841, %v1842
    %s1844 = sadd.s32 %s65, 5
    %s1845 = sld [smem:[#allocation5 + %s1844]]
    %s1846 = scalar_lea.vmem [#allocation6], %s1845
    %v1847 = vld [vmem:[%s1846] sm:$0x1]
    %1848 = vst.msk [vmem:[#allocation3] sm:$0x1] %vm72, %v1847
    %1849 = vst.msk [vmem:[#allocation3 + $0x1] sm:$0x1] %vm72, %v1843
    %v1850 = vld [vmem:[#allocation3] sm:$0x3]
    %v1851 = vld [vmem:[#allocation8] sm:$0xff]
    %v1852 = vld [vmem:[#allocation8 + $0x8] sm:$0xff]
    %v1853 = vld [vmem:[#allocation8 + $0x10] sm:$0xff]
    %v1854 = vld [vmem:[#allocation8 + $0x18] sm:$0xff]
    %v1855 = vld [vmem:[#allocation8 + $0x20] sm:$0xff]
    %v1856 = vld [vmem:[#allocation8 + $0x28] sm:$0xff]
    %v1857 = vld [vmem:[#allocation8 + $0x30] sm:$0xff]
    %v1858 = vld [vmem:[#allocation8 + $0x38] sm:$0xff]
    %v1859 = vld [vmem:[#allocation8 + $0x40] sm:$0xff]
    %v1860 = vld [vmem:[#allocation8 + $0x48] sm:$0xff]
    %v1861 = vld [vmem:[#allocation8 + $0x50] sm:$0xff]
    %v1862 = vld [vmem:[#allocation8 + $0x58] sm:$0xff]
    %v1863 = vld [vmem:[#allocation8 + $0x60] sm:$0xff]
    %v1864 = vld [vmem:[#allocation8 + $0x68] sm:$0xff]
    %v1865 = vld [vmem:[#allocation8 + $0x70] sm:$0xff]
    %v1866 = vld [vmem:[#allocation8 + $0x78] sm:$0xff]
    %v1867 = vld [vmem:[#allocation8 + $0x80] sm:$0xff]
    %v1868 = vld [vmem:[#allocation8 + $0x88] sm:$0xff]
    %v1869 = vld [vmem:[#allocation8 + $0x90] sm:$0xff]
    %v1870 = vld [vmem:[#allocation8 + $0x98] sm:$0xff]
    %v1871 = vld [vmem:[#allocation8 + $0xa0] sm:$0xff]
    %v1872 = vld [vmem:[#allocation8 + $0xa8] sm:$0xff]
    %v1873 = vld [vmem:[#allocation8 + $0xb0] sm:$0xff]
    %v1874 = vld [vmem:[#allocation8 + $0xb8] sm:$0xff]
    %v1875 = vld [vmem:[#allocation8 + $0xc0] sm:$0xff]
    %v1876 = vld [vmem:[#allocation8 + $0xc8] sm:$0xff]
    %v1877 = vld [vmem:[#allocation8 + $0xd0] sm:$0xff]
    %v1878 = vld [vmem:[#allocation8 + $0xd8] sm:$0xff]
    %v1879 = vld [vmem:[#allocation8 + $0xe0] sm:$0xff]
    %v1880 = vld [vmem:[#allocation8 + $0xe8] sm:$0xff]
    %v1881 = vld [vmem:[#allocation8 + $0xf0] sm:$0xff]
    %v1882 = vld [vmem:[#allocation8 + $0xf8] sm:$0xff]
    %v1883 = vld [vmem:[#allocation8 + $0x100] sm:$0xff]
    %v1884 = vld [vmem:[#allocation8 + $0x108] sm:$0xff]
    %v1885 = vld [vmem:[#allocation8 + $0x110] sm:$0xff]
    %v1886 = vld [vmem:[#allocation8 + $0x118] sm:$0xff]
    %v1887 = vld [vmem:[#allocation8 + $0x120] sm:$0xff]
    %v1888 = vld [vmem:[#allocation8 + $0x128] sm:$0xff]
    %v1889 = vld [vmem:[#allocation8 + $0x130] sm:$0xff]
    %v1890 = vld [vmem:[#allocation8 + $0x138] sm:$0xff]
    %v1891 = vld [vmem:[#allocation8 + $0x140] sm:$0xff]
    %v1892 = vld [vmem:[#allocation8 + $0x148] sm:$0xff]
    %v1893 = vld [vmem:[#allocation8 + $0x150] sm:$0xff]
    %v1894 = vld [vmem:[#allocation8 + $0x158] sm:$0xff]
    %v1895 = vld [vmem:[#allocation8 + $0x160] sm:$0xff]
    %v1896 = vld [vmem:[#allocation8 + $0x168] sm:$0xff]
    %v1897 = vld [vmem:[#allocation8 + $0x170] sm:$0xff]
    %v1898 = vld [vmem:[#allocation8 + $0x178] sm:$0xff]
    %v1899 = vld [vmem:[#allocation8 + $0x180] sm:$0xff]
    %v1900 = vld [vmem:[#allocation8 + $0x188] sm:$0xff]
    %v1901 = vld [vmem:[#allocation8 + $0x190] sm:$0xff]
    %v1902 = vld [vmem:[#allocation8 + $0x198] sm:$0xff]
    %v1903 = vld [vmem:[#allocation8 + $0x1a0] sm:$0xff]
    %v1904 = vld [vmem:[#allocation8 + $0x1a8] sm:$0xff]
    %v1905 = vld [vmem:[#allocation8 + $0x1b0] sm:$0xff]
    %v1906 = vld [vmem:[#allocation8 + $0x1b8] sm:$0xff]
    %v1907 = vld [vmem:[#allocation8 + $0x1c0] sm:$0xff]
    %v1908 = vld [vmem:[#allocation8 + $0x1c8] sm:$0xff]
    %v1909 = vld [vmem:[#allocation8 + $0x1d0] sm:$0xff]
    %v1910 = vld [vmem:[#allocation8 + $0x1d8] sm:$0xff]
    %v1911 = vld [vmem:[#allocation8 + $0x1e0] sm:$0xff]
    %v1912 = vld [vmem:[#allocation8 + $0x1e8] sm:$0xff]
    %v1913 = vld [vmem:[#allocation8 + $0x1f0] sm:$0xff]
    %v1914 = vld [vmem:[#allocation8 + $0x1f8] sm:$0xff]
    %v1915 = vld [vmem:[#allocation8 + $0x200] sm:$0xff]
    %v1916 = vld [vmem:[#allocation8 + $0x208] sm:$0xff]
    %v1917 = vld [vmem:[#allocation8 + $0x210] sm:$0xff]
    %v1918 = vld [vmem:[#allocation8 + $0x218] sm:$0xff]
    %v1919 = vld [vmem:[#allocation8 + $0x220] sm:$0xff]
    %v1920 = vld [vmem:[#allocation8 + $0x228] sm:$0xff]
    %v1921 = vld [vmem:[#allocation8 + $0x230] sm:$0xff]
    %v1922 = vld [vmem:[#allocation8 + $0x238] sm:$0xff]
    %v1923 = vld [vmem:[#allocation8 + $0x240] sm:$0xff]
    %v1924 = vld [vmem:[#allocation8 + $0x248] sm:$0xff]
    %v1925 = vld [vmem:[#allocation8 + $0x250] sm:$0xff]
    %v1926 = vld [vmem:[#allocation8 + $0x258] sm:$0xff]
    %v1927 = vld [vmem:[#allocation8 + $0x260] sm:$0xff]
    %v1928 = vld [vmem:[#allocation8 + $0x268] sm:$0xff]
    %v1929 = vld [vmem:[#allocation8 + $0x270] sm:$0xff]
    %v1930 = vld [vmem:[#allocation8 + $0x278] sm:$0xff]
    %v1931 = vld [vmem:[#allocation8 + $0x280] sm:$0xff]
    %v1932 = vld [vmem:[#allocation8 + $0x288] sm:$0xff]
    %v1933 = vld [vmem:[#allocation8 + $0x290] sm:$0xff]
    %v1934 = vld [vmem:[#allocation8 + $0x298] sm:$0xff]
    %v1935 = vld [vmem:[#allocation8 + $0x2a0] sm:$0xff]
    %v1936 = vld [vmem:[#allocation8 + $0x2a8] sm:$0xff]
    %v1937 = vld [vmem:[#allocation8 + $0x2b0] sm:$0xff]
    %v1938 = vld [vmem:[#allocation8 + $0x2b8] sm:$0xff]
    %v1939 = vld [vmem:[#allocation8 + $0x2c0] sm:$0xff]
    %v1940 = vld [vmem:[#allocation8 + $0x2c8] sm:$0xff]
    %v1941 = vld [vmem:[#allocation8 + $0x2d0] sm:$0xff]
    %v1942 = vld [vmem:[#allocation8 + $0x2d8] sm:$0xff]
    %v1943 = vld [vmem:[#allocation8 + $0x2e0] sm:$0xff]
    %v1944 = vld [vmem:[#allocation8 + $0x2e8] sm:$0xff]
    %v1945 = vld [vmem:[#allocation8 + $0x2f0] sm:$0xff]
    %v1946 = vld [vmem:[#allocation8 + $0x2f8] sm:$0xff]
    %v1947 = vld [vmem:[#allocation8 + $0x300] sm:$0xff]
    %v1948 = vld [vmem:[#allocation8 + $0x308] sm:$0xff]
    %v1949 = vld [vmem:[#allocation8 + $0x310] sm:$0xff]
    %v1950 = vld [vmem:[#allocation8 + $0x318] sm:$0xff]
    %v1951 = vld [vmem:[#allocation8 + $0x320] sm:$0xff]
    %v1952 = vld [vmem:[#allocation8 + $0x328] sm:$0xff]
    %v1953 = vld [vmem:[#allocation8 + $0x330] sm:$0xff]
    %v1954 = vld [vmem:[#allocation8 + $0x338] sm:$0xff]
    %v1955 = vld [vmem:[#allocation8 + $0x340] sm:$0xff]
    %v1956 = vld [vmem:[#allocation8 + $0x348] sm:$0xff]
    %v1957 = vld [vmem:[#allocation8 + $0x350] sm:$0xff]
    %v1958 = vld [vmem:[#allocation8 + $0x358] sm:$0xff]
    %v1959 = vld [vmem:[#allocation8 + $0x360] sm:$0xff]
    %v1960 = vld [vmem:[#allocation8 + $0x368] sm:$0xff]
    %v1961 = vld [vmem:[#allocation8 + $0x370] sm:$0xff]
    %v1962 = vld [vmem:[#allocation8 + $0x378] sm:$0xff]
    %v1963 = vld [vmem:[#allocation8 + $0x380] sm:$0xff]
    %v1964 = vld [vmem:[#allocation8 + $0x388] sm:$0xff]
    %v1965 = vld [vmem:[#allocation8 + $0x390] sm:$0xff]
    %v1966 = vld [vmem:[#allocation8 + $0x398] sm:$0xff]
    %v1967 = vld [vmem:[#allocation8 + $0x3a0] sm:$0xff]
    %v1968 = vld [vmem:[#allocation8 + $0x3a8] sm:$0xff]
    %v1969 = vld [vmem:[#allocation8 + $0x3b0] sm:$0xff]
    %v1970 = vld [vmem:[#allocation8 + $0x3b8] sm:$0xff]
    %v1971 = vld [vmem:[#allocation8 + $0x3c0] sm:$0xff]
    %v1972 = vld [vmem:[#allocation8 + $0x3c8] sm:$0xff]
    %v1973 = vld [vmem:[#allocation8 + $0x3d0] sm:$0xff]
    %v1974 = vld [vmem:[#allocation8 + $0x3d8] sm:$0xff]
    %v1975 = vld [vmem:[#allocation8 + $0x3e0] sm:$0xff]
    %v1976 = vld [vmem:[#allocation8 + $0x3e8] sm:$0xff]
    %v1977 = vld [vmem:[#allocation8 + $0x3f0] sm:$0xff]
    %v1978 = vld [vmem:[#allocation8 + $0x3f8] sm:$0xff]
    %v1979 = vld [vmem:[%s4] sm:$0xf]
    %v1981 = vperm.slane %v1850, 0
    %v1982 = vperm.slane %v1850, 1
    %v1986 = vperm.slane %v1979, 0
    %v1987 = vperm.slane %v1979, 1
    %v1988 = vperm.slane %v1979, 2
    %v1989 = vperm.slane %v1979, 3
    %1994 = vmatpush.msra.mxu0 %v1911
    %1995 = vmatpush.msra.mxu0 %v1907
    %1996 = vmatpush.msra.mxu0 %v1903
    %1997 = vmatpush.msra.mxu0 %v1899
    %1998 = vmatpush.msra.mxu0 %v1895
    %1999 = vmatpush.msra.mxu0 %v1891
    %2000 = vmatpush.msra.mxu0 %v1887
    %2001 = vmatpush.msra.mxu0 %v1883
    %2002 = vmatpush.msra.mxu0 %v1879
    %2003 = vmatpush.msra.mxu0 %v1875
    %2004 = vmatpush.msra.mxu0 %v1871
    %2005 = vmatpush.msra.mxu0 %v1867
    %2006 = vmatpush.msra.mxu0 %v1863
    %2007 = vmatpush.msra.mxu0 %v1859
    %2008 = vmatpush.msra.mxu0 %v1855
    %2009 = vmatpush.msra.mxu0 %v1851
    %2010 = vmatmul.f32.gmra.mxu0 %v1981
    %v2011 = vpop.f32.mrf.mxu0
    %v2012 = vadd.f32 %v1986, %v2011
    %2013 = vdwg.mxu0
    %2014 = vmatpush.msra.mxu0 %v1975
    %2015 = vmatpush.msra.mxu0 %v1971
    %2016 = vmatpush.msra.mxu0 %v1967
    %2017 = vmatpush.msra.mxu0 %v1963
    %2018 = vmatpush.msra.mxu0 %v1959
    %2019 = vmatpush.msra.mxu0 %v1955
    %2020 = vmatpush.msra.mxu0 %v1951
    %2021 = vmatpush.msra.mxu0 %v1947
    %2022 = vmatpush.msra.mxu0 %v1943
    %2023 = vmatpush.msra.mxu0 %v1939
    %2024 = vmatpush.msra.mxu0 %v1935
    %2025 = vmatpush.msra.mxu0 %v1931
    %2026 = vmatpush.msra.mxu0 %v1927
    %2027 = vmatpush.msra.mxu0 %v1923
    %2028 = vmatpush.msra.mxu0 %v1919
    %2029 = vmatpush.msra.mxu0 %v1915
    %2030 = vmatmul.f32.gmra.mxu0 %v1982
    %v2031 = vpop.f32.mrf.mxu0
    %v2032 = vadd.f32 %v2012, %v2031
    %2033 = vdwg.mxu0
    %2034 = vmatpush.msra.mxu0 %v1912
    %2035 = vmatpush.msra.mxu0 %v1908
    %2036 = vmatpush.msra.mxu0 %v1904
    %2037 = vmatpush.msra.mxu0 %v1900
    %2038 = vmatpush.msra.mxu0 %v1896
    %2039 = vmatpush.msra.mxu0 %v1892
    %2040 = vmatpush.msra.mxu0 %v1888
    %2041 = vmatpush.msra.mxu0 %v1884
    %2042 = vmatpush.msra.mxu0 %v1880
    %2043 = vmatpush.msra.mxu0 %v1876
    %2044 = vmatpush.msra.mxu0 %v1872
    %2045 = vmatpush.msra.mxu0 %v1868
    %2046 = vmatpush.msra.mxu0 %v1864
    %2047 = vmatpush.msra.mxu0 %v1860
    %2048 = vmatpush.msra.mxu0 %v1856
    %2049 = vmatpush.msra.mxu0 %v1852
    %2050 = vmatmul.f32.gmra.mxu0 %v1981
    %v2051 = vpop.f32.mrf.mxu0
    %v2052 = vadd.f32 %v1987, %v2051
    %2053 = vdwg.mxu0
    %2054 = vmatpush.msra.mxu0 %v1976
    %2055 = vmatpush.msra.mxu0 %v1972
    %2056 = vmatpush.msra.mxu0 %v1968
    %2057 = vmatpush.msra.mxu0 %v1964
    %2058 = vmatpush.msra.mxu0 %v1960
    %2059 = vmatpush.msra.mxu0 %v1956
    %2060 = vmatpush.msra.mxu0 %v1952
    %2061 = vmatpush.msra.mxu0 %v1948
    %2062 = vmatpush.msra.mxu0 %v1944
    %2063 = vmatpush.msra.mxu0 %v1940
    %2064 = vmatpush.msra.mxu0 %v1936
    %2065 = vmatpush.msra.mxu0 %v1932
    %2066 = vmatpush.msra.mxu0 %v1928
    %2067 = vmatpush.msra.mxu0 %v1924
    %2068 = vmatpush.msra.mxu0 %v1920
    %2069 = vmatpush.msra.mxu0 %v1916
    %2070 = vmatmul.f32.gmra.mxu0 %v1982
    %v2071 = vpop.f32.mrf.mxu0
    %v2072 = vadd.f32 %v2052, %v2071
    %2073 = vdwg.mxu0
    %2074 = vmatpush.msra.mxu0 %v1913
    %2075 = vmatpush.msra.mxu0 %v1909
    %2076 = vmatpush.msra.mxu0 %v1905
    %2077 = vmatpush.msra.mxu0 %v1901
    %2078 = vmatpush.msra.mxu0 %v1897
    %2079 = vmatpush.msra.mxu0 %v1893
    %2080 = vmatpush.msra.mxu0 %v1889
    %2081 = vmatpush.msra.mxu0 %v1885
    %2082 = vmatpush.msra.mxu0 %v1881
    %2083 = vmatpush.msra.mxu0 %v1877
    %2084 = vmatpush.msra.mxu0 %v1873
    %2085 = vmatpush.msra.mxu0 %v1869
    %2086 = vmatpush.msra.mxu0 %v1865
    %2087 = vmatpush.msra.mxu0 %v1861
    %2088 = vmatpush.msra.mxu0 %v1857
    %2089 = vmatpush.msra.mxu0 %v1853
    %2090 = vmatmul.f32.gmra.mxu0 %v1981
    %v2091 = vpop.f32.mrf.mxu0
    %v2092 = vadd.f32 %v1988, %v2091
    %2093 = vdwg.mxu0
    %2094 = vmatpush.msra.mxu0 %v1977
    %2095 = vmatpush.msra.mxu0 %v1973
    %2096 = vmatpush.msra.mxu0 %v1969
    %2097 = vmatpush.msra.mxu0 %v1965
    %2098 = vmatpush.msra.mxu0 %v1961
    %2099 = vmatpush.msra.mxu0 %v1957
    %2100 = vmatpush.msra.mxu0 %v1953
    %2101 = vmatpush.msra.mxu0 %v1949
    %2102 = vmatpush.msra.mxu0 %v1945
    %2103 = vmatpush.msra.mxu0 %v1941
    %2104 = vmatpush.msra.mxu0 %v1937
    %2105 = vmatpush.msra.mxu0 %v1933
    %2106 = vmatpush.msra.mxu0 %v1929
    %2107 = vmatpush.msra.mxu0 %v1925
    %2108 = vmatpush.msra.mxu0 %v1921
    %2109 = vmatpush.msra.mxu0 %v1917
    %2110 = vmatmul.f32.gmra.mxu0 %v1982
    %v2111 = vpop.f32.mrf.mxu0
    %v2112 = vadd.f32 %v2092, %v2111
    %2113 = vdwg.mxu0
    %2114 = vmatpush.msra.mxu0 %v1914
    %2115 = vmatpush.msra.mxu0 %v1910
    %2116 = vmatpush.msra.mxu0 %v1906
    %2117 = vmatpush.msra.mxu0 %v1902
    %2118 = vmatpush.msra.mxu0 %v1898
    %2119 = vmatpush.msra.mxu0 %v1894
    %2120 = vmatpush.msra.mxu0 %v1890
    %2121 = vmatpush.msra.mxu0 %v1886
    %2122 = vmatpush.msra.mxu0 %v1882
    %2123 = vmatpush.msra.mxu0 %v1878
    %2124 = vmatpush.msra.mxu0 %v1874
    %2125 = vmatpush.msra.mxu0 %v1870
    %2126 = vmatpush.msra.mxu0 %v1866
    %2127 = vmatpush.msra.mxu0 %v1862
    %2128 = vmatpush.msra.mxu0 %v1858
    %2129 = vmatpush.msra.mxu0 %v1854
    %2130 = vmatmul.f32.gmra.mxu0 %v1981
    %v2131 = vpop.f32.mrf.mxu0
    %v2132 = vadd.f32 %v1989, %v2131
    %2133 = vdwg.mxu0
    %2134 = vmatpush.msra.mxu0 %v1978
    %2135 = vmatpush.msra.mxu0 %v1974
    %2136 = vmatpush.msra.mxu0 %v1970
    %2137 = vmatpush.msra.mxu0 %v1966
    %2138 = vmatpush.msra.mxu0 %v1962
    %2139 = vmatpush.msra.mxu0 %v1958
    %2140 = vmatpush.msra.mxu0 %v1954
    %2141 = vmatpush.msra.mxu0 %v1950
    %2142 = vmatpush.msra.mxu0 %v1946
    %2143 = vmatpush.msra.mxu0 %v1942
    %2144 = vmatpush.msra.mxu0 %v1938
    %2145 = vmatpush.msra.mxu0 %v1934
    %2146 = vmatpush.msra.mxu0 %v1930
    %2147 = vmatpush.msra.mxu0 %v1926
    %2148 = vmatpush.msra.mxu0 %v1922
    %2149 = vmatpush.msra.mxu0 %v1918
    %2150 = vmatmul.f32.gmra.mxu0 %v1982
    %v2151 = vpop.f32.mrf.mxu0
    %v2152 = vadd.f32 %v2132, %v2151
    %2153 = vdwg.mxu0
    %v2154 = vxor.u32 %v2032, 2147483648
    %v2155 = vmul.f32 %v2154, 1.442695
    %v2156 = vpow.pop %v2155
    %v2157 = vadd.f32 %v2156, 1.0
    %v2158 = vrcp.pop %v2157
    %v2159 = vmul.f32 %v2157, %v2158
    %v2160 = vsub.f32 1.0, %v2159
    %v2161 = vmul.f32 %v2158, %v2160
    %v2162 = vadd.f32 %v2158, %v2161
    %vm2163 = vweird.f32 %v2157
    %vm2164 = vweird.f32 %v2158
    %vm2165 = vmor %vm2163, %vm2164
    %v2166 = vsel %vm2165, %v2158, %v2162
    %v2167 = vand.u32 2147483647, %v2157
    %vm2168 = vcmp.eq.f32.partialorder %v2167, 8.507059e+37
    %v2169 = vand.u32 %v2157, 2147483648
    %v2170 = vor.u32 1.1754944e-38, %v2169
    %v2171 = vsel %vm2168, %v2170, %v2166
    %v2172 = vmul.f32 1.0, %v2171
    %v2173 = vxor.u32 %v2072, 2147483648
    %v2174 = vmul.f32 %v2173, 1.442695
    %v2175 = vpow.pop %v2174
    %v2176 = vadd.f32 %v2175, 1.0
    %v2177 = vrcp.pop %v2176
    %v2178 = vmul.f32 %v2176, %v2177
    %v2179 = vsub.f32 1.0, %v2178
    %v2180 = vmul.f32 %v2177, %v2179
    %v2181 = vadd.f32 %v2177, %v2180
    %vm2182 = vweird.f32 %v2176
    %vm2183 = vweird.f32 %v2177
    %vm2184 = vmor %vm2182, %vm2183
    %v2185 = vsel %vm2184, %v2177, %v2181
    %v2186 = vand.u32 2147483647, %v2176
    %vm2187 = vcmp.eq.f32.partialorder %v2186, 8.507059e+37
    %v2188 = vand.u32 %v2176, 2147483648
    %v2189 = vor.u32 1.1754944e-38, %v2188
    %v2190 = vsel %vm2187, %v2189, %v2185
    %v2191 = vmul.f32 1.0, %v2190
    %v2192 = vmul.f32 %v2172, %v2152
    %v2193 = vadd.f32 %v2112, %v2192
    %v2194 = vtanh.pop %v2193
    %v2195 = vsub.f32 1.0, %v2191
    %v2196 = vmul.f32 %v2195, %v2194
    %v2197 = vmul.f32 %v2191, %v1843
    %v2198 = vadd.f32 %v2196, %v2197
    %s2199 = sadd.s32 %s65, 6
    %s2200 = sld [smem:[#allocation5 + %s2199]]
    %s2201 = scalar_lea.vmem [#allocation6], %s2200
    %v2202 = vld [vmem:[%s2201] sm:$0x1]
    %2203 = vst.msk [vmem:[#allocation3] sm:$0x1] %vm72, %v2202
    %2204 = vst.msk [vmem:[#allocation3 + $0x1] sm:$0x1] %vm72, %v2198
    %v2205 = vld [vmem:[#allocation3] sm:$0x3]
    %v2206 = vld [vmem:[#allocation8] sm:$0xff]
    %v2207 = vld [vmem:[#allocation8 + $0x8] sm:$0xff]
    %v2208 = vld [vmem:[#allocation8 + $0x10] sm:$0xff]
    %v2209 = vld [vmem:[#allocation8 + $0x18] sm:$0xff]
    %v2210 = vld [vmem:[#allocation8 + $0x20] sm:$0xff]
    %v2211 = vld [vmem:[#allocation8 + $0x28] sm:$0xff]
    %v2212 = vld [vmem:[#allocation8 + $0x30] sm:$0xff]
    %v2213 = vld [vmem:[#allocation8 + $0x38] sm:$0xff]
    %v2214 = vld [vmem:[#allocation8 + $0x40] sm:$0xff]
    %v2215 = vld [vmem:[#allocation8 + $0x48] sm:$0xff]
    %v2216 = vld [vmem:[#allocation8 + $0x50] sm:$0xff]
    %v2217 = vld [vmem:[#allocation8 + $0x58] sm:$0xff]
    %v2218 = vld [vmem:[#allocation8 + $0x60] sm:$0xff]
    %v2219 = vld [vmem:[#allocation8 + $0x68] sm:$0xff]
    %v2220 = vld [vmem:[#allocation8 + $0x70] sm:$0xff]
    %v2221 = vld [vmem:[#allocation8 + $0x78] sm:$0xff]
    %v2222 = vld [vmem:[#allocation8 + $0x80] sm:$0xff]
    %v2223 = vld [vmem:[#allocation8 + $0x88] sm:$0xff]
    %v2224 = vld [vmem:[#allocation8 + $0x90] sm:$0xff]
    %v2225 = vld [vmem:[#allocation8 + $0x98] sm:$0xff]
    %v2226 = vld [vmem:[#allocation8 + $0xa0] sm:$0xff]
    %v2227 = vld [vmem:[#allocation8 + $0xa8] sm:$0xff]
    %v2228 = vld [vmem:[#allocation8 + $0xb0] sm:$0xff]
    %v2229 = vld [vmem:[#allocation8 + $0xb8] sm:$0xff]
    %v2230 = vld [vmem:[#allocation8 + $0xc0] sm:$0xff]
    %v2231 = vld [vmem:[#allocation8 + $0xc8] sm:$0xff]
    %v2232 = vld [vmem:[#allocation8 + $0xd0] sm:$0xff]
    %v2233 = vld [vmem:[#allocation8 + $0xd8] sm:$0xff]
    %v2234 = vld [vmem:[#allocation8 + $0xe0] sm:$0xff]
    %v2235 = vld [vmem:[#allocation8 + $0xe8] sm:$0xff]
    %v2236 = vld [vmem:[#allocation8 + $0xf0] sm:$0xff]
    %v2237 = vld [vmem:[#allocation8 + $0xf8] sm:$0xff]
    %v2238 = vld [vmem:[#allocation8 + $0x100] sm:$0xff]
    %v2239 = vld [vmem:[#allocation8 + $0x108] sm:$0xff]
    %v2240 = vld [vmem:[#allocation8 + $0x110] sm:$0xff]
    %v2241 = vld [vmem:[#allocation8 + $0x118] sm:$0xff]
    %v2242 = vld [vmem:[#allocation8 + $0x120] sm:$0xff]
    %v2243 = vld [vmem:[#allocation8 + $0x128] sm:$0xff]
    %v2244 = vld [vmem:[#allocation8 + $0x130] sm:$0xff]
    %v2245 = vld [vmem:[#allocation8 + $0x138] sm:$0xff]
    %v2246 = vld [vmem:[#allocation8 + $0x140] sm:$0xff]
    %v2247 = vld [vmem:[#allocation8 + $0x148] sm:$0xff]
    %v2248 = vld [vmem:[#allocation8 + $0x150] sm:$0xff]
    %v2249 = vld [vmem:[#allocation8 + $0x158] sm:$0xff]
    %v2250 = vld [vmem:[#allocation8 + $0x160] sm:$0xff]
    %v2251 = vld [vmem:[#allocation8 + $0x168] sm:$0xff]
    %v2252 = vld [vmem:[#allocation8 + $0x170] sm:$0xff]
    %v2253 = vld [vmem:[#allocation8 + $0x178] sm:$0xff]
    %v2254 = vld [vmem:[#allocation8 + $0x180] sm:$0xff]
    %v2255 = vld [vmem:[#allocation8 + $0x188] sm:$0xff]
    %v2256 = vld [vmem:[#allocation8 + $0x190] sm:$0xff]
    %v2257 = vld [vmem:[#allocation8 + $0x198] sm:$0xff]
    %v2258 = vld [vmem:[#allocation8 + $0x1a0] sm:$0xff]
    %v2259 = vld [vmem:[#allocation8 + $0x1a8] sm:$0xff]
    %v2260 = vld [vmem:[#allocation8 + $0x1b0] sm:$0xff]
    %v2261 = vld [vmem:[#allocation8 + $0x1b8] sm:$0xff]
    %v2262 = vld [vmem:[#allocation8 + $0x1c0] sm:$0xff]
    %v2263 = vld [vmem:[#allocation8 + $0x1c8] sm:$0xff]
    %v2264 = vld [vmem:[#allocation8 + $0x1d0] sm:$0xff]
    %v2265 = vld [vmem:[#allocation8 + $0x1d8] sm:$0xff]
    %v2266 = vld [vmem:[#allocation8 + $0x1e0] sm:$0xff]
    %v2267 = vld [vmem:[#allocation8 + $0x1e8] sm:$0xff]
    %v2268 = vld [vmem:[#allocation8 + $0x1f0] sm:$0xff]
    %v2269 = vld [vmem:[#allocation8 + $0x1f8] sm:$0xff]
    %v2270 = vld [vmem:[#allocation8 + $0x200] sm:$0xff]
    %v2271 = vld [vmem:[#allocation8 + $0x208] sm:$0xff]
    %v2272 = vld [vmem:[#allocation8 + $0x210] sm:$0xff]
    %v2273 = vld [vmem:[#allocation8 + $0x218] sm:$0xff]
    %v2274 = vld [vmem:[#allocation8 + $0x220] sm:$0xff]
    %v2275 = vld [vmem:[#allocation8 + $0x228] sm:$0xff]
    %v2276 = vld [vmem:[#allocation8 + $0x230] sm:$0xff]
    %v2277 = vld [vmem:[#allocation8 + $0x238] sm:$0xff]
    %v2278 = vld [vmem:[#allocation8 + $0x240] sm:$0xff]
    %v2279 = vld [vmem:[#allocation8 + $0x248] sm:$0xff]
    %v2280 = vld [vmem:[#allocation8 + $0x250] sm:$0xff]
    %v2281 = vld [vmem:[#allocation8 + $0x258] sm:$0xff]
    %v2282 = vld [vmem:[#allocation8 + $0x260] sm:$0xff]
    %v2283 = vld [vmem:[#allocation8 + $0x268] sm:$0xff]
    %v2284 = vld [vmem:[#allocation8 + $0x270] sm:$0xff]
    %v2285 = vld [vmem:[#allocation8 + $0x278] sm:$0xff]
    %v2286 = vld [vmem:[#allocation8 + $0x280] sm:$0xff]
    %v2287 = vld [vmem:[#allocation8 + $0x288] sm:$0xff]
    %v2288 = vld [vmem:[#allocation8 + $0x290] sm:$0xff]
    %v2289 = vld [vmem:[#allocation8 + $0x298] sm:$0xff]
    %v2290 = vld [vmem:[#allocation8 + $0x2a0] sm:$0xff]
    %v2291 = vld [vmem:[#allocation8 + $0x2a8] sm:$0xff]
    %v2292 = vld [vmem:[#allocation8 + $0x2b0] sm:$0xff]
    %v2293 = vld [vmem:[#allocation8 + $0x2b8] sm:$0xff]
    %v2294 = vld [vmem:[#allocation8 + $0x2c0] sm:$0xff]
    %v2295 = vld [vmem:[#allocation8 + $0x2c8] sm:$0xff]
    %v2296 = vld [vmem:[#allocation8 + $0x2d0] sm:$0xff]
    %v2297 = vld [vmem:[#allocation8 + $0x2d8] sm:$0xff]
    %v2298 = vld [vmem:[#allocation8 + $0x2e0] sm:$0xff]
    %v2299 = vld [vmem:[#allocation8 + $0x2e8] sm:$0xff]
    %v2300 = vld [vmem:[#allocation8 + $0x2f0] sm:$0xff]
    %v2301 = vld [vmem:[#allocation8 + $0x2f8] sm:$0xff]
    %v2302 = vld [vmem:[#allocation8 + $0x300] sm:$0xff]
    %v2303 = vld [vmem:[#allocation8 + $0x308] sm:$0xff]
    %v2304 = vld [vmem:[#allocation8 + $0x310] sm:$0xff]
    %v2305 = vld [vmem:[#allocation8 + $0x318] sm:$0xff]
    %v2306 = vld [vmem:[#allocation8 + $0x320] sm:$0xff]
    %v2307 = vld [vmem:[#allocation8 + $0x328] sm:$0xff]
    %v2308 = vld [vmem:[#allocation8 + $0x330] sm:$0xff]
    %v2309 = vld [vmem:[#allocation8 + $0x338] sm:$0xff]
    %v2310 = vld [vmem:[#allocation8 + $0x340] sm:$0xff]
    %v2311 = vld [vmem:[#allocation8 + $0x348] sm:$0xff]
    %v2312 = vld [vmem:[#allocation8 + $0x350] sm:$0xff]
    %v2313 = vld [vmem:[#allocation8 + $0x358] sm:$0xff]
    %v2314 = vld [vmem:[#allocation8 + $0x360] sm:$0xff]
    %v2315 = vld [vmem:[#allocation8 + $0x368] sm:$0xff]
    %v2316 = vld [vmem:[#allocation8 + $0x370] sm:$0xff]
    %v2317 = vld [vmem:[#allocation8 + $0x378] sm:$0xff]
    %v2318 = vld [vmem:[#allocation8 + $0x380] sm:$0xff]
    %v2319 = vld [vmem:[#allocation8 + $0x388] sm:$0xff]
    %v2320 = vld [vmem:[#allocation8 + $0x390] sm:$0xff]
    %v2321 = vld [vmem:[#allocation8 + $0x398] sm:$0xff]
    %v2322 = vld [vmem:[#allocation8 + $0x3a0] sm:$0xff]
    %v2323 = vld [vmem:[#allocation8 + $0x3a8] sm:$0xff]
    %v2324 = vld [vmem:[#allocation8 + $0x3b0] sm:$0xff]
    %v2325 = vld [vmem:[#allocation8 + $0x3b8] sm:$0xff]
    %v2326 = vld [vmem:[#allocation8 + $0x3c0] sm:$0xff]
    %v2327 = vld [vmem:[#allocation8 + $0x3c8] sm:$0xff]
    %v2328 = vld [vmem:[#allocation8 + $0x3d0] sm:$0xff]
    %v2329 = vld [vmem:[#allocation8 + $0x3d8] sm:$0xff]
    %v2330 = vld [vmem:[#allocation8 + $0x3e0] sm:$0xff]
    %v2331 = vld [vmem:[#allocation8 + $0x3e8] sm:$0xff]
    %v2332 = vld [vmem:[#allocation8 + $0x3f0] sm:$0xff]
    %v2333 = vld [vmem:[#allocation8 + $0x3f8] sm:$0xff]
    %v2334 = vld [vmem:[%s4] sm:$0xf]
    %v2336 = vperm.slane %v2205, 0
    %v2337 = vperm.slane %v2205, 1
    %v2341 = vperm.slane %v2334, 0
    %v2342 = vperm.slane %v2334, 1
    %v2343 = vperm.slane %v2334, 2
    %v2344 = vperm.slane %v2334, 3
    %2349 = vmatpush.msra.mxu0 %v2266
    %2350 = vmatpush.msra.mxu0 %v2262
    %2351 = vmatpush.msra.mxu0 %v2258
    %2352 = vmatpush.msra.mxu0 %v2254
    %2353 = vmatpush.msra.mxu0 %v2250
    %2354 = vmatpush.msra.mxu0 %v2246
    %2355 = vmatpush.msra.mxu0 %v2242
    %2356 = vmatpush.msra.mxu0 %v2238
    %2357 = vmatpush.msra.mxu0 %v2234
    %2358 = vmatpush.msra.mxu0 %v2230
    %2359 = vmatpush.msra.mxu0 %v2226
    %2360 = vmatpush.msra.mxu0 %v2222
    %2361 = vmatpush.msra.mxu0 %v2218
    %2362 = vmatpush.msra.mxu0 %v2214
    %2363 = vmatpush.msra.mxu0 %v2210
    %2364 = vmatpush.msra.mxu0 %v2206
    %2365 = vmatmul.f32.gmra.mxu0 %v2336
    %v2366 = vpop.f32.mrf.mxu0
    %v2367 = vadd.f32 %v2341, %v2366
    %2368 = vdwg.mxu0
    %2369 = vmatpush.msra.mxu0 %v2330
    %2370 = vmatpush.msra.mxu0 %v2326
    %2371 = vmatpush.msra.mxu0 %v2322
    %2372 = vmatpush.msra.mxu0 %v2318
    %2373 = vmatpush.msra.mxu0 %v2314
    %2374 = vmatpush.msra.mxu0 %v2310
    %2375 = vmatpush.msra.mxu0 %v2306
    %2376 = vmatpush.msra.mxu0 %v2302
    %2377 = vmatpush.msra.mxu0 %v2298
    %2378 = vmatpush.msra.mxu0 %v2294
    %2379 = vmatpush.msra.mxu0 %v2290
    %2380 = vmatpush.msra.mxu0 %v2286
    %2381 = vmatpush.msra.mxu0 %v2282
    %2382 = vmatpush.msra.mxu0 %v2278
    %2383 = vmatpush.msra.mxu0 %v2274
    %2384 = vmatpush.msra.mxu0 %v2270
    %2385 = vmatmul.f32.gmra.mxu0 %v2337
    %v2386 = vpop.f32.mrf.mxu0
    %v2387 = vadd.f32 %v2367, %v2386
    %2388 = vdwg.mxu0
    %2389 = vmatpush.msra.mxu0 %v2267
    %2390 = vmatpush.msra.mxu0 %v2263
    %2391 = vmatpush.msra.mxu0 %v2259
    %2392 = vmatpush.msra.mxu0 %v2255
    %2393 = vmatpush.msra.mxu0 %v2251
    %2394 = vmatpush.msra.mxu0 %v2247
    %2395 = vmatpush.msra.mxu0 %v2243
    %2396 = vmatpush.msra.mxu0 %v2239
    %2397 = vmatpush.msra.mxu0 %v2235
    %2398 = vmatpush.msra.mxu0 %v2231
    %2399 = vmatpush.msra.mxu0 %v2227
    %2400 = vmatpush.msra.mxu0 %v2223
    %2401 = vmatpush.msra.mxu0 %v2219
    %2402 = vmatpush.msra.mxu0 %v2215
    %2403 = vmatpush.msra.mxu0 %v2211
    %2404 = vmatpush.msra.mxu0 %v2207
    %2405 = vmatmul.f32.gmra.mxu0 %v2336
    %v2406 = vpop.f32.mrf.mxu0
    %v2407 = vadd.f32 %v2342, %v2406
    %2408 = vdwg.mxu0
    %2409 = vmatpush.msra.mxu0 %v2331
    %2410 = vmatpush.msra.mxu0 %v2327
    %2411 = vmatpush.msra.mxu0 %v2323
    %2412 = vmatpush.msra.mxu0 %v2319
    %2413 = vmatpush.msra.mxu0 %v2315
    %2414 = vmatpush.msra.mxu0 %v2311
    %2415 = vmatpush.msra.mxu0 %v2307
    %2416 = vmatpush.msra.mxu0 %v2303
    %2417 = vmatpush.msra.mxu0 %v2299
    %2418 = vmatpush.msra.mxu0 %v2295
    %2419 = vmatpush.msra.mxu0 %v2291
    %2420 = vmatpush.msra.mxu0 %v2287
    %2421 = vmatpush.msra.mxu0 %v2283
    %2422 = vmatpush.msra.mxu0 %v2279
    %2423 = vmatpush.msra.mxu0 %v2275
    %2424 = vmatpush.msra.mxu0 %v2271
    %2425 = vmatmul.f32.gmra.mxu0 %v2337
    %v2426 = vpop.f32.mrf.mxu0
    %v2427 = vadd.f32 %v2407, %v2426
    %2428 = vdwg.mxu0
    %2429 = vmatpush.msra.mxu0 %v2268
    %2430 = vmatpush.msra.mxu0 %v2264
    %2431 = vmatpush.msra.mxu0 %v2260
    %2432 = vmatpush.msra.mxu0 %v2256
    %2433 = vmatpush.msra.mxu0 %v2252
    %2434 = vmatpush.msra.mxu0 %v2248
    %2435 = vmatpush.msra.mxu0 %v2244
    %2436 = vmatpush.msra.mxu0 %v2240
    %2437 = vmatpush.msra.mxu0 %v2236
    %2438 = vmatpush.msra.mxu0 %v2232
    %2439 = vmatpush.msra.mxu0 %v2228
    %2440 = vmatpush.msra.mxu0 %v2224
    %2441 = vmatpush.msra.mxu0 %v2220
    %2442 = vmatpush.msra.mxu0 %v2216
    %2443 = vmatpush.msra.mxu0 %v2212
    %2444 = vmatpush.msra.mxu0 %v2208
    %2445 = vmatmul.f32.gmra.mxu0 %v2336
    %v2446 = vpop.f32.mrf.mxu0
    %v2447 = vadd.f32 %v2343, %v2446
    %2448 = vdwg.mxu0
    %2449 = vmatpush.msra.mxu0 %v2332
    %2450 = vmatpush.msra.mxu0 %v2328
    %2451 = vmatpush.msra.mxu0 %v2324
    %2452 = vmatpush.msra.mxu0 %v2320
    %2453 = vmatpush.msra.mxu0 %v2316
    %2454 = vmatpush.msra.mxu0 %v2312
    %2455 = vmatpush.msra.mxu0 %v2308
    %2456 = vmatpush.msra.mxu0 %v2304
    %2457 = vmatpush.msra.mxu0 %v2300
    %2458 = vmatpush.msra.mxu0 %v2296
    %2459 = vmatpush.msra.mxu0 %v2292
    %2460 = vmatpush.msra.mxu0 %v2288
    %2461 = vmatpush.msra.mxu0 %v2284
    %2462 = vmatpush.msra.mxu0 %v2280
    %2463 = vmatpush.msra.mxu0 %v2276
    %2464 = vmatpush.msra.mxu0 %v2272
    %2465 = vmatmul.f32.gmra.mxu0 %v2337
    %v2466 = vpop.f32.mrf.mxu0
    %v2467 = vadd.f32 %v2447, %v2466
    %2468 = vdwg.mxu0
    %2469 = vmatpush.msra.mxu0 %v2269
    %2470 = vmatpush.msra.mxu0 %v2265
    %2471 = vmatpush.msra.mxu0 %v2261
    %2472 = vmatpush.msra.mxu0 %v2257
    %2473 = vmatpush.msra.mxu0 %v2253
    %2474 = vmatpush.msra.mxu0 %v2249
    %2475 = vmatpush.msra.mxu0 %v2245
    %2476 = vmatpush.msra.mxu0 %v2241
    %2477 = vmatpush.msra.mxu0 %v2237
    %2478 = vmatpush.msra.mxu0 %v2233
    %2479 = vmatpush.msra.mxu0 %v2229
    %2480 = vmatpush.msra.mxu0 %v2225
    %2481 = vmatpush.msra.mxu0 %v2221
    %2482 = vmatpush.msra.mxu0 %v2217
    %2483 = vmatpush.msra.mxu0 %v2213
    %2484 = vmatpush.msra.mxu0 %v2209
    %2485 = vmatmul.f32.gmra.mxu0 %v2336
    %v2486 = vpop.f32.mrf.mxu0
    %v2487 = vadd.f32 %v2344, %v2486
    %2488 = vdwg.mxu0
    %2489 = vmatpush.msra.mxu0 %v2333
    %2490 = vmatpush.msra.mxu0 %v2329
    %2491 = vmatpush.msra.mxu0 %v2325
    %2492 = vmatpush.msra.mxu0 %v2321
    %2493 = vmatpush.msra.mxu0 %v2317
    %2494 = vmatpush.msra.mxu0 %v2313
    %2495 = vmatpush.msra.mxu0 %v2309
    %2496 = vmatpush.msra.mxu0 %v2305
    %2497 = vmatpush.msra.mxu0 %v2301
    %2498 = vmatpush.msra.mxu0 %v2297
    %2499 = vmatpush.msra.mxu0 %v2293
    %2500 = vmatpush.msra.mxu0 %v2289
    %2501 = vmatpush.msra.mxu0 %v2285
    %2502 = vmatpush.msra.mxu0 %v2281
    %2503 = vmatpush.msra.mxu0 %v2277
    %2504 = vmatpush.msra.mxu0 %v2273
    %2505 = vmatmul.f32.gmra.mxu0 %v2337
    %v2506 = vpop.f32.mrf.mxu0
    %v2507 = vadd.f32 %v2487, %v2506
    %2508 = vdwg.mxu0
    %v2509 = vxor.u32 %v2387, 2147483648
    %v2510 = vmul.f32 %v2509, 1.442695
    %v2511 = vpow.pop %v2510
    %v2512 = vadd.f32 %v2511, 1.0
    %v2513 = vrcp.pop %v2512
    %v2514 = vmul.f32 %v2512, %v2513
    %v2515 = vsub.f32 1.0, %v2514
    %v2516 = vmul.f32 %v2513, %v2515
    %v2517 = vadd.f32 %v2513, %v2516
    %vm2518 = vweird.f32 %v2512
    %vm2519 = vweird.f32 %v2513
    %vm2520 = vmor %vm2518, %vm2519
    %v2521 = vsel %vm2520, %v2513, %v2517
    %v2522 = vand.u32 2147483647, %v2512
    %vm2523 = vcmp.eq.f32.partialorder %v2522, 8.507059e+37
    %v2524 = vand.u32 %v2512, 2147483648
    %v2525 = vor.u32 1.1754944e-38, %v2524
    %v2526 = vsel %vm2523, %v2525, %v2521
    %v2527 = vmul.f32 1.0, %v2526
    %v2528 = vxor.u32 %v2427, 2147483648
    %v2529 = vmul.f32 %v2528, 1.442695
    %v2530 = vpow.pop %v2529
    %v2531 = vadd.f32 %v2530, 1.0
    %v2532 = vrcp.pop %v2531
    %v2533 = vmul.f32 %v2531, %v2532
    %v2534 = vsub.f32 1.0, %v2533
    %v2535 = vmul.f32 %v2532, %v2534
    %v2536 = vadd.f32 %v2532, %v2535
    %vm2537 = vweird.f32 %v2531
    %vm2538 = vweird.f32 %v2532
    %vm2539 = vmor %vm2537, %vm2538
    %v2540 = vsel %vm2539, %v2532, %v2536
    %v2541 = vand.u32 2147483647, %v2531
    %vm2542 = vcmp.eq.f32.partialorder %v2541, 8.507059e+37
    %v2543 = vand.u32 %v2531, 2147483648
    %v2544 = vor.u32 1.1754944e-38, %v2543
    %v2545 = vsel %vm2542, %v2544, %v2540
    %v2546 = vmul.f32 1.0, %v2545
    %v2547 = vmul.f32 %v2527, %v2507
    %v2548 = vadd.f32 %v2467, %v2547
    %v2549 = vtanh.pop %v2548
    %v2550 = vsub.f32 1.0, %v2546
    %v2551 = vmul.f32 %v2550, %v2549
    %v2552 = vmul.f32 %v2546, %v2198
    %v2553 = vadd.f32 %v2551, %v2552
    %s2554 = sadd.s32 %s65, 7
    %s2555 = sld [smem:[#allocation5 + %s2554]]
    %s2556 = scalar_lea.vmem [#allocation6], %s2555
    %v2557 = vld [vmem:[%s2556] sm:$0x1]
    %2558 = vst.msk [vmem:[#allocation3] sm:$0x1] %vm72, %v2557
    %2559 = vst.msk [vmem:[#allocation3 + $0x1] sm:$0x1] %vm72, %v2553
    %v2560 = vld [vmem:[#allocation3] sm:$0x3]
    %v2561 = vld [vmem:[#allocation8] sm:$0xff]
    %v2562 = vld [vmem:[#allocation8 + $0x8] sm:$0xff]
    %v2563 = vld [vmem:[#allocation8 + $0x10] sm:$0xff]
    %v2564 = vld [vmem:[#allocation8 + $0x18] sm:$0xff]
    %v2565 = vld [vmem:[#allocation8 + $0x20] sm:$0xff]
    %v2566 = vld [vmem:[#allocation8 + $0x28] sm:$0xff]
    %v2567 = vld [vmem:[#allocation8 + $0x30] sm:$0xff]
    %v2568 = vld [vmem:[#allocation8 + $0x38] sm:$0xff]
    %v2569 = vld [vmem:[#allocation8 + $0x40] sm:$0xff]
    %v2570 = vld [vmem:[#allocation8 + $0x48] sm:$0xff]
    %v2571 = vld [vmem:[#allocation8 + $0x50] sm:$0xff]
    %v2572 = vld [vmem:[#allocation8 + $0x58] sm:$0xff]
    %v2573 = vld [vmem:[#allocation8 + $0x60] sm:$0xff]
    %v2574 = vld [vmem:[#allocation8 + $0x68] sm:$0xff]
    %v2575 = vld [vmem:[#allocation8 + $0x70] sm:$0xff]
    %v2576 = vld [vmem:[#allocation8 + $0x78] sm:$0xff]
    %v2577 = vld [vmem:[#allocation8 + $0x80] sm:$0xff]
    %v2578 = vld [vmem:[#allocation8 + $0x88] sm:$0xff]
    %v2579 = vld [vmem:[#allocation8 + $0x90] sm:$0xff]
    %v2580 = vld [vmem:[#allocation8 + $0x98] sm:$0xff]
    %v2581 = vld [vmem:[#allocation8 + $0xa0] sm:$0xff]
    %v2582 = vld [vmem:[#allocation8 + $0xa8] sm:$0xff]
    %v2583 = vld [vmem:[#allocation8 + $0xb0] sm:$0xff]
    %v2584 = vld [vmem:[#allocation8 + $0xb8] sm:$0xff]
    %v2585 = vld [vmem:[#allocation8 + $0xc0] sm:$0xff]
    %v2586 = vld [vmem:[#allocation8 + $0xc8] sm:$0xff]
    %v2587 = vld [vmem:[#allocation8 + $0xd0] sm:$0xff]
    %v2588 = vld [vmem:[#allocation8 + $0xd8] sm:$0xff]
    %v2589 = vld [vmem:[#allocation8 + $0xe0] sm:$0xff]
    %v2590 = vld [vmem:[#allocation8 + $0xe8] sm:$0xff]
    %v2591 = vld [vmem:[#allocation8 + $0xf0] sm:$0xff]
    %v2592 = vld [vmem:[#allocation8 + $0xf8] sm:$0xff]
    %v2593 = vld [vmem:[#allocation8 + $0x100] sm:$0xff]
    %v2594 = vld [vmem:[#allocation8 + $0x108] sm:$0xff]
    %v2595 = vld [vmem:[#allocation8 + $0x110] sm:$0xff]
    %v2596 = vld [vmem:[#allocation8 + $0x118] sm:$0xff]
    %v2597 = vld [vmem:[#allocation8 + $0x120] sm:$0xff]
    %v2598 = vld [vmem:[#allocation8 + $0x128] sm:$0xff]
    %v2599 = vld [vmem:[#allocation8 + $0x130] sm:$0xff]
    %v2600 = vld [vmem:[#allocation8 + $0x138] sm:$0xff]
    %v2601 = vld [vmem:[#allocation8 + $0x140] sm:$0xff]
    %v2602 = vld [vmem:[#allocation8 + $0x148] sm:$0xff]
    %v2603 = vld [vmem:[#allocation8 + $0x150] sm:$0xff]
    %v2604 = vld [vmem:[#allocation8 + $0x158] sm:$0xff]
    %v2605 = vld [vmem:[#allocation8 + $0x160] sm:$0xff]
    %v2606 = vld [vmem:[#allocation8 + $0x168] sm:$0xff]
    %v2607 = vld [vmem:[#allocation8 + $0x170] sm:$0xff]
    %v2608 = vld [vmem:[#allocation8 + $0x178] sm:$0xff]
    %v2609 = vld [vmem:[#allocation8 + $0x180] sm:$0xff]
    %v2610 = vld [vmem:[#allocation8 + $0x188] sm:$0xff]
    %v2611 = vld [vmem:[#allocation8 + $0x190] sm:$0xff]
    %v2612 = vld [vmem:[#allocation8 + $0x198] sm:$0xff]
    %v2613 = vld [vmem:[#allocation8 + $0x1a0] sm:$0xff]
    %v2614 = vld [vmem:[#allocation8 + $0x1a8] sm:$0xff]
    %v2615 = vld [vmem:[#allocation8 + $0x1b0] sm:$0xff]
    %v2616 = vld [vmem:[#allocation8 + $0x1b8] sm:$0xff]
    %v2617 = vld [vmem:[#allocation8 + $0x1c0] sm:$0xff]
    %v2618 = vld [vmem:[#allocation8 + $0x1c8] sm:$0xff]
    %v2619 = vld [vmem:[#allocation8 + $0x1d0] sm:$0xff]
    %v2620 = vld [vmem:[#allocation8 + $0x1d8] sm:$0xff]
    %v2621 = vld [vmem:[#allocation8 + $0x1e0] sm:$0xff]
    %v2622 = vld [vmem:[#allocation8 + $0x1e8] sm:$0xff]
    %v2623 = vld [vmem:[#allocation8 + $0x1f0] sm:$0xff]
    %v2624 = vld [vmem:[#allocation8 + $0x1f8] sm:$0xff]
    %v2625 = vld [vmem:[#allocation8 + $0x200] sm:$0xff]
    %v2626 = vld [vmem:[#allocation8 + $0x208] sm:$0xff]
    %v2627 = vld [vmem:[#allocation8 + $0x210] sm:$0xff]
    %v2628 = vld [vmem:[#allocation8 + $0x218] sm:$0xff]
    %v2629 = vld [vmem:[#allocation8 + $0x220] sm:$0xff]
    %v2630 = vld [vmem:[#allocation8 + $0x228] sm:$0xff]
    %v2631 = vld [vmem:[#allocation8 + $0x230] sm:$0xff]
    %v2632 = vld [vmem:[#allocation8 + $0x238] sm:$0xff]
    %v2633 = vld [vmem:[#allocation8 + $0x240] sm:$0xff]
    %v2634 = vld [vmem:[#allocation8 + $0x248] sm:$0xff]
    %v2635 = vld [vmem:[#allocation8 + $0x250] sm:$0xff]
    %v2636 = vld [vmem:[#allocation8 + $0x258] sm:$0xff]
    %v2637 = vld [vmem:[#allocation8 + $0x260] sm:$0xff]
    %v2638 = vld [vmem:[#allocation8 + $0x268] sm:$0xff]
    %v2639 = vld [vmem:[#allocation8 + $0x270] sm:$0xff]
    %v2640 = vld [vmem:[#allocation8 + $0x278] sm:$0xff]
    %v2641 = vld [vmem:[#allocation8 + $0x280] sm:$0xff]
    %v2642 = vld [vmem:[#allocation8 + $0x288] sm:$0xff]
    %v2643 = vld [vmem:[#allocation8 + $0x290] sm:$0xff]
    %v2644 = vld [vmem:[#allocation8 + $0x298] sm:$0xff]
    %v2645 = vld [vmem:[#allocation8 + $0x2a0] sm:$0xff]
    %v2646 = vld [vmem:[#allocation8 + $0x2a8] sm:$0xff]
    %v2647 = vld [vmem:[#allocation8 + $0x2b0] sm:$0xff]
    %v2648 = vld [vmem:[#allocation8 + $0x2b8] sm:$0xff]
    %v2649 = vld [vmem:[#allocation8 + $0x2c0] sm:$0xff]
    %v2650 = vld [vmem:[#allocation8 + $0x2c8] sm:$0xff]
    %v2651 = vld [vmem:[#allocation8 + $0x2d0] sm:$0xff]
    %v2652 = vld [vmem:[#allocation8 + $0x2d8] sm:$0xff]
    %v2653 = vld [vmem:[#allocation8 + $0x2e0] sm:$0xff]
    %v2654 = vld [vmem:[#allocation8 + $0x2e8] sm:$0xff]
    %v2655 = vld [vmem:[#allocation8 + $0x2f0] sm:$0xff]
    %v2656 = vld [vmem:[#allocation8 + $0x2f8] sm:$0xff]
    %v2657 = vld [vmem:[#allocation8 + $0x300] sm:$0xff]
    %v2658 = vld [vmem:[#allocation8 + $0x308] sm:$0xff]
    %v2659 = vld [vmem:[#allocation8 + $0x310] sm:$0xff]
    %v2660 = vld [vmem:[#allocation8 + $0x318] sm:$0xff]
    %v2661 = vld [vmem:[#allocation8 + $0x320] sm:$0xff]
    %v2662 = vld [vmem:[#allocation8 + $0x328] sm:$0xff]
    %v2663 = vld [vmem:[#allocation8 + $0x330] sm:$0xff]
    %v2664 = vld [vmem:[#allocation8 + $0x338] sm:$0xff]
    %v2665 = vld [vmem:[#allocation8 + $0x340] sm:$0xff]
    %v2666 = vld [vmem:[#allocation8 + $0x348] sm:$0xff]
    %v2667 = vld [vmem:[#allocation8 + $0x350] sm:$0xff]
    %v2668 = vld [vmem:[#allocation8 + $0x358] sm:$0xff]
    %v2669 = vld [vmem:[#allocation8 + $0x360] sm:$0xff]
    %v2670 = vld [vmem:[#allocation8 + $0x368] sm:$0xff]
    %v2671 = vld [vmem:[#allocation8 + $0x370] sm:$0xff]
    %v2672 = vld [vmem:[#allocation8 + $0x378] sm:$0xff]
    %v2673 = vld [vmem:[#allocation8 + $0x380] sm:$0xff]
    %v2674 = vld [vmem:[#allocation8 + $0x388] sm:$0xff]
    %v2675 = vld [vmem:[#allocation8 + $0x390] sm:$0xff]
    %v2676 = vld [vmem:[#allocation8 + $0x398] sm:$0xff]
    %v2677 = vld [vmem:[#allocation8 + $0x3a0] sm:$0xff]
    %v2678 = vld [vmem:[#allocation8 + $0x3a8] sm:$0xff]
    %v2679 = vld [vmem:[#allocation8 + $0x3b0] sm:$0xff]
    %v2680 = vld [vmem:[#allocation8 + $0x3b8] sm:$0xff]
    %v2681 = vld [vmem:[#allocation8 + $0x3c0] sm:$0xff]
    %v2682 = vld [vmem:[#allocation8 + $0x3c8] sm:$0xff]
    %v2683 = vld [vmem:[#allocation8 + $0x3d0] sm:$0xff]
    %v2684 = vld [vmem:[#allocation8 + $0x3d8] sm:$0xff]
    %v2685 = vld [vmem:[#allocation8 + $0x3e0] sm:$0xff]
    %v2686 = vld [vmem:[#allocation8 + $0x3e8] sm:$0xff]
    %v2687 = vld [vmem:[#allocation8 + $0x3f0] sm:$0xff]
    %v2688 = vld [vmem:[#allocation8 + $0x3f8] sm:$0xff]
    %v2689 = vld [vmem:[%s4] sm:$0xf]
    %v2691 = vperm.slane %v2560, 0
    %v2692 = vperm.slane %v2560, 1
    %v2696 = vperm.slane %v2689, 0
    %v2697 = vperm.slane %v2689, 1
    %v2698 = vperm.slane %v2689, 2
    %v2699 = vperm.slane %v2689, 3
    %2704 = vmatpush.msra.mxu0 %v2621
    %2705 = vmatpush.msra.mxu0 %v2617
    %2706 = vmatpush.msra.mxu0 %v2613
    %2707 = vmatpush.msra.mxu0 %v2609
    %2708 = vmatpush.msra.mxu0 %v2605
    %2709 = vmatpush.msra.mxu0 %v2601
    %2710 = vmatpush.msra.mxu0 %v2597
    %2711 = vmatpush.msra.mxu0 %v2593
    %2712 = vmatpush.msra.mxu0 %v2589
    %2713 = vmatpush.msra.mxu0 %v2585
    %2714 = vmatpush.msra.mxu0 %v2581
    %2715 = vmatpush.msra.mxu0 %v2577
    %2716 = vmatpush.msra.mxu0 %v2573
    %2717 = vmatpush.msra.mxu0 %v2569
    %2718 = vmatpush.msra.mxu0 %v2565
    %2719 = vmatpush.msra.mxu0 %v2561
    %2720 = vmatmul.f32.gmra.mxu0 %v2691
    %v2721 = vpop.f32.mrf.mxu0
    %v2722 = vadd.f32 %v2696, %v2721
    %2723 = vdwg.mxu0
    %2724 = vmatpush.msra.mxu0 %v2685
    %2725 = vmatpush.msra.mxu0 %v2681
    %2726 = vmatpush.msra.mxu0 %v2677
    %2727 = vmatpush.msra.mxu0 %v2673
    %2728 = vmatpush.msra.mxu0 %v2669
    %2729 = vmatpush.msra.mxu0 %v2665
    %2730 = vmatpush.msra.mxu0 %v2661
    %2731 = vmatpush.msra.mxu0 %v2657
    %2732 = vmatpush.msra.mxu0 %v2653
    %2733 = vmatpush.msra.mxu0 %v2649
    %2734 = vmatpush.msra.mxu0 %v2645
    %2735 = vmatpush.msra.mxu0 %v2641
    %2736 = vmatpush.msra.mxu0 %v2637
    %2737 = vmatpush.msra.mxu0 %v2633
    %2738 = vmatpush.msra.mxu0 %v2629
    %2739 = vmatpush.msra.mxu0 %v2625
    %2740 = vmatmul.f32.gmra.mxu0 %v2692
    %v2741 = vpop.f32.mrf.mxu0
    %v2742 = vadd.f32 %v2722, %v2741
    %2743 = vdwg.mxu0
    %2744 = vmatpush.msra.mxu0 %v2622
    %2745 = vmatpush.msra.mxu0 %v2618
    %2746 = vmatpush.msra.mxu0 %v2614
    %2747 = vmatpush.msra.mxu0 %v2610
    %2748 = vmatpush.msra.mxu0 %v2606
    %2749 = vmatpush.msra.mxu0 %v2602
    %2750 = vmatpush.msra.mxu0 %v2598
    %2751 = vmatpush.msra.mxu0 %v2594
    %2752 = vmatpush.msra.mxu0 %v2590
    %2753 = vmatpush.msra.mxu0 %v2586
    %2754 = vmatpush.msra.mxu0 %v2582
    %2755 = vmatpush.msra.mxu0 %v2578
    %2756 = vmatpush.msra.mxu0 %v2574
    %2757 = vmatpush.msra.mxu0 %v2570
    %2758 = vmatpush.msra.mxu0 %v2566
    %2759 = vmatpush.msra.mxu0 %v2562
    %2760 = vmatmul.f32.gmra.mxu0 %v2691
    %v2761 = vpop.f32.mrf.mxu0
    %v2762 = vadd.f32 %v2697, %v2761
    %2763 = vdwg.mxu0
    %2764 = vmatpush.msra.mxu0 %v2686
    %2765 = vmatpush.msra.mxu0 %v2682
    %2766 = vmatpush.msra.mxu0 %v2678
    %2767 = vmatpush.msra.mxu0 %v2674
    %2768 = vmatpush.msra.mxu0 %v2670
    %2769 = vmatpush.msra.mxu0 %v2666
    %2770 = vmatpush.msra.mxu0 %v2662
    %2771 = vmatpush.msra.mxu0 %v2658
    %2772 = vmatpush.msra.mxu0 %v2654
    %2773 = vmatpush.msra.mxu0 %v2650
    %2774 = vmatpush.msra.mxu0 %v2646
    %2775 = vmatpush.msra.mxu0 %v2642
    %2776 = vmatpush.msra.mxu0 %v2638
    %2777 = vmatpush.msra.mxu0 %v2634
    %2778 = vmatpush.msra.mxu0 %v2630
    %2779 = vmatpush.msra.mxu0 %v2626
    %2780 = vmatmul.f32.gmra.mxu0 %v2692
    %v2781 = vpop.f32.mrf.mxu0
    %v2782 = vadd.f32 %v2762, %v2781
    %2783 = vdwg.mxu0
    %2784 = vmatpush.msra.mxu0 %v2623
    %2785 = vmatpush.msra.mxu0 %v2619
    %2786 = vmatpush.msra.mxu0 %v2615
    %2787 = vmatpush.msra.mxu0 %v2611
    %2788 = vmatpush.msra.mxu0 %v2607
    %2789 = vmatpush.msra.mxu0 %v2603
    %2790 = vmatpush.msra.mxu0 %v2599
    %2791 = vmatpush.msra.mxu0 %v2595
    %2792 = vmatpush.msra.mxu0 %v2591
    %2793 = vmatpush.msra.mxu0 %v2587
    %2794 = vmatpush.msra.mxu0 %v2583
    %2795 = vmatpush.msra.mxu0 %v2579
    %2796 = vmatpush.msra.mxu0 %v2575
    %2797 = vmatpush.msra.mxu0 %v2571
    %2798 = vmatpush.msra.mxu0 %v2567
    %2799 = vmatpush.msra.mxu0 %v2563
    %2800 = vmatmul.f32.gmra.mxu0 %v2691
    %v2801 = vpop.f32.mrf.mxu0
    %v2802 = vadd.f32 %v2698, %v2801
    %2803 = vdwg.mxu0
    %2804 = vmatpush.msra.mxu0 %v2687
    %2805 = vmatpush.msra.mxu0 %v2683
    %2806 = vmatpush.msra.mxu0 %v2679
    %2807 = vmatpush.msra.mxu0 %v2675
    %2808 = vmatpush.msra.mxu0 %v2671
    %2809 = vmatpush.msra.mxu0 %v2667
    %2810 = vmatpush.msra.mxu0 %v2663
    %2811 = vmatpush.msra.mxu0 %v2659
    %2812 = vmatpush.msra.mxu0 %v2655
    %2813 = vmatpush.msra.mxu0 %v2651
    %2814 = vmatpush.msra.mxu0 %v2647
    %2815 = vmatpush.msra.mxu0 %v2643
    %2816 = vmatpush.msra.mxu0 %v2639
    %2817 = vmatpush.msra.mxu0 %v2635
    %2818 = vmatpush.msra.mxu0 %v2631
    %2819 = vmatpush.msra.mxu0 %v2627
    %2820 = vmatmul.f32.gmra.mxu0 %v2692
    %v2821 = vpop.f32.mrf.mxu0
    %v2822 = vadd.f32 %v2802, %v2821
    %2823 = vdwg.mxu0
    %2824 = vmatpush.msra.mxu0 %v2624
    %2825 = vmatpush.msra.mxu0 %v2620
    %2826 = vmatpush.msra.mxu0 %v2616
    %2827 = vmatpush.msra.mxu0 %v2612
    %2828 = vmatpush.msra.mxu0 %v2608
    %2829 = vmatpush.msra.mxu0 %v2604
    %2830 = vmatpush.msra.mxu0 %v2600
    %2831 = vmatpush.msra.mxu0 %v2596
    %2832 = vmatpush.msra.mxu0 %v2592
    %2833 = vmatpush.msra.mxu0 %v2588
    %2834 = vmatpush.msra.mxu0 %v2584
    %2835 = vmatpush.msra.mxu0 %v2580
    %2836 = vmatpush.msra.mxu0 %v2576
    %2837 = vmatpush.msra.mxu0 %v2572
    %2838 = vmatpush.msra.mxu0 %v2568
    %2839 = vmatpush.msra.mxu0 %v2564
    %2840 = vmatmul.f32.gmra.mxu0 %v2691
    %v2841 = vpop.f32.mrf.mxu0
    %v2842 = vadd.f32 %v2699, %v2841
    %2843 = vdwg.mxu0
    %2844 = vmatpush.msra.mxu0 %v2688
    %2845 = vmatpush.msra.mxu0 %v2684
    %2846 = vmatpush.msra.mxu0 %v2680
    %2847 = vmatpush.msra.mxu0 %v2676
    %2848 = vmatpush.msra.mxu0 %v2672
    %2849 = vmatpush.msra.mxu0 %v2668
    %2850 = vmatpush.msra.mxu0 %v2664
    %2851 = vmatpush.msra.mxu0 %v2660
    %2852 = vmatpush.msra.mxu0 %v2656
    %2853 = vmatpush.msra.mxu0 %v2652
    %2854 = vmatpush.msra.mxu0 %v2648
    %2855 = vmatpush.msra.mxu0 %v2644
    %2856 = vmatpush.msra.mxu0 %v2640
    %2857 = vmatpush.msra.mxu0 %v2636
    %2858 = vmatpush.msra.mxu0 %v2632
    %2859 = vmatpush.msra.mxu0 %v2628
    %2860 = vmatmul.f32.gmra.mxu0 %v2692
    %v2861 = vpop.f32.mrf.mxu0
    %v2862 = vadd.f32 %v2842, %v2861
    %2863 = vdwg.mxu0
    %v2864 = vxor.u32 %v2742, 2147483648
    %v2865 = vmul.f32 %v2864, 1.442695
    %v2866 = vpow.pop %v2865
    %v2867 = vadd.f32 %v2866, 1.0
    %v2868 = vrcp.pop %v2867
    %v2869 = vmul.f32 %v2867, %v2868
    %v2870 = vsub.f32 1.0, %v2869
    %v2871 = vmul.f32 %v2868, %v2870
    %v2872 = vadd.f32 %v2868, %v2871
    %vm2873 = vweird.f32 %v2867
    %vm2874 = vweird.f32 %v2868
    %vm2875 = vmor %vm2873, %vm2874
    %v2876 = vsel %vm2875, %v2868, %v2872
    %v2877 = vand.u32 2147483647, %v2867
    %vm2878 = vcmp.eq.f32.partialorder %v2877, 8.507059e+37
    %v2879 = vand.u32 %v2867, 2147483648
    %v2880 = vor.u32 1.1754944e-38, %v2879
    %v2881 = vsel %vm2878, %v2880, %v2876
    %v2882 = vmul.f32 1.0, %v2881
    %v2883 = vxor.u32 %v2782, 2147483648
    %v2884 = vmul.f32 %v2883, 1.442695
    %v2885 = vpow.pop %v2884
    %v2886 = vadd.f32 %v2885, 1.0
    %v2887 = vrcp.pop %v2886
    %v2888 = vmul.f32 %v2886, %v2887
    %v2889 = vsub.f32 1.0, %v2888
    %v2890 = vmul.f32 %v2887, %v2889
    %v2891 = vadd.f32 %v2887, %v2890
    %vm2892 = vweird.f32 %v2886
    %vm2893 = vweird.f32 %v2887
    %vm2894 = vmor %vm2892, %vm2893
    %v2895 = vsel %vm2894, %v2887, %v2891
    %v2896 = vand.u32 2147483647, %v2886
    %vm2897 = vcmp.eq.f32.partialorder %v2896, 8.507059e+37
    %v2898 = vand.u32 %v2886, 2147483648
    %v2899 = vor.u32 1.1754944e-38, %v2898
    %v2900 = vsel %vm2897, %v2899, %v2895
    %v2901 = vmul.f32 1.0, %v2900
    %v2902 = vmul.f32 %v2882, %v2862
    %v2903 = vadd.f32 %v2822, %v2902
    %v2904 = vtanh.pop %v2903
    %v2905 = vsub.f32 1.0, %v2901
    %v2906 = vmul.f32 %v2905, %v2904
    %v2907 = vmul.f32 %v2901, %v2553
    %v2908 = vadd.f32 %v2906, %v2907
    %v2910 = vrot.slane %v778, 7
    %v2913 = vrot.slane %v1133, 6
    %v2916 = vrot.slane %v1488, 5
    %v2919 = vrot.slane %v1843, 4
    %v2922 = vrot.slane %v2198, 3
    %v2925 = vrot.slane %v2553, 2
    %v2928 = vrot.slane %v2908, 1
    %vm2930 = vcmask 1040384
    %v2931 = vsel %vm2930, %v423, %v2910
    %vm2932 = vcmask 1041408
    %v2933 = vsel %vm2932, %v2931, %v2913
    %vm2934 = vcmask 1042432
    %v2935 = vsel %vm2934, %v2933, %v2916
    %vm2936 = vcmask 1043456
    %v2937 = vsel %vm2936, %v2935, %v2919
    %vm2938 = vcmask 1044480
    %v2939 = vsel %vm2938, %v2937, %v2922
    %vm2940 = vcmask 1045504
    %v2941 = vsel %vm2940, %v2939, %v2925
    %vm2942 = vcmask 1046528
    %v2943 = vsel %vm2942, %v2941, %v2928
    %2944 = vst [vmem:[%s5] sm:$0xff] %v2943
    %2945 = vst [vmem:[#allocation2] sm:$0x1] %v2908
    // Predicated region
    $region30: #{encoder_rnn_forward_seq.1} parent=1 // pred_check
      _
    $region31: #{encoder_rnn_forward_seq.1} parent=1 // pred_check_branch
      %2947 = sbr.rel (0) target = $region33
    $region32: #{encoder_rnn_forward_seq.1} parent=1 // pred_region
      _
    $region33: #{encoder_rnn_forward_seq.1} parent=1 // pred_fallthru
      _
    // Predicated region
    $region34: #{encoder_rnn_forward_seq.1} parent=1 // pred_check
      _
    $region35: #{encoder_rnn_forward_seq.1} parent=1 // pred_check_branch
      %2949 = sbr.rel (0) target = $region37
    $region36: #{encoder_rnn_forward_seq.1} parent=1 // pred_region
      _
    $region37: #{encoder_rnn_forward_seq.1} parent=1 // pred_fallthru
      _
    %2950 = vsyncpa [#allocation7], 1
    %2951 = vsyncpa [#allocation9], 1

</llo_original>
